<compile_context>
chip_gen: v7x
topology: tpu7x:2x2x1
jax: 0.10.0
libtpu: 0.0.40
codegen_flags: <defaults>
</compile_context>

<pallas_src>
import functools

import jax
import jax.numpy as jnp
from jax.experimental import pallas as pl
from jax.experimental.pallas import tpu as pltpu


# bf16 is MXU-native on v5e/v6e/v7x; set to jnp.float32 for bit-faithful f32 conv.
MXU_DTYPE = jnp.bfloat16


def _round_up(x, m):
    return ((x + m - 1) // m) * m


# ----------------------------------------------------------------------------
# Fused whole-block kernel: 2n x (conv3x3 + BN(batch stats) [+ res] + ReLU)
# ----------------------------------------------------------------------------
def conv_block_kernel(x_ref, xid_ref, w0_ref, wr_ref, gamma_ref, beta_ref,
                      reduce_ref, expand_ref, out_ref,
                      xpad_ref, lhs_ref, act_ref, res_ref,
                      *, eps, n, B, H, W, Cin, Cout, kblk0, kblkr):
    """All refs are whole-array VMEM residents (no grid).

    x_ref:      (B*H, W*Cin)          f32  input slab (lane-dense)
    xid_ref:    (B*H, W*Cout)         f32  residual slab
    w0_ref:     (3*kblk0, W*Cout)     bf16 banded Toeplitz weights, layer 0
    wr_ref:     (2n-1, 3*kblkr, W*Cout) bf16 banded weights, layers 1..2n-1
    gamma/beta: (2n, Cout)            f32  BN affine params (row = layer)
    reduce_ref: (W*Cout, Cout)        f32  lane-group -> channel reduction
    expand_ref: (Cout, W*Cout)        f32  channel -> lane-group broadcast
    out_ref:    (B*H, W*Cout)         f32  output slab
    scratch: xpad (B, H+2, kblk_max) f32, lhs (B*H, 3*kblk_max) bf16,
             act / res (B*H, W*Cout) f32
    """
    N = W * Cout
    inv_m = 1.0 / float(B * H * W)

    def run_layer(src_ref, dst_ref, C, kblk_l, w, gamma, beta, res, zero_xpad):
        # ---- zero padded-row buffer only when the row layout changes ----
        if zero_xpad:
            xpad_ref[...] = jnp.zeros(xpad_ref.shape, xpad_ref.dtype)
        # interior rows; H/W halo rows+cols and K-pad columns stay zero
        xpad_ref[:, 1:H + 1, C:(W + 1) * C] = src_ref[...].reshape(B, H, W * C)

        # ---- Toeplitz/im2col LHS: one lane-aligned kblk-wide bf16 stripe per
        # kh tap; zero K-pad columns ride along from xpad (no lhs zero fill) --
        for kh in range(3):
            lhs_ref[:, kh * kblk_l:(kh + 1) * kblk_l] = (
                xpad_ref[:, kh:kh + H, :kblk_l]
                .reshape(B * H, kblk_l).astype(lhs_ref.dtype))

        # ---- all 9 conv taps in one MXU matmul (bf16 in, f32 accumulate) ----
        acc = jnp.dot(lhs_ref[:, :3 * kblk_l], w,
                      preferred_element_type=jnp.float32)           # (B*H, N)
        # (conv bias dropped: exactly cancelled by batch-stats BN below)

        # ---- BatchNorm2d, training-mode batch stats, one pass ----
        colsum = jnp.sum(acc, axis=0, keepdims=True)                # (1, N)
        colsq = jnp.sum(acc * acc, axis=0, keepdims=True)           # (1, N)
        stats = jnp.dot(jnp.concatenate([colsum, colsq], axis=0),
                        reduce_ref[...],
                        preferred_element_type=jnp.float32)         # (2, Cout)
        mean = stats[0:1, :] * inv_m
        var = jnp.maximum(stats[1:2, :] * inv_m - mean * mean, 0.0)  # clamp >=0
        scale = gamma * jax.lax.rsqrt(var + eps)                    # (1, Cout)
        shift = beta - mean * scale                                 # (1, Cout)
        ss = jnp.dot(jnp.concatenate([scale, shift], axis=0),
                     expand_ref[...],
                     preferred_element_type=jnp.float32)            # (2, N)
        y = acc * ss[0:1, :] + ss[1:2, :]

        # ---- residual add + ReLU, dense lane-aligned store ----
        if res is not None:
            y = y + res
        dst_ref[...] = jnp.maximum(y, 0.0).astype(dst_ref.dtype)

    # Static layer schedule (n is small); activations never leave VMEM.
    for i in range(n):
        le, lo = 2 * i, 2 * i + 1
        # even layer: conv + BN + ReLU
        run_layer(src_ref=x_ref if i == 0 else res_ref,
                  dst_ref=act_ref,
                  C=Cin if i == 0 else Cout,
                  kblk_l=kblk0 if i == 0 else kblkr,
                  w=w0_ref[...] if i == 0 else wr_ref[le - 1],
                  gamma=gamma_ref[le:le + 1, :],
                  beta=beta_ref[le:le + 1, :],
                  res=None,
                  zero_xpad=(i == 0))
        # odd layer: conv + BN + residual add + ReLU; output is the new x_id
        run_layer(src_ref=act_ref,
                  dst_ref=out_ref if i == n - 1 else res_ref,
                  C=Cout,
                  kblk_l=kblkr,
                  w=wr_ref[lo - 1],
                  gamma=gamma_ref[lo:lo + 1, :],
                  beta=beta_ref[lo:lo + 1, :],
                  res=xid_ref[...] if i == 0 else res_ref[...],
                  zero_xpad=(lo == 1 and Cin != Cout))


# ----------------------------------------------------------------------------
# One-time (init-path) weight / constant preparation -- hoisted out of forward
# ----------------------------------------------------------------------------
def _toeplitz_weight(w_hwio, W, kblk):
    """(3,3,Cin,Cout) HWIO conv weights -> banded (3*kblk, W*Cout) matmul RHS.

    Wbig[kh*kblk + wp*Cin + ci, w*Cout + co] = w[kh, wp-w, ci, co] for 0<=wp-w<3.
    """
    _, _, Cin, Cout = w_hwio.shape
    Wp = W + 2
    wb = jnp.zeros((3, Wp, Cin, W, Cout), jnp.float32)
    for w in range(W):
        wb = wb.at[:, w:w + 3, :, w, :].set(w_hwio)
    wb = wb.reshape(3, Wp * Cin, W * Cout)
    wb = jnp.pad(wb, ((0, 0), (0, kblk - Wp * Cin), (0, 0)))
    return wb.reshape(3 * kblk, W * Cout).astype(MXU_DTYPE)


def prepare_block_params(convs, bns, *, W):
    """Build everything the kernel needs, once, at init time."""
    Cin = convs[0][0].shape[2]
    Cout = convs[0][0].shape[3]
    kblk0 = _round_up((W + 2) * Cin, 128)   # 128-aligned per-tap K block, layer 0
    kblkr = _round_up((W + 2) * Cout, 128)  # 128-aligned per-tap K block, rest
    w0 = _toeplitz_weight(convs[0][0], W, kblk0)
    wrest = jnp.stack([_toeplitz_weight(w, W, kblkr) for w, _ in convs[1:]])
    # NOTE: conv biases are intentionally unused -- training-mode BatchNorm
    # subtracts the per-channel mean, which cancels any per-channel bias.
    gamma = jnp.concatenate([g.reshape(1, Cout) for g, _ in bns], axis=0)
    beta = jnp.concatenate([b.reshape(1, Cout) for _, b in bns], axis=0)
    reduce_mat = jnp.tile(jnp.eye(Cout, dtype=jnp.float32), (W, 1))  # (W*Cout, Cout)
    expand_mat = reduce_mat.T                                        # (Cout, W*Cout)
    return dict(w0=w0, wrest=wrest, gamma=gamma, beta=beta,
                reduce=reduce_mat, expand=expand_mat,
                Cin=Cin, Cout=Cout, kblk0=kblk0, kblkr=kblkr)


# ----------------------------------------------------------------------------
# ConvBlock forward (NCHW boundary, PyTorch layout)
# ----------------------------------------------------------------------------
def conv_block_forward(x_nchw, x_id_nchw, *, params, n, eps=1e-5):
    """Matches ConvBlock.forward (kernel_size=3, input_shape == output_shape)."""
    B, Cin, H, W = x_nchw.shape
    Cout = params["Cout"]
    kblk0, kblkr = params["kblk0"], params["kblkr"]
    kblk_max = max(kblk0, kblkr)

    # NCHW -> lane-dense (B*H, W*C) slabs (boundary layout plumbing only)
    x = jnp.transpose(x_nchw, (0, 2, 3, 1)).reshape(B * H, W * Cin)
    x_id = jnp.transpose(x_id_nchw, (0, 2, 3, 1)).reshape(B * H, W * Cout)

    kern = functools.partial(conv_block_kernel, eps=eps, n=n, B=B, H=H, W=W,
                             Cin=Cin, Cout=Cout, kblk0=kblk0, kblkr=kblkr)
    vmem = pltpu.MemorySpace.VMEM
    out = pl.pallas_call(
        kern,
        out_shape=jax.ShapeDtypeStruct((B * H, W * Cout), jnp.float32),
        in_specs=[pl.BlockSpec(memory_space=vmem)] * 8,
        out_specs=pl.BlockSpec(memory_space=vmem),
        scratch_shapes=[
            pltpu.VMEM((B, H + 2, kblk_max), jnp.float32),     # padded rows
            pltpu.VMEM((B * H, 3 * kblk_max), jnp.bfloat16),   # Toeplitz LHS
            pltpu.VMEM((B * H, W * Cout), jnp.float32),        # even-layer act
            pltpu.VMEM((B * H, W * Cout), jnp.float32),        # running x_id
        ],
        # Small shapes fit easily; keep an explicit limit (v5e default is 16 MiB).
        compiler_params=pltpu.CompilerParams(vmem_limit_bytes=32 * 1024 * 1024),
    )(x, x_id, params["w0"], params["wrest"], params["gamma"], params["beta"],
      params["reduce"], params["expand"])

    return jnp.transpose(out.reshape(B, H, W, Cout), (0, 3, 1, 2))   # -> NCHW


# ----------------------------------------------------------------------------
# Deterministic parameter init (mirrors PyTorch Conv2d / BatchNorm2d defaults)
# ----------------------------------------------------------------------------
def init_params(key, n, in_channels, out_channels, kernel_size=3):
    convs, bns = [], []
    cin = in_channels
    for _ in range(2 * n):
        key, wk, bk = jax.random.split(key, 3)
        fan_in = cin * kernel_size * kernel_size
        bound = 1.0 / float(fan_in) ** 0.5
        w = jax.random.uniform(wk, (kernel_size, kernel_size, cin, out_channels),
                               jnp.float32, -bound, bound)       # HWIO
        b = jax.random.uniform(bk, (1, out_channels), jnp.float32, -bound, bound)
        convs.append((w, b))
        # BatchNorm2d defaults: weight=1, bias=0
        bns.append((jnp.ones((1, out_channels), jnp.float32),
                    jnp.zeros((1, out_channels), jnp.float32)))
        cin = out_channels
    return convs, bns


# ----------------------------------------------------------------------------
# Pure-JAX reference (same precision policy for the conv) for self-check
# ----------------------------------------------------------------------------
def ref_forward(x_nchw, x_id_nchw, convs, bns, n, eps=1e-5):
    def conv(x, w, b):
        y = jax.lax.conv_general_dilated(
            x.astype(MXU_DTYPE), w.astype(MXU_DTYPE),
            window_strides=(1, 1), padding="SAME",
            dimension_numbers=("NHWC", "HWIO", "NHWC"),
            preferred_element_type=jnp.float32)
        return y + b.reshape(1, 1, 1, -1)

    def bn(y, g, be):
        mean = y.mean(axis=(0, 1, 2), keepdims=True)
        var = ((y - mean) ** 2).mean(axis=(0, 1, 2), keepdims=True)
        return (y - mean) / jnp.sqrt(var + eps) * g.reshape(1, 1, 1, -1) \
            + be.reshape(1, 1, 1, -1)

    out = jnp.transpose(x_nchw, (0, 2, 3, 1))
    x_id = jnp.transpose(x_id_nchw, (0, 2, 3, 1))
    for i in range(n):
        w, b = convs[2 * i]
        out = jnp.maximum(bn(conv(out, w, b), *bns[2 * i]), 0.0)
        w, b = convs[2 * i + 1]
        out = jnp.maximum(bn(conv(out, w, b), *bns[2 * i + 1]) + x_id, 0.0)
        x_id = out
    return jnp.transpose(out, (0, 3, 1, 2))


if __name__ == "__main__":
    B, Cin, Cout, HW, n = 2, 4, 8, 16, 2   # input_shape == output_shape -> stride 1
    key = jax.random.PRNGKey(0)
    k1, k2, k3 = jax.random.split(key, 3)
    x = jax.random.normal(k1, (B, Cin, HW, HW), jnp.float32)       # NCHW
    x_id = jax.random.normal(k2, (B, Cout, HW, HW), jnp.float32)   # NCHW
    convs, bns = init_params(k3, n, Cin, Cout)

    # one-time weight prep (hoisted out of the forward path) + jitted forward
    prep = prepare_block_params(convs, bns, W=HW)
    fwd = jax.jit(functools.partial(conv_block_forward, params=prep, n=n))

    out = jax.block_until_ready(fwd(x, x_id))
    assert out.shape == (B, Cout, HW, HW), out.shape

    ref = ref_forward(x, x_id, convs, bns, n)
    if not bool(jnp.allclose(out, ref, atol=5e-3, rtol=5e-3)):
        err = float(jnp.max(jnp.abs(out - ref)))
        raise AssertionError(
            f"Pallas ConvBlock mismatch vs JAX reference (max abs err {err})")
    print("KERNEL_OK")
</pallas_src>

<mosaic_0001>
module attributes {stable_mosaic.version = 11 : i64} {
  func.func @conv_block_kernel(%arg0: memref<32x64xf32, #tpu.memory_space<vmem>>, %arg1: memref<32x128xf32, #tpu.memory_space<vmem>>, %arg2: memref<384x128xbf16, #tpu.memory_space<vmem>>, %arg3: memref<3x768x128xbf16, #tpu.memory_space<vmem>>, %arg4: memref<4x8xf32, #tpu.memory_space<vmem>>, %arg5: memref<4x8xf32, #tpu.memory_space<vmem>>, %arg6: memref<128x8xf32, #tpu.memory_space<vmem>>, %arg7: memref<8x128xf32, #tpu.memory_space<vmem>>, %arg8: memref<32x128xf32, #tpu.memory_space<vmem>>, %arg9: memref<2x18x256xf32, #tpu.memory_space<vmem>>, %arg10: memref<32x768xbf16, #tpu.memory_space<vmem>>, %arg11: memref<32x128xf32, #tpu.memory_space<vmem>>, %arg12: memref<32x128xf32, #tpu.memory_space<vmem>>) attributes {dimension_semantics = [], scalar_prefetch = 0 : i64, scratch_operands = 4 : i64, tpu.core_type = #tpu.core_type<tc>} {
    %c0 = arith.constant 0 : index
    %c0_0 = arith.constant 0 : index
    %0 = vector.load %arg2[%c0, %c0_0] : memref<384x128xbf16, #tpu.memory_space<vmem>>, vector<384x128xbf16>
    %c0_1 = arith.constant 0 : index
    %c0_2 = arith.constant 0 : index
    %1 = vector.load %arg4[%c0_1, %c0_2] : memref<4x8xf32, #tpu.memory_space<vmem>>, vector<1x8xf32>
    %c0_3 = arith.constant 0 : index
    %c0_4 = arith.constant 0 : index
    %2 = vector.load %arg5[%c0_3, %c0_4] : memref<4x8xf32, #tpu.memory_space<vmem>>, vector<1x8xf32>
    %cst = arith.constant 0.000000e+00 : f32
    %3 = vector.broadcast %cst : f32 to vector<2x18x256xf32>
    %c0_5 = arith.constant 0 : index
    %c0_6 = arith.constant 0 : index
    %c0_7 = arith.constant 0 : index
    %4 = vector.load %arg9[%c0_5, %c0_6, %c0_7] : memref<2x18x256xf32, #tpu.memory_space<vmem>>, vector<2x18x256xf32>
    tpu.vector_store %arg9[%c0_5, %c0_6, %c0_7], %3 {strides = array<i32>} : memref<2x18x256xf32, #tpu.memory_space<vmem>>, vector<2x18x256xf32>,
    %c0_8 = arith.constant 0 : index
    %c0_9 = arith.constant 0 : index
    %5 = vector.load %arg0[%c0_8, %c0_9] : memref<32x64xf32, #tpu.memory_space<vmem>>, vector<32x64xf32>
    %6 = vector.shape_cast %5 : vector<32x64xf32> to vector<2x16x64xf32>
    %c0_10 = arith.constant 0 : index
    %c1 = arith.constant 1 : index
    %c4 = arith.constant 4 : index
    %7 = vector.load %arg9[%c0_10, %c1, %c4] : memref<2x18x256xf32, #tpu.memory_space<vmem>>, vector<2x16x64xf32>
    tpu.vector_store %arg9[%c0_10, %c1, %c4], %6 {strides = array<i32>} : memref<2x18x256xf32, #tpu.memory_space<vmem>>, vector<2x16x64xf32>,
    %c0_11 = arith.constant 0 : index
    %c0_12 = arith.constant 0 : index
    %c0_13 = arith.constant 0 : index
    %8 = vector.load %arg9[%c0_11, %c0_12, %c0_13] : memref<2x18x256xf32, #tpu.memory_space<vmem>>, vector<2x16x128xf32>
    %9 = vector.shape_cast %8 : vector<2x16x128xf32> to vector<32x128xf32>
    %10 = arith.truncf %9 : vector<32x128xf32> to vector<32x128xbf16>
    %c0_14 = arith.constant 0 : index
    %c0_15 = arith.constant 0 : index
    %11 = vector.load %arg10[%c0_14, %c0_15] : memref<32x768xbf16, #tpu.memory_space<vmem>>, vector<32x128xbf16>
    tpu.vector_store %arg10[%c0_14, %c0_15], %10 {strides = array<i32>} : memref<32x768xbf16, #tpu.memory_space<vmem>>, vector<32x128xbf16>,
    %c0_16 = arith.constant 0 : index
    %c1_17 = arith.constant 1 : index
    %c0_18 = arith.constant 0 : index
    %12 = vector.load %arg9[%c0_16, %c1_17, %c0_18] : memref<2x18x256xf32, #tpu.memory_space<vmem>>, vector<2x16x128xf32>
    %13 = vector.shape_cast %12 : vector<2x16x128xf32> to vector<32x128xf32>
    %14 = arith.truncf %13 : vector<32x128xf32> to vector<32x128xbf16>
    %c0_19 = arith.constant 0 : index
    %c128 = arith.constant 128 : index
    %15 = vector.load %arg10[%c0_19, %c128] : memref<32x768xbf16, #tpu.memory_space<vmem>>, vector<32x128xbf16>
    tpu.vector_store %arg10[%c0_19, %c128], %14 {strides = array<i32>} : memref<32x768xbf16, #tpu.memory_space<vmem>>, vector<32x128xbf16>,
    %c0_20 = arith.constant 0 : index
    %c2 = arith.constant 2 : index
    %c0_21 = arith.constant 0 : index
    %16 = vector.load %arg9[%c0_20, %c2, %c0_21] : memref<2x18x256xf32, #tpu.memory_space<vmem>>, vector<2x16x128xf32>
    %17 = vector.shape_cast %16 : vector<2x16x128xf32> to vector<32x128xf32>
    %18 = arith.truncf %17 : vector<32x128xf32> to vector<32x128xbf16>
    %c0_22 = arith.constant 0 : index
    %c256 = arith.constant 256 : index
    %19 = vector.load %arg10[%c0_22, %c256] : memref<32x768xbf16, #tpu.memory_space<vmem>>, vector<32x128xbf16>
    tpu.vector_store %arg10[%c0_22, %c256], %18 {strides = array<i32>} : memref<32x768xbf16, #tpu.memory_space<vmem>>, vector<32x128xbf16>,
    %c0_23 = arith.constant 0 : index
    %c0_24 = arith.constant 0 : index
    %20 = vector.load %arg10[%c0_23, %c0_24] : memref<32x768xbf16, #tpu.memory_space<vmem>>, vector<32x384xbf16>
    %cst_25 = arith.constant dense<0.000000e+00> : vector<32x128xf32>
    %21 = tpu.matmul %20, %0, %cst_25 {dimension_numbers = #tpu.dot_dimension_numbers<[1], [0], [0], [1], [0, 0, 1, 1], [], []>} : vector<32x384xbf16>, vector<384x128xbf16>, vector<32x128xf32> -> vector<32x128xf32>
    %cst_26 = arith.constant dense<0.000000e+00> : vector<128xf32>
    %22 = vector.multi_reduction <add>, %21, %cst_26 [0] : vector<32x128xf32> to vector<128xf32>
    %23 = vector.shape_cast %22 : vector<128xf32> to vector<1x128xf32>
    %24 = arith.mulf %21, %21 : vector<32x128xf32>
    %cst_27 = arith.constant dense<0.000000e+00> : vector<128xf32>
    %25 = vector.multi_reduction <add>, %24, %cst_27 [0] : vector<32x128xf32> to vector<128xf32>
    %26 = vector.shape_cast %25 : vector<128xf32> to vector<1x128xf32>
    %27 = tpu.concatenate %23, %26 in 0 : vector<1x128xf32>, vector<1x128xf32> -> vector<2x128xf32>
    %c0_28 = arith.constant 0 : index
    %c0_29 = arith.constant 0 : index
    %28 = vector.load %arg6[%c0_28, %c0_29] : memref<128x8xf32, #tpu.memory_space<vmem>>, vector<128x8xf32>
    %cst_30 = arith.constant dense<0.000000e+00> : vector<2x8xf32>
    %29 = tpu.matmul %27, %28, %cst_30 {dimension_numbers = #tpu.dot_dimension_numbers<[1], [0], [0], [1], [0, 0, 1, 1], [], []>} : vector<2x128xf32>, vector<128x8xf32>, vector<2x8xf32> -> vector<2x8xf32>
    %30 = vector.extract_strided_slice %29 {offsets = [0, 0], sizes = [1, 8], strides = [1, 1]} : vector<2x8xf32> to vector<1x8xf32>
    %cst_31 = arith.constant 0.001953125 : f32
    %31 = vector.broadcast %cst_31 : f32 to vector<1x8xf32>
    %32 = arith.mulf %30, %31 : vector<1x8xf32>
    %33 = vector.extract_strided_slice %29 {offsets = [1, 0], sizes = [1, 8], strides = [1, 1]} : vector<2x8xf32> to vector<1x8xf32>
    %cst_32 = arith.constant 0.001953125 : f32
    %34 = vector.broadcast %cst_32 : f32 to vector<1x8xf32>
    %35 = arith.mulf %33, %34 : vector<1x8xf32>
    %36 = arith.mulf %32, %32 : vector<1x8xf32>
    %37 = arith.subf %35, %36 : vector<1x8xf32>
    %cst_33 = arith.constant 0.000000e+00 : f32
    %38 = vector.broadcast %cst_33 : f32 to vector<1x8xf32>
    %39 = arith.maximumf %37, %38 : vector<1x8xf32>
    %cst_34 = arith.constant 9.99999974E-6 : f32
    %40 = vector.broadcast %cst_34 : f32 to vector<1x8xf32>
    %41 = arith.addf %39, %40 : vector<1x8xf32>
    %42 = math.rsqrt %41 : vector<1x8xf32>
    %43 = arith.mulf %1, %42 : vector<1x8xf32>
    %44 = arith.mulf %32, %43 : vector<1x8xf32>
    %45 = arith.subf %2, %44 : vector<1x8xf32>
    %46 = tpu.concatenate %43, %45 in 0 : vector<1x8xf32>, vector<1x8xf32> -> vector<2x8xf32>
    %c0_35 = arith.constant 0 : index
    %c0_36 = arith.constant 0 : index
    %47 = vector.load %arg7[%c0_35, %c0_36] : memref<8x128xf32, #tpu.memory_space<vmem>>, vector<8x128xf32>
    %cst_37 = arith.constant dense<0.000000e+00> : vector<2x128xf32>
    %48 = tpu.matmul %46, %47, %cst_37 {dimension_numbers = #tpu.dot_dimension_numbers<[1], [0], [0], [1], [0, 0, 1, 1], [], []>} : vector<2x8xf32>, vector<8x128xf32>, vector<2x128xf32> -> vector<2x128xf32>
    %49 = vector.extract_strided_slice %48 {offsets = [0, 0], sizes = [1, 128], strides = [1, 1]} : vector<2x128xf32> to vector<1x128xf32>
    %50 = vector.broadcast %49 : vector<1x128xf32> to vector<32x128xf32>
    %51 = arith.mulf %21, %50 : vector<32x128xf32>
    %52 = vector.extract_strided_slice %48 {offsets = [1, 0], sizes = [1, 128], strides = [1, 1]} : vector<2x128xf32> to vector<1x128xf32>
    %53 = vector.broadcast %52 : vector<1x128xf32> to vector<32x128xf32>
    %54 = arith.addf %51, %53 : vector<32x128xf32>
    %cst_38 = arith.constant 0.000000e+00 : f32
    %55 = vector.broadcast %cst_38 : f32 to vector<32x128xf32>
    %56 = arith.maximumf %54, %55 : vector<32x128xf32>
    %c0_39 = arith.constant 0 : index
    %c0_40 = arith.constant 0 : index
    %57 = vector.load %arg11[%c0_39, %c0_40] : memref<32x128xf32, #tpu.memory_space<vmem>>, vector<32x128xf32>
    tpu.vector_store %arg11[%c0_39, %c0_40], %56 {strides = array<i32>} : memref<32x128xf32, #tpu.memory_space<vmem>>, vector<32x128xf32>,
    %c0_41 = arith.constant 0 : index
    %c0_42 = arith.constant 0 : index
    %c0_43 = arith.constant 0 : index
    %58 = vector.load %arg3[%c0_41, %c0_42, %c0_43] : memref<3x768x128xbf16, #tpu.memory_space<vmem>>, vector<1x768x128xbf16>
    %59 = vector.shape_cast %58 : vector<1x768x128xbf16> to vector<768x128xbf16>
    %c1_44 = arith.constant 1 : index
    %c0_45 = arith.constant 0 : index
    %60 = vector.load %arg4[%c1_44, %c0_45] : memref<4x8xf32, #tpu.memory_space<vmem>>, vector<1x8xf32>
    %c1_46 = arith.constant 1 : index
    %c0_47 = arith.constant 0 : index
    %61 = vector.load %arg5[%c1_46, %c0_47] : memref<4x8xf32, #tpu.memory_space<vmem>>, vector<1x8xf32>
    %c0_48 = arith.constant 0 : index
    %c0_49 = arith.constant 0 : index
    %62 = vector.load %arg1[%c0_48, %c0_49] : memref<32x128xf32, #tpu.memory_space<vmem>>, vector<32x128xf32>
    %cst_50 = arith.constant 0.000000e+00 : f32
    %63 = vector.broadcast %cst_50 : f32 to vector<2x18x256xf32>
    %c0_51 = arith.constant 0 : index
    %c0_52 = arith.constant 0 : index
    %c0_53 = arith.constant 0 : index
    %64 = vector.load %arg9[%c0_51, %c0_52, %c0_53] : memref<2x18x256xf32, #tpu.memory_space<vmem>>, vector<2x18x256xf32>
    tpu.vector_store %arg9[%c0_51, %c0_52, %c0_53], %63 {strides = array<i32>} : memref<2x18x256xf32, #tpu.memory_space<vmem>>, vector<2x18x256xf32>,
    %c0_54 = arith.constant 0 : index
    %c0_55 = arith.constant 0 : index
    %65 = vector.load %arg11[%c0_54, %c0_55] : memref<32x128xf32, #tpu.memory_space<vmem>>, vector<32x128xf32>
    %66 = vector.shape_cast %65 : vector<32x128xf32> to vector<2x16x128xf32>
    %c0_56 = arith.constant 0 : index
    %c1_57 = arith.constant 1 : index
    %c8 = arith.constant 8 : index
    %67 = vector.load %arg9[%c0_56, %c1_57, %c8] : memref<2x18x256xf32, #tpu.memory_space<vmem>>, vector<2x16x128xf32>
    tpu.vector_store %arg9[%c0_56, %c1_57, %c8], %66 {strides = array<i32>} : memref<2x18x256xf32, #tpu.memory_space<vmem>>, vector<2x16x128xf32>,
    %c0_58 = arith.constant 0 : index
    %c0_59 = arith.constant 0 : index
    %c0_60 = arith.constant 0 : index
    %68 = vector.load %arg9[%c0_58, %c0_59, %c0_60] : memref<2x18x256xf32, #tpu.memory_space<vmem>>, vector<2x16x256xf32>
    %69 = vector.shape_cast %68 : vector<2x16x256xf32> to vector<32x256xf32>
    %70 = arith.truncf %69 : vector<32x256xf32> to vector<32x256xbf16>
    %c0_61 = arith.constant 0 : index
    %c0_62 = arith.constant 0 : index
    %71 = vector.load %arg10[%c0_61, %c0_62] : memref<32x768xbf16, #tpu.memory_space<vmem>>, vector<32x256xbf16>
    tpu.vector_store %arg10[%c0_61, %c0_62], %70 {strides = array<i32>} : memref<32x768xbf16, #tpu.memory_space<vmem>>, vector<32x256xbf16>,
    %c0_63 = arith.constant 0 : index
    %c1_64 = arith.constant 1 : index
    %c0_65 = arith.constant 0 : index
    %72 = vector.load %arg9[%c0_63, %c1_64, %c0_65] : memref<2x18x256xf32, #tpu.memory_space<vmem>>, vector<2x16x256xf32>
    %73 = vector.shape_cast %72 : vector<2x16x256xf32> to vector<32x256xf32>
    %74 = arith.truncf %73 : vector<32x256xf32> to vector<32x256xbf16>
    %c0_66 = arith.constant 0 : index
    %c256_67 = arith.constant 256 : index
    %75 = vector.load %arg10[%c0_66, %c256_67] : memref<32x768xbf16, #tpu.memory_space<vmem>>, vector<32x256xbf16>
    tpu.vector_store %arg10[%c0_66, %c256_67], %74 {strides = array<i32>} : memref<32x768xbf16, #tpu.memory_space<vmem>>, vector<32x256xbf16>,
    %c0_68 = arith.constant 0 : index
    %c2_69 = arith.constant 2 : index
    %c0_70 = arith.constant 0 : index
    %76 = vector.load %arg9[%c0_68, %c2_69, %c0_70] : memref<2x18x256xf32, #tpu.memory_space<vmem>>, vector<2x16x256xf32>
    %77 = vector.shape_cast %76 : vector<2x16x256xf32> to vector<32x256xf32>
    %78 = arith.truncf %77 : vector<32x256xf32> to vector<32x256xbf16>
    %c0_71 = arith.constant 0 : index
    %c512 = arith.constant 512 : index
    %79 = vector.load %arg10[%c0_71, %c512] : memref<32x768xbf16, #tpu.memory_space<vmem>>, vector<32x256xbf16>
    tpu.vector_store %arg10[%c0_71, %c512], %78 {strides = array<i32>} : memref<32x768xbf16, #tpu.memory_space<vmem>>, vector<32x256xbf16>,
    %c0_72 = arith.constant 0 : index
    %c0_73 = arith.constant 0 : index
    %80 = vector.load %arg10[%c0_72, %c0_73] : memref<32x768xbf16, #tpu.memory_space<vmem>>, vector<32x768xbf16>
    %cst_74 = arith.constant dense<0.000000e+00> : vector<32x128xf32>
    %81 = tpu.matmul %80, %59, %cst_74 {dimension_numbers = #tpu.dot_dimension_numbers<[1], [0], [0], [1], [0, 0, 1, 1], [], []>} : vector<32x768xbf16>, vector<768x128xbf16>, vector<32x128xf32> -> vector<32x128xf32>
    %cst_75 = arith.constant dense<0.000000e+00> : vector<128xf32>
    %82 = vector.multi_reduction <add>, %81, %cst_75 [0] : vector<32x128xf32> to vector<128xf32>
    %83 = vector.shape_cast %82 : vector<128xf32> to vector<1x128xf32>
    %84 = arith.mulf %81, %81 : vector<32x128xf32>
    %cst_76 = arith.constant dense<0.000000e+00> : vector<128xf32>
    %85 = vector.multi_reduction <add>, %84, %cst_76 [0] : vector<32x128xf32> to vector<128xf32>
    %86 = vector.shape_cast %85 : vector<128xf32> to vector<1x128xf32>
    %87 = tpu.concatenate %83, %86 in 0 : vector<1x128xf32>, vector<1x128xf32> -> vector<2x128xf32>
    %c0_77 = arith.constant 0 : index
    %c0_78 = arith.constant 0 : index
    %88 = vector.load %arg6[%c0_77, %c0_78] : memref<128x8xf32, #tpu.memory_space<vmem>>, vector<128x8xf32>
    %cst_79 = arith.constant dense<0.000000e+00> : vector<2x8xf32>
    %89 = tpu.matmul %87, %88, %cst_79 {dimension_numbers = #tpu.dot_dimension_numbers<[1], [0], [0], [1], [0, 0, 1, 1], [], []>} : vector<2x128xf32>, vector<128x8xf32>, vector<2x8xf32> -> vector<2x8xf32>
    %90 = vector.extract_strided_slice %89 {offsets = [0, 0], sizes = [1, 8], strides = [1, 1]} : vector<2x8xf32> to vector<1x8xf32>
    %cst_80 = arith.constant 0.001953125 : f32
    %91 = vector.broadcast %cst_80 : f32 to vector<1x8xf32>
    %92 = arith.mulf %90, %91 : vector<1x8xf32>
    %93 = vector.extract_strided_slice %89 {offsets = [1, 0], sizes = [1, 8], strides = [1, 1]} : vector<2x8xf32> to vector<1x8xf32>
    %cst_81 = arith.constant 0.001953125 : f32
    %94 = vector.broadcast %cst_81 : f32 to vector<1x8xf32>
    %95 = arith.mulf %93, %94 : vector<1x8xf32>
    %96 = arith.mulf %92, %92 : vector<1x8xf32>
    %97 = arith.subf %95, %96 : vector<1x8xf32>
    %cst_82 = arith.constant 0.000000e+00 : f32
    %98 = vector.broadcast %cst_82 : f32 to vector<1x8xf32>
    %99 = arith.maximumf %97, %98 : vector<1x8xf32>
    %cst_83 = arith.constant 9.99999974E-6 : f32
    %100 = vector.broadcast %cst_83 : f32 to vector<1x8xf32>
    %101 = arith.addf %99, %100 : vector<1x8xf32>
    %102 = math.rsqrt %101 : vector<1x8xf32>
    %103 = arith.mulf %60, %102 : vector<1x8xf32>
    %104 = arith.mulf %92, %103 : vector<1x8xf32>
    %105 = arith.subf %61, %104 : vector<1x8xf32>
    %106 = tpu.concatenate %103, %105 in 0 : vector<1x8xf32>, vector<1x8xf32> -> vector<2x8xf32>
    %c0_84 = arith.constant 0 : index
    %c0_85 = arith.constant 0 : index
    %107 = vector.load %arg7[%c0_84, %c0_85] : memref<8x128xf32, #tpu.memory_space<vmem>>, vector<8x128xf32>
    %cst_86 = arith.constant dense<0.000000e+00> : vector<2x128xf32>
    %108 = tpu.matmul %106, %107, %cst_86 {dimension_numbers = #tpu.dot_dimension_numbers<[1], [0], [0], [1], [0, 0, 1, 1], [], []>} : vector<2x8xf32>, vector<8x128xf32>, vector<2x128xf32> -> vector<2x128xf32>
    %109 = vector.extract_strided_slice %108 {offsets = [0, 0], sizes = [1, 128], strides = [1, 1]} : vector<2x128xf32> to vector<1x128xf32>
    %110 = vector.broadcast %109 : vector<1x128xf32> to vector<32x128xf32>
    %111 = arith.mulf %81, %110 : vector<32x128xf32>
    %112 = vector.extract_strided_slice %108 {offsets = [1, 0], sizes = [1, 128], strides = [1, 1]} : vector<2x128xf32> to vector<1x128xf32>
    %113 = vector.broadcast %112 : vector<1x128xf32> to vector<32x128xf32>
    %114 = arith.addf %111, %113 : vector<32x128xf32>
    %115 = arith.addf %114, %62 : vector<32x128xf32>
    %cst_87 = arith.constant 0.000000e+00 : f32
    %116 = vector.broadcast %cst_87 : f32 to vector<32x128xf32>
    %117 = arith.maximumf %115, %116 : vector<32x128xf32>
    %c0_88 = arith.constant 0 : index
    %c0_89 = arith.constant 0 : index
    %118 = vector.load %arg12[%c0_88, %c0_89] : memref<32x128xf32, #tpu.memory_space<vmem>>, vector<32x128xf32>
    tpu.vector_store %arg12[%c0_88, %c0_89], %117 {strides = array<i32>} : memref<32x128xf32, #tpu.memory_space<vmem>>, vector<32x128xf32>,
    %c1_90 = arith.constant 1 : index
    %c0_91 = arith.constant 0 : index
    %c0_92 = arith.constant 0 : index
    %119 = vector.load %arg3[%c1_90, %c0_91, %c0_92] : memref<3x768x128xbf16, #tpu.memory_space<vmem>>, vector<1x768x128xbf16>
    %120 = vector.shape_cast %119 : vector<1x768x128xbf16> to vector<768x128xbf16>
    %c2_93 = arith.constant 2 : index
    %c0_94 = arith.constant 0 : index
    %121 = vector.load %arg4[%c2_93, %c0_94] : memref<4x8xf32, #tpu.memory_space<vmem>>, vector<1x8xf32>
    %c2_95 = arith.constant 2 : index
    %c0_96 = arith.constant 0 : index
    %122 = vector.load %arg5[%c2_95, %c0_96] : memref<4x8xf32, #tpu.memory_space<vmem>>, vector<1x8xf32>
    %c0_97 = arith.constant 0 : index
    %c0_98 = arith.constant 0 : index
    %123 = vector.load %arg12[%c0_97, %c0_98] : memref<32x128xf32, #tpu.memory_space<vmem>>, vector<32x128xf32>
    %124 = vector.shape_cast %123 : vector<32x128xf32> to vector<2x16x128xf32>
    %c0_99 = arith.constant 0 : index
    %c1_100 = arith.constant 1 : index
    %c8_101 = arith.constant 8 : index
    %125 = vector.load %arg9[%c0_99, %c1_100, %c8_101] : memref<2x18x256xf32, #tpu.memory_space<vmem>>, vector<2x16x128xf32>
    tpu.vector_store %arg9[%c0_99, %c1_100, %c8_101], %124 {strides = array<i32>} : memref<2x18x256xf32, #tpu.memory_space<vmem>>, vector<2x16x128xf32>,
    %c0_102 = arith.constant 0 : index
    %c0_103 = arith.constant 0 : index
    %c0_104 = arith.constant 0 : index
    %126 = vector.load %arg9[%c0_102, %c0_103, %c0_104] : memref<2x18x256xf32, #tpu.memory_space<vmem>>, vector<2x16x256xf32>
    %127 = vector.shape_cast %126 : vector<2x16x256xf32> to vector<32x256xf32>
    %128 = arith.truncf %127 : vector<32x256xf32> to vector<32x256xbf16>
    %c0_105 = arith.constant 0 : index
    %c0_106 = arith.constant 0 : index
    %129 = vector.load %arg10[%c0_105, %c0_106] : memref<32x768xbf16, #tpu.memory_space<vmem>>, vector<32x256xbf16>
    tpu.vector_store %arg10[%c0_105, %c0_106], %128 {strides = array<i32>} : memref<32x768xbf16, #tpu.memory_space<vmem>>, vector<32x256xbf16>,
    %c0_107 = arith.constant 0 : index
    %c1_108 = arith.constant 1 : index
    %c0_109 = arith.constant 0 : index
    %130 = vector.load %arg9[%c0_107, %c1_108, %c0_109] : memref<2x18x256xf32, #tpu.memory_space<vmem>>, vector<2x16x256xf32>
    %131 = vector.shape_cast %130 : vector<2x16x256xf32> to vector<32x256xf32>
    %132 = arith.truncf %131 : vector<32x256xf32> to vector<32x256xbf16>
    %c0_110 = arith.constant 0 : index
    %c256_111 = arith.constant 256 : index
    %133 = vector.load %arg10[%c0_110, %c256_111] : memref<32x768xbf16, #tpu.memory_space<vmem>>, vector<32x256xbf16>
    tpu.vector_store %arg10[%c0_110, %c256_111], %132 {strides = array<i32>} : memref<32x768xbf16, #tpu.memory_space<vmem>>, vector<32x256xbf16>,
    %c0_112 = arith.constant 0 : index
    %c2_113 = arith.constant 2 : index
    %c0_114 = arith.constant 0 : index
    %134 = vector.load %arg9[%c0_112, %c2_113, %c0_114] : memref<2x18x256xf32, #tpu.memory_space<vmem>>, vector<2x16x256xf32>
    %135 = vector.shape_cast %134 : vector<2x16x256xf32> to vector<32x256xf32>
    %136 = arith.truncf %135 : vector<32x256xf32> to vector<32x256xbf16>
    %c0_115 = arith.constant 0 : index
    %c512_116 = arith.constant 512 : index
    %137 = vector.load %arg10[%c0_115, %c512_116] : memref<32x768xbf16, #tpu.memory_space<vmem>>, vector<32x256xbf16>
    tpu.vector_store %arg10[%c0_115, %c512_116], %136 {strides = array<i32>} : memref<32x768xbf16, #tpu.memory_space<vmem>>, vector<32x256xbf16>,
    %c0_117 = arith.constant 0 : index
    %c0_118 = arith.constant 0 : index
    %138 = vector.load %arg10[%c0_117, %c0_118] : memref<32x768xbf16, #tpu.memory_space<vmem>>, vector<32x768xbf16>
    %cst_119 = arith.constant dense<0.000000e+00> : vector<32x128xf32>
    %139 = tpu.matmul %138, %120, %cst_119 {dimension_numbers = #tpu.dot_dimension_numbers<[1], [0], [0], [1], [0, 0, 1, 1], [], []>} : vector<32x768xbf16>, vector<768x128xbf16>, vector<32x128xf32> -> vector<32x128xf32>
    %cst_120 = arith.constant dense<0.000000e+00> : vector<128xf32>
    %140 = vector.multi_reduction <add>, %139, %cst_120 [0] : vector<32x128xf32> to vector<128xf32>
    %141 = vector.shape_cast %140 : vector<128xf32> to vector<1x128xf32>
    %142 = arith.mulf %139, %139 : vector<32x128xf32>
    %cst_121 = arith.constant dense<0.000000e+00> : vector<128xf32>
    %143 = vector.multi_reduction <add>, %142, %cst_121 [0] : vector<32x128xf32> to vector<128xf32>
    %144 = vector.shape_cast %143 : vector<128xf32> to vector<1x128xf32>
    %145 = tpu.concatenate %141, %144 in 0 : vector<1x128xf32>, vector<1x128xf32> -> vector<2x128xf32>
    %c0_122 = arith.constant 0 : index
    %c0_123 = arith.constant 0 : index
    %146 = vector.load %arg6[%c0_122, %c0_123] : memref<128x8xf32, #tpu.memory_space<vmem>>, vector<128x8xf32>
    %cst_124 = arith.constant dense<0.000000e+00> : vector<2x8xf32>
    %147 = tpu.matmul %145, %146, %cst_124 {dimension_numbers = #tpu.dot_dimension_numbers<[1], [0], [0], [1], [0, 0, 1, 1], [], []>} : vector<2x128xf32>, vector<128x8xf32>, vector<2x8xf32> -> vector<2x8xf32>
    %148 = vector.extract_strided_slice %147 {offsets = [0, 0], sizes = [1, 8], strides = [1, 1]} : vector<2x8xf32> to vector<1x8xf32>
    %cst_125 = arith.constant 0.001953125 : f32
    %149 = vector.broadcast %cst_125 : f32 to vector<1x8xf32>
    %150 = arith.mulf %148, %149 : vector<1x8xf32>
    %151 = vector.extract_strided_slice %147 {offsets = [1, 0], sizes = [1, 8], strides = [1, 1]} : vector<2x8xf32> to vector<1x8xf32>
    %cst_126 = arith.constant 0.001953125 : f32
    %152 = vector.broadcast %cst_126 : f32 to vector<1x8xf32>
    %153 = arith.mulf %151, %152 : vector<1x8xf32>
    %154 = arith.mulf %150, %150 : vector<1x8xf32>
    %155 = arith.subf %153, %154 : vector<1x8xf32>
    %cst_127 = arith.constant 0.000000e+00 : f32
    %156 = vector.broadcast %cst_127 : f32 to vector<1x8xf32>
    %157 = arith.maximumf %155, %156 : vector<1x8xf32>
    %cst_128 = arith.constant 9.99999974E-6 : f32
    %158 = vector.broadcast %cst_128 : f32 to vector<1x8xf32>
    %159 = arith.addf %157, %158 : vector<1x8xf32>
    %160 = math.rsqrt %159 : vector<1x8xf32>
    %161 = arith.mulf %121, %160 : vector<1x8xf32>
    %162 = arith.mulf %150, %161 : vector<1x8xf32>
    %163 = arith.subf %122, %162 : vector<1x8xf32>
    %164 = tpu.concatenate %161, %163 in 0 : vector<1x8xf32>, vector<1x8xf32> -> vector<2x8xf32>
    %c0_129 = arith.constant 0 : index
    %c0_130 = arith.constant 0 : index
    %165 = vector.load %arg7[%c0_129, %c0_130] : memref<8x128xf32, #tpu.memory_space<vmem>>, vector<8x128xf32>
    %cst_131 = arith.constant dense<0.000000e+00> : vector<2x128xf32>
    %166 = tpu.matmul %164, %165, %cst_131 {dimension_numbers = #tpu.dot_dimension_numbers<[1], [0], [0], [1], [0, 0, 1, 1], [], []>} : vector<2x8xf32>, vector<8x128xf32>, vector<2x128xf32> -> vector<2x128xf32>
    %167 = vector.extract_strided_slice %166 {offsets = [0, 0], sizes = [1, 128], strides = [1, 1]} : vector<2x128xf32> to vector<1x128xf32>
    %168 = vector.broadcast %167 : vector<1x128xf32> to vector<32x128xf32>
    %169 = arith.mulf %139, %168 : vector<32x128xf32>
    %170 = vector.extract_strided_slice %166 {offsets = [1, 0], sizes = [1, 128], strides = [1, 1]} : vector<2x128xf32> to vector<1x128xf32>
    %171 = vector.broadcast %170 : vector<1x128xf32> to vector<32x128xf32>
    %172 = arith.addf %169, %171 : vector<32x128xf32>
    %cst_132 = arith.constant 0.000000e+00 : f32
    %173 = vector.broadcast %cst_132 : f32 to vector<32x128xf32>
    %174 = arith.maximumf %172, %173 : vector<32x128xf32>
    %c0_133 = arith.constant 0 : index
    %c0_134 = arith.constant 0 : index
    %175 = vector.load %arg11[%c0_133, %c0_134] : memref<32x128xf32, #tpu.memory_space<vmem>>, vector<32x128xf32>
    tpu.vector_store %arg11[%c0_133, %c0_134], %174 {strides = array<i32>} : memref<32x128xf32, #tpu.memory_space<vmem>>, vector<32x128xf32>,
    %c2_135 = arith.constant 2 : index
    %c0_136 = arith.constant 0 : index
    %c0_137 = arith.constant 0 : index
    %176 = vector.load %arg3[%c2_135, %c0_136, %c0_137] : memref<3x768x128xbf16, #tpu.memory_space<vmem>>, vector<1x768x128xbf16>
    %177 = vector.shape_cast %176 : vector<1x768x128xbf16> to vector<768x128xbf16>
    %c3 = arith.constant 3 : index
    %c0_138 = arith.constant 0 : index
    %178 = vector.load %arg4[%c3, %c0_138] : memref<4x8xf32, #tpu.memory_space<vmem>>, vector<1x8xf32>
    %c3_139 = arith.constant 3 : index
    %c0_140 = arith.constant 0 : index
    %179 = vector.load %arg5[%c3_139, %c0_140] : memref<4x8xf32, #tpu.memory_space<vmem>>, vector<1x8xf32>
    %c0_141 = arith.constant 0 : index
    %c0_142 = arith.constant 0 : index
    %180 = vector.load %arg12[%c0_141, %c0_142] : memref<32x128xf32, #tpu.memory_space<vmem>>, vector<32x128xf32>
    %c0_143 = arith.constant 0 : index
    %c0_144 = arith.constant 0 : index
    %181 = vector.load %arg11[%c0_143, %c0_144] : memref<32x128xf32, #tpu.memory_space<vmem>>, vector<32x128xf32>
    %182 = vector.shape_cast %181 : vector<32x128xf32> to vector<2x16x128xf32>
    %c0_145 = arith.constant 0 : index
    %c1_146 = arith.constant 1 : index
    %c8_147 = arith.constant 8 : index
    %183 = vector.load %arg9[%c0_145, %c1_146, %c8_147] : memref<2x18x256xf32, #tpu.memory_space<vmem>>, vector<2x16x128xf32>
    tpu.vector_store %arg9[%c0_145, %c1_146, %c8_147], %182 {strides = array<i32>} : memref<2x18x256xf32, #tpu.memory_space<vmem>>, vector<2x16x128xf32>,
    %c0_148 = arith.constant 0 : index
    %c0_149 = arith.constant 0 : index
    %c0_150 = arith.constant 0 : index
    %184 = vector.load %arg9[%c0_148, %c0_149, %c0_150] : memref<2x18x256xf32, #tpu.memory_space<vmem>>, vector<2x16x256xf32>
    %185 = vector.shape_cast %184 : vector<2x16x256xf32> to vector<32x256xf32>
    %186 = arith.truncf %185 : vector<32x256xf32> to vector<32x256xbf16>
    %c0_151 = arith.constant 0 : index
    %c0_152 = arith.constant 0 : index
    %187 = vector.load %arg10[%c0_151, %c0_152] : memref<32x768xbf16, #tpu.memory_space<vmem>>, vector<32x256xbf16>
    tpu.vector_store %arg10[%c0_151, %c0_152], %186 {strides = array<i32>} : memref<32x768xbf16, #tpu.memory_space<vmem>>, vector<32x256xbf16>,
    %c0_153 = arith.constant 0 : index
    %c1_154 = arith.constant 1 : index
    %c0_155 = arith.constant 0 : index
    %188 = vector.load %arg9[%c0_153, %c1_154, %c0_155] : memref<2x18x256xf32, #tpu.memory_space<vmem>>, vector<2x16x256xf32>
    %189 = vector.shape_cast %188 : vector<2x16x256xf32> to vector<32x256xf32>
    %190 = arith.truncf %189 : vector<32x256xf32> to vector<32x256xbf16>
    %c0_156 = arith.constant 0 : index
    %c256_157 = arith.constant 256 : index
    %191 = vector.load %arg10[%c0_156, %c256_157] : memref<32x768xbf16, #tpu.memory_space<vmem>>, vector<32x256xbf16>
    tpu.vector_store %arg10[%c0_156, %c256_157], %190 {strides = array<i32>} : memref<32x768xbf16, #tpu.memory_space<vmem>>, vector<32x256xbf16>,
    %c0_158 = arith.constant 0 : index
    %c2_159 = arith.constant 2 : index
    %c0_160 = arith.constant 0 : index
    %192 = vector.load %arg9[%c0_158, %c2_159, %c0_160] : memref<2x18x256xf32, #tpu.memory_space<vmem>>, vector<2x16x256xf32>
    %193 = vector.shape_cast %192 : vector<2x16x256xf32> to vector<32x256xf32>
    %194 = arith.truncf %193 : vector<32x256xf32> to vector<32x256xbf16>
    %c0_161 = arith.constant 0 : index
    %c512_162 = arith.constant 512 : index
    %195 = vector.load %arg10[%c0_161, %c512_162] : memref<32x768xbf16, #tpu.memory_space<vmem>>, vector<32x256xbf16>
    tpu.vector_store %arg10[%c0_161, %c512_162], %194 {strides = array<i32>} : memref<32x768xbf16, #tpu.memory_space<vmem>>, vector<32x256xbf16>,
    %c0_163 = arith.constant 0 : index
    %c0_164 = arith.constant 0 : index
    %196 = vector.load %arg10[%c0_163, %c0_164] : memref<32x768xbf16, #tpu.memory_space<vmem>>, vector<32x768xbf16>
    %cst_165 = arith.constant dense<0.000000e+00> : vector<32x128xf32>
    %197 = tpu.matmul %196, %177, %cst_165 {dimension_numbers = #tpu.dot_dimension_numbers<[1], [0], [0], [1], [0, 0, 1, 1], [], []>} : vector<32x768xbf16>, vector<768x128xbf16>, vector<32x128xf32> -> vector<32x128xf32>
    %cst_166 = arith.constant dense<0.000000e+00> : vector<128xf32>
    %198 = vector.multi_reduction <add>, %197, %cst_166 [0] : vector<32x128xf32> to vector<128xf32>
    %199 = vector.shape_cast %198 : vector<128xf32> to vector<1x128xf32>
    %200 = arith.mulf %197, %197 : vector<32x128xf32>
    %cst_167 = arith.constant dense<0.000000e+00> : vector<128xf32>
    %201 = vector.multi_reduction <add>, %200, %cst_167 [0] : vector<32x128xf32> to vector<128xf32>
    %202 = vector.shape_cast %201 : vector<128xf32> to vector<1x128xf32>
    %203 = tpu.concatenate %199, %202 in 0 : vector<1x128xf32>, vector<1x128xf32> -> vector<2x128xf32>
    %c0_168 = arith.constant 0 : index
    %c0_169 = arith.constant 0 : index
    %204 = vector.load %arg6[%c0_168, %c0_169] : memref<128x8xf32, #tpu.memory_space<vmem>>, vector<128x8xf32>
    %cst_170 = arith.constant dense<0.000000e+00> : vector<2x8xf32>
    %205 = tpu.matmul %203, %204, %cst_170 {dimension_numbers = #tpu.dot_dimension_numbers<[1], [0], [0], [1], [0, 0, 1, 1], [], []>} : vector<2x128xf32>, vector<128x8xf32>, vector<2x8xf32> -> vector<2x8xf32>
    %206 = vector.extract_strided_slice %205 {offsets = [0, 0], sizes = [1, 8], strides = [1, 1]} : vector<2x8xf32> to vector<1x8xf32>
    %cst_171 = arith.constant 0.001953125 : f32
    %207 = vector.broadcast %cst_171 : f32 to vector<1x8xf32>
    %208 = arith.mulf %206, %207 : vector<1x8xf32>
    %209 = vector.extract_strided_slice %205 {offsets = [1, 0], sizes = [1, 8], strides = [1, 1]} : vector<2x8xf32> to vector<1x8xf32>
    %cst_172 = arith.constant 0.001953125 : f32
    %210 = vector.broadcast %cst_172 : f32 to vector<1x8xf32>
    %211 = arith.mulf %209, %210 : vector<1x8xf32>
    %212 = arith.mulf %208, %208 : vector<1x8xf32>
    %213 = arith.subf %211, %212 : vector<1x8xf32>
    %cst_173 = arith.constant 0.000000e+00 : f32
    %214 = vector.broadcast %cst_173 : f32 to vector<1x8xf32>
    %215 = arith.maximumf %213, %214 : vector<1x8xf32>
    %cst_174 = arith.constant 9.99999974E-6 : f32
    %216 = vector.broadcast %cst_174 : f32 to vector<1x8xf32>
    %217 = arith.addf %215, %216 : vector<1x8xf32>
    %218 = math.rsqrt %217 : vector<1x8xf32>
    %219 = arith.mulf %178, %218 : vector<1x8xf32>
    %220 = arith.mulf %208, %219 : vector<1x8xf32>
    %221 = arith.subf %179, %220 : vector<1x8xf32>
    %222 = tpu.concatenate %219, %221 in 0 : vector<1x8xf32>, vector<1x8xf32> -> vector<2x8xf32>
    %c0_175 = arith.constant 0 : index
    %c0_176 = arith.constant 0 : index
    %223 = vector.load %arg7[%c0_175, %c0_176] : memref<8x128xf32, #tpu.memory_space<vmem>>, vector<8x128xf32>
    %cst_177 = arith.constant dense<0.000000e+00> : vector<2x128xf32>
    %224 = tpu.matmul %222, %223, %cst_177 {dimension_numbers = #tpu.dot_dimension_numbers<[1], [0], [0], [1], [0, 0, 1, 1], [], []>} : vector<2x8xf32>, vector<8x128xf32>, vector<2x128xf32> -> vector<2x128xf32>
    %225 = vector.extract_strided_slice %224 {offsets = [0, 0], sizes = [1, 128], strides = [1, 1]} : vector<2x128xf32> to vector<1x128xf32>
    %226 = vector.broadcast %225 : vector<1x128xf32> to vector<32x128xf32>
    %227 = arith.mulf %197, %226 : vector<32x128xf32>
    %228 = vector.extract_strided_slice %224 {offsets = [1, 0], sizes = [1, 128], strides = [1, 1]} : vector<2x128xf32> to vector<1x128xf32>
    %229 = vector.broadcast %228 : vector<1x128xf32> to vector<32x128xf32>
    %230 = arith.addf %227, %229 : vector<32x128xf32>
    %231 = arith.addf %230, %180 : vector<32x128xf32>
    %cst_178 = arith.constant 0.000000e+00 : f32
    %232 = vector.broadcast %cst_178 : f32 to vector<32x128xf32>
    %233 = arith.maximumf %231, %232 : vector<32x128xf32>
    %c0_179 = arith.constant 0 : index
    %c0_180 = arith.constant 0 : index
    %234 = vector.load %arg8[%c0_179, %c0_180] : memref<32x128xf32, #tpu.memory_space<vmem>>, vector<32x128xf32>
    tpu.vector_store %arg8[%c0_179, %c0_180], %233 {strides = array<i32>} : memref<32x128xf32, #tpu.memory_space<vmem>>, vector<32x128xf32>,
    return
  }
}

</mosaic_0001>

<llo_original>
// kernel: conv_block_forward.1
$region0: #{conv_block_forward.1}
  #allocation0 [shape = 'u32[]', space=smem, size = 0x4, offset = 0x4, fixed_abs, tag = 'smem constant byte address 0x4 - core index']
  #allocation1 [shape = 'u32[144,128]{1,0:T(1,128)}', space=vmem, size = 0x12000, scoped, tag = 'internal scratch']
  #allocation2 [shape = 'f32[2,18,256]{2,1,0:T(8,128)}', space=vmem, size = 0xc000, scoped, tag = 'scratch operand']
  #allocation3 [shape = 'bf16[32,768]{1,0:T(16,128)(2,1)}', space=vmem, size = 0xc000, scoped, tag = 'scratch operand']
  #allocation4 [shape = 'f32[32,128]{1,0:T(8,128)}', space=vmem, size = 0x4000, scoped, tag = 'scratch operand']
  #allocation5 [shape = 'f32[32,128]{1,0:T(8,128)}', space=vmem, size = 0x4000, scoped, tag = 'scratch operand']
  %s0 = inlined_call_operand.vmem [shape: f32[32,64], index: 0, kind: input, shape index: {}]
  %s1 = inlined_call_operand.vmem [shape: f32[32,128], index: 1, kind: input, shape index: {}]
  %s2 = inlined_call_operand.vmem [shape: bf16[384,128], index: 2, kind: input, shape index: {}]
  %s3 = inlined_call_operand.vmem [shape: bf16[3,768,128], index: 3, kind: input, shape index: {}]
  %s4 = inlined_call_operand.vmem [shape: f32[4,8], index: 4, kind: input, shape index: {}]
  %s5 = inlined_call_operand.vmem [shape: f32[4,8], index: 5, kind: input, shape index: {}]
  %s6 = inlined_call_operand.vmem [shape: f32[128,8], index: 6, kind: input, shape index: {}]
  %s7 = inlined_call_operand.vmem [shape: f32[8,128], index: 7, kind: input, shape index: {}]
  %s8 = inlined_call_operand.vmem [shape: f32[32,128], index: 8, kind: output, shape index: {}]
  %s9 = sld [smem:[#allocation0]]
  $region42: #{conv_block_forward.1} parent=0
    _
  %s11 = ssub.s32 1, %s9
  %s12 = scalar_select 0, %s11, %s9
  // Predicated region
  $region2: #{conv_block_forward.1} parent=0 // pred_check
    _
  $region3: #{conv_block_forward.1} parent=0 // pred_check_branch
    %14 = sbr.rel (0) target = $region5
  $region4: #{conv_block_forward.1} parent=0 // pred_region
    _
  $region5: #{conv_block_forward.1} parent=0 // pred_fallthru
    _
  // Predicated region
  $region6: #{conv_block_forward.1} parent=0 // pred_check
    _
  $region7: #{conv_block_forward.1} parent=0 // pred_check_branch
    %16 = sbr.rel (0) target = $region9
  $region8: #{conv_block_forward.1} parent=0 // pred_region
    _
  $region9: #{conv_block_forward.1} parent=0 // pred_fallthru
    _
  // Predicated region
  $region10: #{conv_block_forward.1} parent=0 // pred_check
    _
  $region11: #{conv_block_forward.1} parent=0 // pred_check_branch
    %18 = sbr.rel (0) target = $region13
  $region12: #{conv_block_forward.1} parent=0 // pred_region
    _
  $region13: #{conv_block_forward.1} parent=0 // pred_fallthru
    _
  // Predicated region
  $region14: #{conv_block_forward.1} parent=0 // pred_check
    _
  $region15: #{conv_block_forward.1} parent=0 // pred_check_branch
    %20 = sbr.rel (0) target = $region17
  $region16: #{conv_block_forward.1} parent=0 // pred_region
    _
  $region17: #{conv_block_forward.1} parent=0 // pred_fallthru
    _
  // Predicated region
  $region18: #{conv_block_forward.1} parent=0 // pred_check
    _
  $region19: #{conv_block_forward.1} parent=0 // pred_check_branch
    %22 = sbr.rel (0) target = $region21
  $region20: #{conv_block_forward.1} parent=0 // pred_region
    _
  $region21: #{conv_block_forward.1} parent=0 // pred_fallthru
    _
  // Predicated region
  $region22: #{conv_block_forward.1} parent=0 // pred_check
    _
  $region23: #{conv_block_forward.1} parent=0 // pred_check_branch
    %24 = sbr.rel (0) target = $region25
  $region24: #{conv_block_forward.1} parent=0 // pred_region
    _
  $region25: #{conv_block_forward.1} parent=0 // pred_fallthru
    _
  // Predicated region
  $region26: #{conv_block_forward.1} parent=0 // pred_check
    _
  $region27: #{conv_block_forward.1} parent=0 // pred_check_branch
    %26 = sbr.rel (0) target = $region29
  $region28: #{conv_block_forward.1} parent=0 // pred_region
    _
  $region29: #{conv_block_forward.1} parent=0 // pred_fallthru
    _
  // Predicated region
  $region30: #{conv_block_forward.1} parent=0 // pred_check
    _
  $region31: #{conv_block_forward.1} parent=0 // pred_check_branch
    %28 = sbr.rel (0) target = $region33
  $region32: #{conv_block_forward.1} parent=0 // pred_region
    _
  $region33: #{conv_block_forward.1} parent=0 // pred_fallthru
    _
  %v30 = vld [vmem:[%s2] sm:$0xf]
  %v31 = vld [vmem:[%s2 + $0x4] sm:$0xf]
  %v32 = vld [vmem:[%s2 + $0x8] sm:$0xf]
  %v33 = vld [vmem:[%s2 + $0xc] sm:$0xf]
  %v34 = vld [vmem:[%s2 + $0x10] sm:$0xf]
  %v35 = vld [vmem:[%s2 + $0x14] sm:$0xf]
  %v36 = vld [vmem:[%s2 + $0x18] sm:$0xf]
  %v37 = vld [vmem:[%s2 + $0x1c] sm:$0xf]
  %v38 = vld [vmem:[%s2 + $0x20] sm:$0xf]
  %v39 = vld [vmem:[%s2 + $0x24] sm:$0xf]
  %v40 = vld [vmem:[%s2 + $0x28] sm:$0xf]
  %v41 = vld [vmem:[%s2 + $0x2c] sm:$0xf]
  %v42 = vld [vmem:[%s2 + $0x30] sm:$0xf]
  %v43 = vld [vmem:[%s2 + $0x34] sm:$0xf]
  %v44 = vld [vmem:[%s2 + $0x38] sm:$0xf]
  %v45 = vld [vmem:[%s2 + $0x3c] sm:$0xf]
  %v46 = vld [vmem:[%s2 + $0x40] sm:$0xf]
  %v47 = vld [vmem:[%s2 + $0x44] sm:$0xf]
  %v48 = vld [vmem:[%s2 + $0x48] sm:$0xf]
  %v49 = vld [vmem:[%s2 + $0x4c] sm:$0xf]
  %v50 = vld [vmem:[%s2 + $0x50] sm:$0xf]
  %v51 = vld [vmem:[%s2 + $0x54] sm:$0xf]
  %v52 = vld [vmem:[%s2 + $0x58] sm:$0xf]
  %v53 = vld [vmem:[%s2 + $0x5c] sm:$0xf]
  %v54 = vld [vmem:[%s2 + $0x60] sm:$0xf]
  %v55 = vld [vmem:[%s2 + $0x64] sm:$0xf]
  %v56 = vld [vmem:[%s2 + $0x68] sm:$0xf]
  %v57 = vld [vmem:[%s2 + $0x6c] sm:$0xf]
  %v58 = vld [vmem:[%s2 + $0x70] sm:$0xf]
  %v59 = vld [vmem:[%s2 + $0x74] sm:$0xf]
  %v60 = vld [vmem:[%s2 + $0x78] sm:$0xf]
  %v61 = vld [vmem:[%s2 + $0x7c] sm:$0xf]
  %v62 = vld [vmem:[%s2 + $0x80] sm:$0xf]
  %v63 = vld [vmem:[%s2 + $0x84] sm:$0xf]
  %v64 = vld [vmem:[%s2 + $0x88] sm:$0xf]
  %v65 = vld [vmem:[%s2 + $0x8c] sm:$0xf]
  %v66 = vld [vmem:[%s2 + $0x90] sm:$0xf]
  %v67 = vld [vmem:[%s2 + $0x94] sm:$0xf]
  %v68 = vld [vmem:[%s2 + $0x98] sm:$0xf]
  %v69 = vld [vmem:[%s2 + $0x9c] sm:$0xf]
  %v70 = vld [vmem:[%s2 + $0xa0] sm:$0xf]
  %v71 = vld [vmem:[%s2 + $0xa4] sm:$0xf]
  %v72 = vld [vmem:[%s2 + $0xa8] sm:$0xf]
  %v73 = vld [vmem:[%s2 + $0xac] sm:$0xf]
  %v74 = vld [vmem:[%s2 + $0xb0] sm:$0xf]
  %v75 = vld [vmem:[%s2 + $0xb4] sm:$0xf]
  %v76 = vld [vmem:[%s2 + $0xb8] sm:$0xf]
  %v77 = vld [vmem:[%s2 + $0xbc] sm:$0xf]
  %v78 = vld [vmem:[%s4] sm:$0x1]
  %v79 = vld [vmem:[%s5] sm:$0x1]
  %80 = vst [vmem:[#allocation2] sm:$0xff] 0.0
  %81 = vst [vmem:[#allocation2 + $0x8] sm:$0xff] 0.0
  %82 = vst [vmem:[#allocation2 + $0x10] sm:$0xff] 0.0
  %83 = vst [vmem:[#allocation2 + $0x18] sm:$0xff] 0.0
  %84 = vst [vmem:[#allocation2 + $0x20] sm:$0x3] 0.0
  %85 = vst [vmem:[#allocation2 + $0x28] sm:$0x3] 0.0
  %86 = vst [vmem:[#allocation2 + $0x30] sm:$0xff] 0.0
  %87 = vst [vmem:[#allocation2 + $0x38] sm:$0xff] 0.0
  %88 = vst [vmem:[#allocation2 + $0x40] sm:$0xff] 0.0
  %89 = vst [vmem:[#allocation2 + $0x48] sm:$0xff] 0.0
  %90 = vst [vmem:[#allocation2 + $0x50] sm:$0x3] 0.0
  %91 = vst [vmem:[#allocation2 + $0x58] sm:$0x3] 0.0
  %v92 = vld [vmem:[%s0] sm:$0xff]
  %v93 = vld [vmem:[%s0 + $0x8] sm:$0xff]
  %v94 = vld [vmem:[%s0 + $0x10] sm:$0xff]
  %v95 = vld [vmem:[%s0 + $0x18] sm:$0xff]
  %vm100 = vcmask 1040384
  %v101 = vrot.slane %v92, 7
  %v102 = vrot.slane %v93, 7
  %v103 = vsel %vm100, %v101, %v102
  %v104 = vrot.slane %v94, 7
  %v105 = vrot.slane %v95, 7
  %v106 = vsel %vm100, %v104, %v105
  %107 = vrot.lane.b32.xlu0 %v101, 4
  %v108 = vpop.permute.xlu0 %107
  %109 = vrot.lane.b32.xlu0 %v103, 4
  %v110 = vpop.permute.xlu0 %109
  %111 = vrot.lane.b32.xlu0 %v102, 4
  %v112 = vpop.permute.xlu0 %111
  %113 = vrot.lane.b32.xlu0 %v104, 4
  %v114 = vpop.permute.xlu0 %113
  %115 = vrot.lane.b32.xlu0 %v106, 4
  %v116 = vpop.permute.xlu0 %115
  %117 = vrot.lane.b32.xlu0 %v105, 4
  %v118 = vpop.permute.xlu0 %117
  %vm125 = vcmask 556065
  %126 = vst.msk [vmem:[#allocation2] sm:$0xfe] %vm125, %v108
  %vm127 = vcmask 556064
  %128 = vst.msk [vmem:[#allocation2 + $0x10] sm:$0xff] %vm127, %v110
  %vm129 = vcmask 548896
  %130 = vst.msk [vmem:[#allocation2 + $0x20] sm:$0x1] %vm129, %v112
  %131 = vst.msk [vmem:[#allocation2 + $0x30] sm:$0xfe] %vm125, %v114
  %132 = vst.msk [vmem:[#allocation2 + $0x40] sm:$0xff] %vm127, %v116
  %133 = vst.msk [vmem:[#allocation2 + $0x50] sm:$0x1] %vm129, %v118
  %v134 = vld [vmem:[#allocation2] sm:$0xff]
  %v135 = vld [vmem:[#allocation2 + $0x10] sm:$0xff]
  %v136 = vld [vmem:[#allocation2 + $0x30] sm:$0xff]
  %v137 = vld [vmem:[#allocation2 + $0x40] sm:$0xff]
  %v138 = vpack.c.bf16 %v135, %v134
  %v139 = vpack.c.bf16 %v137, %v136
  %140 = vst [vmem:[#allocation3] sm:$0xff] %v138
  %141 = vst [vmem:[#allocation3 + $0x30] sm:$0xff] %v139
  %v142 = vld [vmem:[#allocation2] sm:$0xfe]
  %v143 = vld [vmem:[#allocation2 + $0x10] sm:$0xff]
  %v144 = vld [vmem:[#allocation2 + $0x20] sm:$0x1]
  %v145 = vld [vmem:[#allocation2 + $0x30] sm:$0xfe]
  %v146 = vld [vmem:[#allocation2 + $0x40] sm:$0xff]
  %v147 = vld [vmem:[#allocation2 + $0x50] sm:$0x1]
  %vm154 = vcmask 1046528
  %v155 = vrot.slane %v142, 1
  %v156 = vrot.slane %v143, 1
  %v157 = vsel %vm154, %v155, %v156
  %v158 = vrot.slane %v144, 1
  %v159 = vsel %vm154, %v156, %v158
  %v160 = vrot.slane %v145, 1
  %v161 = vrot.slane %v146, 1
  %v162 = vsel %vm154, %v160, %v161
  %v163 = vrot.slane %v147, 1
  %v164 = vsel %vm154, %v161, %v163
  %v169 = vpack.c.bf16 %v159, %v157
  %v170 = vpack.c.bf16 %v164, %v162
  %171 = vst [vmem:[#allocation3 + $0x8] sm:$0xff] %v169
  %172 = vst [vmem:[#allocation3 + $0x38] sm:$0xff] %v170
  %v173 = vld [vmem:[#allocation2] sm:$0xfc]
  %v174 = vld [vmem:[#allocation2 + $0x10] sm:$0xff]
  %v175 = vld [vmem:[#allocation2 + $0x20] sm:$0x3]
  %v176 = vld [vmem:[#allocation2 + $0x30] sm:$0xfc]
  %v177 = vld [vmem:[#allocation2 + $0x40] sm:$0xff]
  %v178 = vld [vmem:[#allocation2 + $0x50] sm:$0x3]
  %vm185 = vcmask 1045504
  %v186 = vrot.slane %v173, 2
  %v187 = vrot.slane %v174, 2
  %v188 = vsel %vm185, %v186, %v187
  %v189 = vrot.slane %v175, 2
  %v190 = vsel %vm185, %v187, %v189
  %v191 = vrot.slane %v176, 2
  %v192 = vrot.slane %v177, 2
  %v193 = vsel %vm185, %v191, %v192
  %v194 = vrot.slane %v178, 2
  %v195 = vsel %vm185, %v192, %v194
  %v200 = vpack.c.bf16 %v190, %v188
  %v201 = vpack.c.bf16 %v195, %v193
  %202 = vst [vmem:[#allocation3 + $0x10] sm:$0xff] %v200
  %203 = vst [vmem:[#allocation3 + $0x40] sm:$0xff] %v201
  %v204 = vld [vmem:[#allocation3] sm:$0xff]
  %v205 = vld [vmem:[#allocation3 + $0x8] sm:$0xff]
  %v206 = vld [vmem:[#allocation3 + $0x10] sm:$0xff]
  %v207 = vld [vmem:[#allocation3 + $0x30] sm:$0xff]
  %v208 = vld [vmem:[#allocation3 + $0x38] sm:$0xff]
  %v209 = vld [vmem:[#allocation3 + $0x40] sm:$0xff]
  %v258 = vunpack.c.l.b16 %v30
  %v259 = vunpack.c.l.b16 %v31
  %v260 = vunpack.c.l.b16 %v32
  %v261 = vunpack.c.l.b16 %v33
  %v262 = vunpack.c.l.b16 %v34
  %v263 = vunpack.c.l.b16 %v35
  %v264 = vunpack.c.l.b16 %v36
  %v265 = vunpack.c.l.b16 %v37
  %v266 = vunpack.c.l.b16 %v38
  %v267 = vunpack.c.l.b16 %v39
  %v268 = vunpack.c.l.b16 %v40
  %v269 = vunpack.c.l.b16 %v41
  %v270 = vunpack.c.l.b16 %v42
  %v271 = vunpack.c.l.b16 %v43
  %v272 = vunpack.c.l.b16 %v44
  %v273 = vunpack.c.l.b16 %v45
  %v274 = vunpack.c.l.b16 %v46
  %v275 = vunpack.c.l.b16 %v47
  %v276 = vunpack.c.l.b16 %v48
  %v277 = vunpack.c.l.b16 %v49
  %v278 = vunpack.c.l.b16 %v50
  %v279 = vunpack.c.l.b16 %v51
  %v280 = vunpack.c.l.b16 %v52
  %v281 = vunpack.c.l.b16 %v53
  %v282 = vunpack.c.l.b16 %v54
  %v283 = vunpack.c.l.b16 %v55
  %v284 = vunpack.c.l.b16 %v56
  %v285 = vunpack.c.l.b16 %v57
  %v286 = vunpack.c.l.b16 %v58
  %v287 = vunpack.c.l.b16 %v59
  %v288 = vunpack.c.l.b16 %v60
  %v289 = vunpack.c.l.b16 %v61
  %v290 = vunpack.c.l.b16 %v62
  %v291 = vunpack.c.l.b16 %v63
  %v292 = vunpack.c.l.b16 %v64
  %v293 = vunpack.c.l.b16 %v65
  %v294 = vunpack.c.l.b16 %v66
  %v295 = vunpack.c.l.b16 %v67
  %v296 = vunpack.c.l.b16 %v68
  %v297 = vunpack.c.l.b16 %v69
  %v298 = vunpack.c.l.b16 %v70
  %v299 = vunpack.c.l.b16 %v71
  %v300 = vunpack.c.l.b16 %v72
  %v301 = vunpack.c.l.b16 %v73
  %v302 = vunpack.c.l.b16 %v74
  %v303 = vunpack.c.l.b16 %v75
  %v304 = vunpack.c.l.b16 %v76
  %v305 = vunpack.c.l.b16 %v77
  %v306 = vpack.c.b16 %v259, %v258
  %v307 = vpack.c.b16 %v261, %v260
  %v308 = vpack.c.b16 %v263, %v262
  %v309 = vpack.c.b16 %v265, %v264
  %v310 = vpack.c.b16 %v267, %v266
  %v311 = vpack.c.b16 %v269, %v268
  %v312 = vpack.c.b16 %v271, %v270
  %v313 = vpack.c.b16 %v273, %v272
  %v314 = vpack.c.b16 %v275, %v274
  %v315 = vpack.c.b16 %v277, %v276
  %v316 = vpack.c.b16 %v279, %v278
  %v317 = vpack.c.b16 %v281, %v280
  %v318 = vpack.c.b16 %v283, %v282
  %v319 = vpack.c.b16 %v285, %v284
  %v320 = vpack.c.b16 %v287, %v286
  %v321 = vpack.c.b16 %v289, %v288
  %v322 = vpack.c.b16 %v291, %v290
  %v323 = vpack.c.b16 %v293, %v292
  %v324 = vpack.c.b16 %v295, %v294
  %v325 = vpack.c.b16 %v297, %v296
  %v326 = vpack.c.b16 %v299, %v298
  %v327 = vpack.c.b16 %v301, %v300
  %v328 = vpack.c.b16 %v303, %v302
  %v329 = vpack.c.b16 %v305, %v304
  %354 = vmatprep.subr.bf16.mxu0 0
  %355 = vmatpush1.bf16.msra.mxu0 %v306
  %356 = vmatprep.subr.bf16.mxu0 0
  %357 = vmatpush1.bf16.msra.mxu0 %v307
  %358 = vmatprep.subr.bf16.mxu0 0
  %359 = vmatpush1.bf16.msra.mxu0 %v308
  %360 = vmatprep.subr.bf16.mxu0 0
  %361 = vmatpush1.bf16.msra.mxu0 %v309
  %362 = vmatprep.subr.bf16.mxu0 0
  %363 = vmatpush1.bf16.msra.mxu0 %v310
  %364 = vmatprep.subr.bf16.mxu0 0
  %365 = vmatpush1.bf16.msra.mxu0 %v311
  %366 = vmatprep.subr.bf16.mxu0 0
  %367 = vmatpush1.bf16.msra.mxu0 %v312
  %368 = vmatprep.subr.bf16.mxu0 0
  %369 = vmatpush1.bf16.msra.mxu0 %v313
  %370 = vmatprep.subr.bf16.mxu0 0
  %371 = vmatpush1.bf16.msra.mxu0 %v314
  %372 = vmatprep.subr.bf16.mxu0 0
  %373 = vmatpush1.bf16.msra.mxu0 %v315
  %374 = vmatprep.subr.bf16.mxu0 0
  %375 = vmatpush1.bf16.msra.mxu0 %v316
  %376 = vmatprep.subr.bf16.mxu0 0
  %377 = vmatpush1.bf16.msra.mxu0 %v317
  %378 = vmatprep.subr.bf16.mxu0 0
  %379 = vmatpush1.bf16.msra.mxu0 %v318
  %380 = vmatprep.subr.bf16.mxu0 0
  %381 = vmatpush1.bf16.msra.mxu0 %v319
  %382 = vmatprep.subr.bf16.mxu0 0
  %383 = vmatpush1.bf16.msra.mxu0 %v320
  %384 = vmatprep.subr.bf16.mxu0 0
  %385 = vmatpush1.bf16.msra.mxu0 %v321
  %386 = vmatprep.mubr.bf16.mxu0 %v205
  %387 = vmatmul.mubr.bf16.gmra.mrb[0].mxu0 %v204
  %v388 = vpop.f32.mrb[0].mxu0
  %v389 = vadd.f32 0.0, %v388
  %v390 = vpop.f32.mrb[0].mxu0
  %v391 = vpop.f32.mrb[0].mxu0
  %v392 = vadd.f32 0.0, %v391
  %v393 = vpop.f32.mrb[0].mxu0
  %394 = vmatprep.mubr.bf16.mxu0 %v208
  %395 = vmatmul.mubr.bf16.gmra.mrb[0].mxu0 %v207
  %v396 = vpop.f32.mrb[0].mxu0
  %v397 = vadd.f32 0.0, %v396
  %v398 = vpop.f32.mrb[0].mxu0
  %v399 = vpop.f32.mrb[0].mxu0
  %v400 = vadd.f32 0.0, %v399
  %v401 = vpop.f32.mrb[0].mxu0
  %402 = vdwg.mxu0
  %403 = vmatprep.subr.bf16.mxu0 0
  %404 = vmatpush1.bf16.msra.mxu0 %v322
  %405 = vmatprep.subr.bf16.mxu0 0
  %406 = vmatpush1.bf16.msra.mxu0 %v323
  %407 = vmatprep.subr.bf16.mxu0 0
  %408 = vmatpush1.bf16.msra.mxu0 %v324
  %409 = vmatprep.subr.bf16.mxu0 0
  %410 = vmatpush1.bf16.msra.mxu0 %v325
  %411 = vmatprep.subr.bf16.mxu0 0
  %412 = vmatpush1.bf16.msra.mxu0 %v326
  %413 = vmatprep.subr.bf16.mxu0 0
  %414 = vmatpush1.bf16.msra.mxu0 %v327
  %415 = vmatprep.subr.bf16.mxu0 0
  %416 = vmatpush1.bf16.msra.mxu0 %v328
  %417 = vmatprep.subr.bf16.mxu0 0
  %418 = vmatpush1.bf16.msra.mxu0 %v329
  %419 = vmatprep.subr.bf16.mxu0 0
  %420 = vmatpush1.bf16.msra.mxu0 0
  %421 = vmatprep.subr.bf16.mxu0 0
  %422 = vmatpush1.bf16.msra.mxu0 0
  %423 = vmatprep.subr.bf16.mxu0 0
  %424 = vmatpush1.bf16.msra.mxu0 0
  %425 = vmatprep.subr.bf16.mxu0 0
  %426 = vmatpush1.bf16.msra.mxu0 0
  %427 = vmatprep.subr.bf16.mxu0 0
  %428 = vmatpush1.bf16.msra.mxu0 0
  %429 = vmatprep.subr.bf16.mxu0 0
  %430 = vmatpush1.bf16.msra.mxu0 0
  %431 = vmatprep.subr.bf16.mxu0 0
  %432 = vmatpush1.bf16.msra.mxu0 0
  %433 = vmatprep.subr.bf16.mxu0 0
  %434 = vmatpush1.bf16.msra.mxu0 0
  %435 = vmatprep.mubr.bf16.mxu0 0
  %436 = vmatmul.mubr.bf16.gmra.mrb[0].mxu0 %v206
  %v437 = vpop.f32.mrb[0].mxu0
  %v438 = vadd.f32 %v389, %v437
  %v439 = vpop.f32.mrb[0].mxu0
  %v440 = vpop.f32.mrb[0].mxu0
  %v441 = vadd.f32 %v392, %v440
  %v442 = vpop.f32.mrb[0].mxu0
  %443 = vmatprep.mubr.bf16.mxu0 0
  %444 = vmatmul.mubr.bf16.gmra.mrb[0].mxu0 %v209
  %v445 = vpop.f32.mrb[0].mxu0
  %v446 = vadd.f32 %v397, %v445
  %v447 = vpop.f32.mrb[0].mxu0
  %v448 = vpop.f32.mrb[0].mxu0
  %v449 = vadd.f32 %v400, %v448
  %v450 = vpop.f32.mrb[0].mxu0
  %451 = vdwg.mxu0
  %v452 = vadd.f32 %v438, %v441
  %v453 = vadd.f32 %v452, %v446
  %v454 = vadd.f32 %v453, %v449
  %v455 = vrot.slane %v454, 4
  %v456 = vadd.f32 %v454, %v455
  %v457 = vrot.slane %v456, 2
  %v458 = vadd.f32 %v456, %v457
  %v459 = vrot.slane %v458, 1
  %v460 = vadd.f32 %v458, %v459
  %v461 = vmul.f32 %v438, %v438
  %v462 = vmul.f32 %v441, %v441
  %v463 = vmul.f32 %v446, %v446
  %v464 = vmul.f32 %v449, %v449
  %v465 = vadd.f32 %v461, %v462
  %v466 = vadd.f32 %v465, %v463
  %v467 = vadd.f32 %v466, %v464
  %v468 = vrot.slane %v467, 4
  %v469 = vadd.f32 %v467, %v468
  %v470 = vrot.slane %v469, 2
  %v471 = vadd.f32 %v469, %v470
  %v472 = vrot.slane %v471, 1
  %v473 = vadd.f32 %v471, %v472
  %v474 = vsel %vm100, %v460, %v473
  %v475 = vld [vmem:[%s6] sm:$0xff]
  %v476 = vld [vmem:[%s6 + $0x8] sm:$0xff]
  %v477 = vld [vmem:[%s6 + $0x10] sm:$0xff]
  %v478 = vld [vmem:[%s6 + $0x18] sm:$0xff]
  %v479 = vld [vmem:[%s6 + $0x20] sm:$0xff]
  %v480 = vld [vmem:[%s6 + $0x28] sm:$0xff]
  %v481 = vld [vmem:[%s6 + $0x30] sm:$0xff]
  %v482 = vld [vmem:[%s6 + $0x38] sm:$0xff]
  %v483 = vld [vmem:[%s6 + $0x40] sm:$0xff]
  %v484 = vld [vmem:[%s6 + $0x48] sm:$0xff]
  %v485 = vld [vmem:[%s6 + $0x50] sm:$0xff]
  %v486 = vld [vmem:[%s6 + $0x58] sm:$0xff]
  %v487 = vld [vmem:[%s6 + $0x60] sm:$0xff]
  %v488 = vld [vmem:[%s6 + $0x68] sm:$0xff]
  %v489 = vld [vmem:[%s6 + $0x70] sm:$0xff]
  %v490 = vld [vmem:[%s6 + $0x78] sm:$0xff]
  %491 = vmatprep.subr.mxu0 0.0
  %492 = vmatpush1.msra.mxu0 %v475
  %493 = vmatprep.subr.mxu0 0.0
  %494 = vmatpush1.msra.mxu0 %v476
  %495 = vmatprep.subr.mxu0 0.0
  %496 = vmatpush1.msra.mxu0 %v477
  %497 = vmatprep.subr.mxu0 0.0
  %498 = vmatpush1.msra.mxu0 %v478
  %499 = vmatprep.subr.mxu0 0.0
  %500 = vmatpush1.msra.mxu0 %v479
  %501 = vmatprep.subr.mxu0 0.0
  %502 = vmatpush1.msra.mxu0 %v480
  %503 = vmatprep.subr.mxu0 0.0
  %504 = vmatpush1.msra.mxu0 %v481
  %505 = vmatprep.subr.mxu0 0.0
  %506 = vmatpush1.msra.mxu0 %v482
  %507 = vmatprep.subr.mxu0 0.0
  %508 = vmatpush1.msra.mxu0 %v483
  %509 = vmatprep.subr.mxu0 0.0
  %510 = vmatpush1.msra.mxu0 %v484
  %511 = vmatprep.subr.mxu0 0.0
  %512 = vmatpush1.msra.mxu0 %v485
  %513 = vmatprep.subr.mxu0 0.0
  %514 = vmatpush1.msra.mxu0 %v486
  %515 = vmatprep.subr.mxu0 0.0
  %516 = vmatpush1.msra.mxu0 %v487
  %517 = vmatprep.subr.mxu0 0.0
  %518 = vmatpush1.msra.mxu0 %v488
  %519 = vmatprep.subr.mxu0 0.0
  %520 = vmatpush1.msra.mxu0 %v489
  %521 = vmatprep.subr.mxu0 0.0
  %522 = vmatpush1.msra.mxu0 %v490
  %523 = vmatprep.subr.mxu0 0.0
  %524 = vmatpush1.msra.mxu0 0.0
  %525 = vmatprep.subr.mxu0 0.0
  %526 = vmatpush1.msra.mxu0 0.0
  %527 = vmatprep.subr.mxu0 0.0
  %528 = vmatpush1.msra.mxu0 0.0
  %529 = vmatprep.subr.mxu0 0.0
  %530 = vmatpush1.msra.mxu0 0.0
  %531 = vmatprep.subr.mxu0 0.0
  %532 = vmatpush1.msra.mxu0 0.0
  %533 = vmatprep.subr.mxu0 0.0
  %534 = vmatpush1.msra.mxu0 0.0
  %535 = vmatprep.subr.mxu0 0.0
  %536 = vmatpush1.msra.mxu0 0.0
  %537 = vmatprep.subr.mxu0 0.0
  %538 = vmatpush1.msra.mxu0 0.0
  %539 = vmatprep.subr.mxu0 0.0
  %540 = vmatpush1.msra.mxu0 0.0
  %541 = vmatprep.subr.mxu0 0.0
  %542 = vmatpush1.msra.mxu0 0.0
  %543 = vmatprep.subr.mxu0 0.0
  %544 = vmatpush1.msra.mxu0 0.0
  %545 = vmatprep.subr.mxu0 0.0
  %546 = vmatpush1.msra.mxu0 0.0
  %547 = vmatprep.subr.mxu0 0.0
  %548 = vmatpush1.msra.mxu0 0.0
  %549 = vmatprep.subr.mxu0 0.0
  %550 = vmatpush1.msra.mxu0 0.0
  %551 = vmatprep.subr.mxu0 0.0
  %552 = vmatpush1.msra.mxu0 0.0
  %553 = vmatprep.subr.mxu0 0.0
  %554 = vmatpush1.msra.mxu0 0.0
  %555 = vmatprep.mubr.f32.mxu0 0.0
  %556 = vmatmul.mubr.f32.gmra.mrb[0].mxu0 %v474
  %v557 = vpop.f32.mrb[0].mxu0
  %v558 = vadd.f32 0.0, %v557
  %v559 = vpop.f32.mrb[0].mxu0
  %560 = vdwg.mxu0
  %v561 = vmul.f32 %v558, 0.001953125
  %v562 = vmul.f32 %v561, %v561
  %v564 = vrot.slane %v562, 7
  %v566 = vsub.f32 %v561, %v564
  %v567 = vmax.f32 %v566, 0.0
  %v568 = vadd.f32 %v567, 1e-05
  %v569 = vrsqrt.pop %v568
  %v571 = vrot.slane %v569, 1
  %v573 = vmul.f32 %v78, %v571
  %v574 = vmul.f32 %v561, %v573
  %v575 = vsub.f32 %v79, %v574
  %v577 = vrot.slane %v575, 7
  %v579 = vsel %vm100, %v573, %v577
  %v580 = vld [vmem:[%s7] sm:$0xff]
  %vm581 = vcmask 64512
  %v583 = vsel %vm581, %v579, 0
  %585 = vmatprep.subr.mxu0 0.0
  %586 = vmatpush1.msra.mxu0 %v580
  %587 = vmatprep.subr.mxu0 0.0
  %588 = vmatpush1.msra.mxu0 0.0
  %589 = vmatprep.subr.mxu0 0.0
  %590 = vmatpush1.msra.mxu0 0.0
  %591 = vmatprep.subr.mxu0 0.0
  %592 = vmatpush1.msra.mxu0 0.0
  %593 = vmatprep.subr.mxu0 0.0
  %594 = vmatpush1.msra.mxu0 0.0
  %595 = vmatprep.subr.mxu0 0.0
  %596 = vmatpush1.msra.mxu0 0.0
  %597 = vmatprep.subr.mxu0 0.0
  %598 = vmatpush1.msra.mxu0 0.0
  %599 = vmatprep.subr.mxu0 0.0
  %600 = vmatpush1.msra.mxu0 0.0
  %601 = vmatprep.subr.mxu0 0.0
  %602 = vmatpush1.msra.mxu0 0.0
  %603 = vmatprep.subr.mxu0 0.0
  %604 = vmatpush1.msra.mxu0 0.0
  %605 = vmatprep.subr.mxu0 0.0
  %606 = vmatpush1.msra.mxu0 0.0
  %607 = vmatprep.subr.mxu0 0.0
  %608 = vmatpush1.msra.mxu0 0.0
  %609 = vmatprep.subr.mxu0 0.0
  %610 = vmatpush1.msra.mxu0 0.0
  %611 = vmatprep.subr.mxu0 0.0
  %612 = vmatpush1.msra.mxu0 0.0
  %613 = vmatprep.subr.mxu0 0.0
  %614 = vmatpush1.msra.mxu0 0.0
  %615 = vmatprep.subr.mxu0 0.0
  %616 = vmatpush1.msra.mxu0 0.0
  %617 = vmatprep.subr.mxu0 0.0
  %618 = vmatpush1.msra.mxu0 0.0
  %619 = vmatprep.subr.mxu0 0.0
  %620 = vmatpush1.msra.mxu0 0.0
  %621 = vmatprep.subr.mxu0 0.0
  %622 = vmatpush1.msra.mxu0 0.0
  %623 = vmatprep.subr.mxu0 0.0
  %624 = vmatpush1.msra.mxu0 0.0
  %625 = vmatprep.subr.mxu0 0.0
  %626 = vmatpush1.msra.mxu0 0.0
  %627 = vmatprep.subr.mxu0 0.0
  %628 = vmatpush1.msra.mxu0 0.0
  %629 = vmatprep.subr.mxu0 0.0
  %630 = vmatpush1.msra.mxu0 0.0
  %631 = vmatprep.subr.mxu0 0.0
  %632 = vmatpush1.msra.mxu0 0.0
  %633 = vmatprep.subr.mxu0 0.0
  %634 = vmatpush1.msra.mxu0 0.0
  %635 = vmatprep.subr.mxu0 0.0
  %636 = vmatpush1.msra.mxu0 0.0
  %637 = vmatprep.subr.mxu0 0.0
  %638 = vmatpush1.msra.mxu0 0.0
  %639 = vmatprep.subr.mxu0 0.0
  %640 = vmatpush1.msra.mxu0 0.0
  %641 = vmatprep.subr.mxu0 0.0
  %642 = vmatpush1.msra.mxu0 0.0
  %643 = vmatprep.subr.mxu0 0.0
  %644 = vmatpush1.msra.mxu0 0.0
  %645 = vmatprep.subr.mxu0 0.0
  %646 = vmatpush1.msra.mxu0 0.0
  %647 = vmatprep.subr.mxu0 0.0
  %648 = vmatpush1.msra.mxu0 0.0
  %649 = vmatprep.mubr.f32.mxu0 0.0
  %650 = vmatmul.mubr.f32.gmra.mrb[0].mxu0 %v583
  %v651 = vpop.f32.mrb[0].mxu0
  %v652 = vadd.f32 0.0, %v651
  %v653 = vpop.f32.mrb[0].mxu0
  %654 = vdwg.mxu0
  %v655 = vlaneseq
  %v656 = vshrl.u32 %v655, 7
  %v657 = vsub.s32 0, %v656
  %v658 = vrot.slane %v652, %v657
  %v659 = vmul.f32 %v438, %v658
  %v660 = vmul.f32 %v441, %v658
  %v661 = vmul.f32 %v446, %v658
  %v662 = vmul.f32 %v449, %v658
  %v663 = vlaneseq
  %v664 = vshrl.u32 %v663, 7
  %v665 = vsub.s32 1, %v664
  %v666 = vrot.slane %v652, %v665
  %v667 = vadd.f32 %v659, %v666
  %v668 = vadd.f32 %v660, %v666
  %v669 = vadd.f32 %v661, %v666
  %v670 = vadd.f32 %v662, %v666
  %v671 = vmax.f32 %v667, 0.0
  %v672 = vmax.f32 %v668, 0.0
  %v673 = vmax.f32 %v669, 0.0
  %v674 = vmax.f32 %v670, 0.0
  %675 = vst [vmem:[#allocation4] sm:$0xff] %v671
  %676 = vst [vmem:[#allocation4 + $0x8] sm:$0xff] %v672
  %677 = vst [vmem:[#allocation4 + $0x10] sm:$0xff] %v673
  %678 = vst [vmem:[#allocation4 + $0x18] sm:$0xff] %v674
  %v679 = vld [vmem:[%s3] sm:$0xf]
  %v680 = vld [vmem:[%s3 + $0x4] sm:$0xf]
  %v681 = vld [vmem:[%s3 + $0x8] sm:$0xf]
  %v682 = vld [vmem:[%s3 + $0xc] sm:$0xf]
  %v683 = vld [vmem:[%s3 + $0x10] sm:$0xf]
  %v684 = vld [vmem:[%s3 + $0x14] sm:$0xf]
  %v685 = vld [vmem:[%s3 + $0x18] sm:$0xf]
  %v686 = vld [vmem:[%s3 + $0x1c] sm:$0xf]
  %v687 = vld [vmem:[%s3 + $0x20] sm:$0xf]
  %v688 = vld [vmem:[%s3 + $0x24] sm:$0xf]
  %v689 = vld [vmem:[%s3 + $0x28] sm:$0xf]
  %v690 = vld [vmem:[%s3 + $0x2c] sm:$0xf]
  %v691 = vld [vmem:[%s3 + $0x30] sm:$0xf]
  %v692 = vld [vmem:[%s3 + $0x34] sm:$0xf]
  %v693 = vld [vmem:[%s3 + $0x38] sm:$0xf]
  %v694 = vld [vmem:[%s3 + $0x3c] sm:$0xf]
  %v695 = vld [vmem:[%s3 + $0x40] sm:$0xf]
  %v696 = vld [vmem:[%s3 + $0x44] sm:$0xf]
  %v697 = vld [vmem:[%s3 + $0x48] sm:$0xf]
  %v698 = vld [vmem:[%s3 + $0x4c] sm:$0xf]
  %v699 = vld [vmem:[%s3 + $0x50] sm:$0xf]
  %v700 = vld [vmem:[%s3 + $0x54] sm:$0xf]
  %v701 = vld [vmem:[%s3 + $0x58] sm:$0xf]
  %v702 = vld [vmem:[%s3 + $0x5c] sm:$0xf]
  %v703 = vld [vmem:[%s3 + $0x60] sm:$0xf]
  %v704 = vld [vmem:[%s3 + $0x64] sm:$0xf]
  %v705 = vld [vmem:[%s3 + $0x68] sm:$0xf]
  %v706 = vld [vmem:[%s3 + $0x6c] sm:$0xf]
  %v707 = vld [vmem:[%s3 + $0x70] sm:$0xf]
  %v708 = vld [vmem:[%s3 + $0x74] sm:$0xf]
  %v709 = vld [vmem:[%s3 + $0x78] sm:$0xf]
  %v710 = vld [vmem:[%s3 + $0x7c] sm:$0xf]
  %v711 = vld [vmem:[%s3 + $0x80] sm:$0xf]
  %v712 = vld [vmem:[%s3 + $0x84] sm:$0xf]
  %v713 = vld [vmem:[%s3 + $0x88] sm:$0xf]
  %v714 = vld [vmem:[%s3 + $0x8c] sm:$0xf]
  %v715 = vld [vmem:[%s3 + $0x90] sm:$0xf]
  %v716 = vld [vmem:[%s3 + $0x94] sm:$0xf]
  %v717 = vld [vmem:[%s3 + $0x98] sm:$0xf]
  %v718 = vld [vmem:[%s3 + $0x9c] sm:$0xf]
  %v719 = vld [vmem:[%s3 + $0xa0] sm:$0xf]
  %v720 = vld [vmem:[%s3 + $0xa4] sm:$0xf]
  %v721 = vld [vmem:[%s3 + $0xa8] sm:$0xf]
  %v722 = vld [vmem:[%s3 + $0xac] sm:$0xf]
  %v723 = vld [vmem:[%s3 + $0xb0] sm:$0xf]
  %v724 = vld [vmem:[%s3 + $0xb4] sm:$0xf]
  %v725 = vld [vmem:[%s3 + $0xb8] sm:$0xf]
  %v726 = vld [vmem:[%s3 + $0xbc] sm:$0xf]
  %v727 = vld [vmem:[%s3 + $0xc0] sm:$0xf]
  %v728 = vld [vmem:[%s3 + $0xc4] sm:$0xf]
  %v729 = vld [vmem:[%s3 + $0xc8] sm:$0xf]
  %v730 = vld [vmem:[%s3 + $0xcc] sm:$0xf]
  %v731 = vld [vmem:[%s3 + $0xd0] sm:$0xf]
  %v732 = vld [vmem:[%s3 + $0xd4] sm:$0xf]
  %v733 = vld [vmem:[%s3 + $0xd8] sm:$0xf]
  %v734 = vld [vmem:[%s3 + $0xdc] sm:$0xf]
  %v735 = vld [vmem:[%s3 + $0xe0] sm:$0xf]
  %v736 = vld [vmem:[%s3 + $0xe4] sm:$0xf]
  %v737 = vld [vmem:[%s3 + $0xe8] sm:$0xf]
  %v738 = vld [vmem:[%s3 + $0xec] sm:$0xf]
  %v739 = vld [vmem:[%s3 + $0xf0] sm:$0xf]
  %v740 = vld [vmem:[%s3 + $0xf4] sm:$0xf]
  %v741 = vld [vmem:[%s3 + $0xf8] sm:$0xf]
  %v742 = vld [vmem:[%s3 + $0xfc] sm:$0xf]
  %v743 = vld [vmem:[%s3 + $0x100] sm:$0xf]
  %v744 = vld [vmem:[%s3 + $0x104] sm:$0xf]
  %v745 = vld [vmem:[%s3 + $0x108] sm:$0xf]
  %v746 = vld [vmem:[%s3 + $0x10c] sm:$0xf]
  %v747 = vld [vmem:[%s3 + $0x110] sm:$0xf]
  %v748 = vld [vmem:[%s3 + $0x114] sm:$0xf]
  %v749 = vld [vmem:[%s3 + $0x118] sm:$0xf]
  %v750 = vld [vmem:[%s3 + $0x11c] sm:$0xf]
  %v751 = vld [vmem:[%s3 + $0x120] sm:$0xf]
  %v752 = vld [vmem:[%s3 + $0x124] sm:$0xf]
  %v753 = vld [vmem:[%s3 + $0x128] sm:$0xf]
  %v754 = vld [vmem:[%s3 + $0x12c] sm:$0xf]
  %v755 = vld [vmem:[%s3 + $0x130] sm:$0xf]
  %v756 = vld [vmem:[%s3 + $0x134] sm:$0xf]
  %v757 = vld [vmem:[%s3 + $0x138] sm:$0xf]
  %v758 = vld [vmem:[%s3 + $0x13c] sm:$0xf]
  %v759 = vld [vmem:[%s3 + $0x140] sm:$0xf]
  %v760 = vld [vmem:[%s3 + $0x144] sm:$0xf]
  %v761 = vld [vmem:[%s3 + $0x148] sm:$0xf]
  %v762 = vld [vmem:[%s3 + $0x14c] sm:$0xf]
  %v763 = vld [vmem:[%s3 + $0x150] sm:$0xf]
  %v764 = vld [vmem:[%s3 + $0x154] sm:$0xf]
  %v765 = vld [vmem:[%s3 + $0x158] sm:$0xf]
  %v766 = vld [vmem:[%s3 + $0x15c] sm:$0xf]
  %v767 = vld [vmem:[%s3 + $0x160] sm:$0xf]
  %v768 = vld [vmem:[%s3 + $0x164] sm:$0xf]
  %v769 = vld [vmem:[%s3 + $0x168] sm:$0xf]
  %v770 = vld [vmem:[%s3 + $0x16c] sm:$0xf]
  %v771 = vld [vmem:[%s3 + $0x170] sm:$0xf]
  %v772 = vld [vmem:[%s3 + $0x174] sm:$0xf]
  %v773 = vld [vmem:[%s3 + $0x178] sm:$0xf]
  %v774 = vld [vmem:[%s3 + $0x17c] sm:$0xf]
  %v775 = vld [vmem:[%s4 + $0x1] sm:$0x1]
  %v776 = vld [vmem:[%s5 + $0x1] sm:$0x1]
  %v777 = vld [vmem:[%s1] sm:$0xff]
  %v778 = vld [vmem:[%s1 + $0x8] sm:$0xff]
  %v779 = vld [vmem:[%s1 + $0x10] sm:$0xff]
  %v780 = vld [vmem:[%s1 + $0x18] sm:$0xff]
  %781 = vst [vmem:[#allocation2] sm:$0xff] 0.0
  %782 = vst [vmem:[#allocation2 + $0x8] sm:$0xff] 0.0
  %783 = vst [vmem:[#allocation2 + $0x10] sm:$0xff] 0.0
  %784 = vst [vmem:[#allocation2 + $0x18] sm:$0xff] 0.0
  %785 = vst [vmem:[#allocation2 + $0x20] sm:$0x3] 0.0
  %786 = vst [vmem:[#allocation2 + $0x28] sm:$0x3] 0.0
  %787 = vst [vmem:[#allocation2 + $0x30] sm:$0xff] 0.0
  %788 = vst [vmem:[#allocation2 + $0x38] sm:$0xff] 0.0
  %789 = vst [vmem:[#allocation2 + $0x40] sm:$0xff] 0.0
  %790 = vst [vmem:[#allocation2 + $0x48] sm:$0xff] 0.0
  %791 = vst [vmem:[#allocation2 + $0x50] sm:$0x3] 0.0
  %792 = vst [vmem:[#allocation2 + $0x58] sm:$0x3] 0.0
  %v793 = vld [vmem:[#allocation4] sm:$0xff]
  %v794 = vld [vmem:[#allocation4 + $0x8] sm:$0xff]
  %v795 = vld [vmem:[#allocation4 + $0x10] sm:$0xff]
  %v796 = vld [vmem:[#allocation4 + $0x18] sm:$0xff]
  %v801 = vrot.slane %v793, 7
  %v802 = vrot.slane %v794, 7
  %v803 = vsel %vm100, %v801, %v802
  %v804 = vrot.slane %v795, 7
  %v805 = vrot.slane %v796, 7
  %v806 = vsel %vm100, %v804, %v805
  %807 = vrot.lane.b32.xlu0 %v801, 8
  %v808 = vpop.permute.xlu0 %807
  %809 = vrot.lane.b32.xlu0 %v803, 8
  %v810 = vpop.permute.xlu0 %809
  %811 = vrot.lane.b32.xlu0 %v802, 8
  %v812 = vpop.permute.xlu0 %811
  %813 = vrot.lane.b32.xlu0 %v804, 8
  %v814 = vpop.permute.xlu0 %813
  %815 = vrot.lane.b32.xlu0 %v806, 8
  %v816 = vpop.permute.xlu0 %815
  %817 = vrot.lane.b32.xlu0 %v805, 8
  %v818 = vpop.permute.xlu0 %817
  %vm825 = vcmask 1047617
  %826 = vst.msk [vmem:[#allocation2] sm:$0xfe] %vm825, %v808
  %vm827 = vcmask 64513
  %828 = vst.msk [vmem:[#allocation2 + $0x8] sm:$0xfe] %vm827, %v808
  %vm829 = vcmask 1047616
  %830 = vst.msk [vmem:[#allocation2 + $0x10] sm:$0xff] %vm829, %v810
  %831 = vst.msk [vmem:[#allocation2 + $0x18] sm:$0xff] %vm581, %v810
  %vm832 = vcmask 1040448
  %833 = vst.msk [vmem:[#allocation2 + $0x20] sm:$0x1] %vm832, %v812
  %vm834 = vcmask 57344
  %835 = vst.msk [vmem:[#allocation2 + $0x28] sm:$0x1] %vm834, %v812
  %836 = vst.msk [vmem:[#allocation2 + $0x30] sm:$0xfe] %vm825, %v814
  %837 = vst.msk [vmem:[#allocation2 + $0x38] sm:$0xfe] %vm827, %v814
  %838 = vst.msk [vmem:[#allocation2 + $0x40] sm:$0xff] %vm829, %v816
  %839 = vst.msk [vmem:[#allocation2 + $0x48] sm:$0xff] %vm581, %v816
  %840 = vst.msk [vmem:[#allocation2 + $0x50] sm:$0x1] %vm832, %v818
  %841 = vst.msk [vmem:[#allocation2 + $0x58] sm:$0x1] %vm834, %v818
  %v842 = vld [vmem:[#allocation2] sm:$0xff]
  %v843 = vld [vmem:[#allocation2 + $0x8] sm:$0xff]
  %v844 = vld [vmem:[#allocation2 + $0x10] sm:$0xff]
  %v845 = vld [vmem:[#allocation2 + $0x18] sm:$0xff]
  %v846 = vld [vmem:[#allocation2 + $0x30] sm:$0xff]
  %v847 = vld [vmem:[#allocation2 + $0x38] sm:$0xff]
  %v848 = vld [vmem:[#allocation2 + $0x40] sm:$0xff]
  %v849 = vld [vmem:[#allocation2 + $0x48] sm:$0xff]
  %v850 = vpack.c.bf16 %v844, %v842
  %v851 = vpack.c.bf16 %v845, %v843
  %v852 = vpack.c.bf16 %v848, %v846
  %v853 = vpack.c.bf16 %v849, %v847
  %854 = vst [vmem:[#allocation3] sm:$0xff] %v850
  %855 = vst [vmem:[#allocation3 + $0x8] sm:$0xff] %v851
  %856 = vst [vmem:[#allocation3 + $0x30] sm:$0xff] %v852
  %857 = vst [vmem:[#allocation3 + $0x38] sm:$0xff] %v853
  %v858 = vld [vmem:[#allocation2] sm:$0xfe]
  %v859 = vld [vmem:[#allocation2 + $0x8] sm:$0xfe]
  %v860 = vld [vmem:[#allocation2 + $0x10] sm:$0xff]
  %v861 = vld [vmem:[#allocation2 + $0x18] sm:$0xff]
  %v862 = vld [vmem:[#allocation2 + $0x20] sm:$0x1]
  %v863 = vld [vmem:[#allocation2 + $0x28] sm:$0x1]
  %v864 = vld [vmem:[#allocation2 + $0x30] sm:$0xfe]
  %v865 = vld [vmem:[#allocation2 + $0x38] sm:$0xfe]
  %v866 = vld [vmem:[#allocation2 + $0x40] sm:$0xff]
  %v867 = vld [vmem:[#allocation2 + $0x48] sm:$0xff]
  %v868 = vld [vmem:[#allocation2 + $0x50] sm:$0x1]
  %v869 = vld [vmem:[#allocation2 + $0x58] sm:$0x1]
  %v882 = vrot.slane %v858, 1
  %v883 = vrot.slane %v860, 1
  %v884 = vsel %vm154, %v882, %v883
  %v885 = vrot.slane %v859, 1
  %v886 = vrot.slane %v861, 1
  %v887 = vsel %vm154, %v885, %v886
  %v888 = vrot.slane %v862, 1
  %v889 = vsel %vm154, %v883, %v888
  %v890 = vrot.slane %v863, 1
  %v891 = vsel %vm154, %v886, %v890
  %v892 = vrot.slane %v864, 1
  %v893 = vrot.slane %v866, 1
  %v894 = vsel %vm154, %v892, %v893
  %v895 = vrot.slane %v865, 1
  %v896 = vrot.slane %v867, 1
  %v897 = vsel %vm154, %v895, %v896
  %v898 = vrot.slane %v868, 1
  %v899 = vsel %vm154, %v893, %v898
  %v900 = vrot.slane %v869, 1
  %v901 = vsel %vm154, %v896, %v900
  %v910 = vpack.c.bf16 %v889, %v884
  %v911 = vpack.c.bf16 %v891, %v887
  %v912 = vpack.c.bf16 %v899, %v894
  %v913 = vpack.c.bf16 %v901, %v897
  %914 = vst [vmem:[#allocation3 + $0x10] sm:$0xff] %v910
  %915 = vst [vmem:[#allocation3 + $0x18] sm:$0xff] %v911
  %916 = vst [vmem:[#allocation3 + $0x40] sm:$0xff] %v912
  %917 = vst [vmem:[#allocation3 + $0x48] sm:$0xff] %v913
  %v918 = vld [vmem:[#allocation2] sm:$0xfc]
  %v919 = vld [vmem:[#allocation2 + $0x8] sm:$0xfc]
  %v920 = vld [vmem:[#allocation2 + $0x10] sm:$0xff]
  %v921 = vld [vmem:[#allocation2 + $0x18] sm:$0xff]
  %v922 = vld [vmem:[#allocation2 + $0x20] sm:$0x3]
  %v923 = vld [vmem:[#allocation2 + $0x28] sm:$0x3]
  %v924 = vld [vmem:[#allocation2 + $0x30] sm:$0xfc]
  %v925 = vld [vmem:[#allocation2 + $0x38] sm:$0xfc]
  %v926 = vld [vmem:[#allocation2 + $0x40] sm:$0xff]
  %v927 = vld [vmem:[#allocation2 + $0x48] sm:$0xff]
  %v928 = vld [vmem:[#allocation2 + $0x50] sm:$0x3]
  %v929 = vld [vmem:[#allocation2 + $0x58] sm:$0x3]
  %v942 = vrot.slane %v918, 2
  %v943 = vrot.slane %v920, 2
  %v944 = vsel %vm185, %v942, %v943
  %v945 = vrot.slane %v919, 2
  %v946 = vrot.slane %v921, 2
  %v947 = vsel %vm185, %v945, %v946
  %v948 = vrot.slane %v922, 2
  %v949 = vsel %vm185, %v943, %v948
  %v950 = vrot.slane %v923, 2
  %v951 = vsel %vm185, %v946, %v950
  %v952 = vrot.slane %v924, 2
  %v953 = vrot.slane %v926, 2
  %v954 = vsel %vm185, %v952, %v953
  %v955 = vrot.slane %v925, 2
  %v956 = vrot.slane %v927, 2
  %v957 = vsel %vm185, %v955, %v956
  %v958 = vrot.slane %v928, 2
  %v959 = vsel %vm185, %v953, %v958
  %v960 = vrot.slane %v929, 2
  %v961 = vsel %vm185, %v956, %v960
  %v970 = vpack.c.bf16 %v949, %v944
  %v971 = vpack.c.bf16 %v951, %v947
  %v972 = vpack.c.bf16 %v959, %v954
  %v973 = vpack.c.bf16 %v961, %v957
  %974 = vst [vmem:[#allocation3 + $0x20] sm:$0xff] %v970
  %975 = vst [vmem:[#allocation3 + $0x28] sm:$0xff] %v971
  %976 = vst [vmem:[#allocation3 + $0x50] sm:$0xff] %v972
  %977 = vst [vmem:[#allocation3 + $0x58] sm:$0xff] %v973
  %v978 = vld [vmem:[#allocation3] sm:$0xff]
  %v979 = vld [vmem:[#allocation3 + $0x8] sm:$0xff]
  %v980 = vld [vmem:[#allocation3 + $0x10] sm:$0xff]
  %v981 = vld [vmem:[#allocation3 + $0x18] sm:$0xff]
  %v982 = vld [vmem:[#allocation3 + $0x20] sm:$0xff]
  %v983 = vld [vmem:[#allocation3 + $0x28] sm:$0xff]
  %v984 = vld [vmem:[#allocation3 + $0x30] sm:$0xff]
  %v985 = vld [vmem:[#allocation3 + $0x38] sm:$0xff]
  %v986 = vld [vmem:[#allocation3 + $0x40] sm:$0xff]
  %v987 = vld [vmem:[#allocation3 + $0x48] sm:$0xff]
  %v988 = vld [vmem:[#allocation3 + $0x50] sm:$0xff]
  %v989 = vld [vmem:[#allocation3 + $0x58] sm:$0xff]
  %v1086 = vunpack.c.l.b16 %v679
  %v1087 = vunpack.c.l.b16 %v680
  %v1088 = vunpack.c.l.b16 %v681
  %v1089 = vunpack.c.l.b16 %v682
  %v1090 = vunpack.c.l.b16 %v683
  %v1091 = vunpack.c.l.b16 %v684
  %v1092 = vunpack.c.l.b16 %v685
  %v1093 = vunpack.c.l.b16 %v686
  %v1094 = vunpack.c.l.b16 %v687
  %v1095 = vunpack.c.l.b16 %v688
  %v1096 = vunpack.c.l.b16 %v689
  %v1097 = vunpack.c.l.b16 %v690
  %v1098 = vunpack.c.l.b16 %v691
  %v1099 = vunpack.c.l.b16 %v692
  %v1100 = vunpack.c.l.b16 %v693
  %v1101 = vunpack.c.l.b16 %v694
  %v1102 = vunpack.c.l.b16 %v695
  %v1103 = vunpack.c.l.b16 %v696
  %v1104 = vunpack.c.l.b16 %v697
  %v1105 = vunpack.c.l.b16 %v698
  %v1106 = vunpack.c.l.b16 %v699
  %v1107 = vunpack.c.l.b16 %v700
  %v1108 = vunpack.c.l.b16 %v701
  %v1109 = vunpack.c.l.b16 %v702
  %v1110 = vunpack.c.l.b16 %v703
  %v1111 = vunpack.c.l.b16 %v704
  %v1112 = vunpack.c.l.b16 %v705
  %v1113 = vunpack.c.l.b16 %v706
  %v1114 = vunpack.c.l.b16 %v707
  %v1115 = vunpack.c.l.b16 %v708
  %v1116 = vunpack.c.l.b16 %v709
  %v1117 = vunpack.c.l.b16 %v710
  %v1118 = vunpack.c.l.b16 %v711
  %v1119 = vunpack.c.l.b16 %v712
  %v1120 = vunpack.c.l.b16 %v713
  %v1121 = vunpack.c.l.b16 %v714
  %v1122 = vunpack.c.l.b16 %v715
  %v1123 = vunpack.c.l.b16 %v716
  %v1124 = vunpack.c.l.b16 %v717
  %v1125 = vunpack.c.l.b16 %v718
  %v1126 = vunpack.c.l.b16 %v719
  %v1127 = vunpack.c.l.b16 %v720
  %v1128 = vunpack.c.l.b16 %v721
  %v1129 = vunpack.c.l.b16 %v722
  %v1130 = vunpack.c.l.b16 %v723
  %v1131 = vunpack.c.l.b16 %v724
  %v1132 = vunpack.c.l.b16 %v725
  %v1133 = vunpack.c.l.b16 %v726
  %v1134 = vunpack.c.l.b16 %v727
  %v1135 = vunpack.c.l.b16 %v728
  %v1136 = vunpack.c.l.b16 %v729
  %v1137 = vunpack.c.l.b16 %v730
  %v1138 = vunpack.c.l.b16 %v731
  %v1139 = vunpack.c.l.b16 %v732
  %v1140 = vunpack.c.l.b16 %v733
  %v1141 = vunpack.c.l.b16 %v734
  %v1142 = vunpack.c.l.b16 %v735
  %v1143 = vunpack.c.l.b16 %v736
  %v1144 = vunpack.c.l.b16 %v737
  %v1145 = vunpack.c.l.b16 %v738
  %v1146 = vunpack.c.l.b16 %v739
  %v1147 = vunpack.c.l.b16 %v740
  %v1148 = vunpack.c.l.b16 %v741
  %v1149 = vunpack.c.l.b16 %v742
  %v1150 = vunpack.c.l.b16 %v743
  %v1151 = vunpack.c.l.b16 %v744
  %v1152 = vunpack.c.l.b16 %v745
  %v1153 = vunpack.c.l.b16 %v746
  %v1154 = vunpack.c.l.b16 %v747
  %v1155 = vunpack.c.l.b16 %v748
  %v1156 = vunpack.c.l.b16 %v749
  %v1157 = vunpack.c.l.b16 %v750
  %v1158 = vunpack.c.l.b16 %v751
  %v1159 = vunpack.c.l.b16 %v752
  %v1160 = vunpack.c.l.b16 %v753
  %v1161 = vunpack.c.l.b16 %v754
  %v1162 = vunpack.c.l.b16 %v755
  %v1163 = vunpack.c.l.b16 %v756
  %v1164 = vunpack.c.l.b16 %v757
  %v1165 = vunpack.c.l.b16 %v758
  %v1166 = vunpack.c.l.b16 %v759
  %v1167 = vunpack.c.l.b16 %v760
  %v1168 = vunpack.c.l.b16 %v761
  %v1169 = vunpack.c.l.b16 %v762
  %v1170 = vunpack.c.l.b16 %v763
  %v1171 = vunpack.c.l.b16 %v764
  %v1172 = vunpack.c.l.b16 %v765
  %v1173 = vunpack.c.l.b16 %v766
  %v1174 = vunpack.c.l.b16 %v767
  %v1175 = vunpack.c.l.b16 %v768
  %v1176 = vunpack.c.l.b16 %v769
  %v1177 = vunpack.c.l.b16 %v770
  %v1178 = vunpack.c.l.b16 %v771
  %v1179 = vunpack.c.l.b16 %v772
  %v1180 = vunpack.c.l.b16 %v773
  %v1181 = vunpack.c.l.b16 %v774
  %v1182 = vpack.c.b16 %v1087, %v1086
  %v1183 = vpack.c.b16 %v1089, %v1088
  %v1184 = vpack.c.b16 %v1091, %v1090
  %v1185 = vpack.c.b16 %v1093, %v1092
  %v1186 = vpack.c.b16 %v1095, %v1094
  %v1187 = vpack.c.b16 %v1097, %v1096
  %v1188 = vpack.c.b16 %v1099, %v1098
  %v1189 = vpack.c.b16 %v1101, %v1100
  %v1190 = vpack.c.b16 %v1103, %v1102
  %v1191 = vpack.c.b16 %v1105, %v1104
  %v1192 = vpack.c.b16 %v1107, %v1106
  %v1193 = vpack.c.b16 %v1109, %v1108
  %v1194 = vpack.c.b16 %v1111, %v1110
  %v1195 = vpack.c.b16 %v1113, %v1112
  %v1196 = vpack.c.b16 %v1115, %v1114
  %v1197 = vpack.c.b16 %v1117, %v1116
  %v1198 = vpack.c.b16 %v1119, %v1118
  %v1199 = vpack.c.b16 %v1121, %v1120
  %v1200 = vpack.c.b16 %v1123, %v1122
  %v1201 = vpack.c.b16 %v1125, %v1124
  %v1202 = vpack.c.b16 %v1127, %v1126
  %v1203 = vpack.c.b16 %v1129, %v1128
  %v1204 = vpack.c.b16 %v1131, %v1130
  %v1205 = vpack.c.b16 %v1133, %v1132
  %v1206 = vpack.c.b16 %v1135, %v1134
  %v1207 = vpack.c.b16 %v1137, %v1136
  %v1208 = vpack.c.b16 %v1139, %v1138
  %v1209 = vpack.c.b16 %v1141, %v1140
  %v1210 = vpack.c.b16 %v1143, %v1142
  %v1211 = vpack.c.b16 %v1145, %v1144
  %v1212 = vpack.c.b16 %v1147, %v1146
  %v1213 = vpack.c.b16 %v1149, %v1148
  %v1214 = vpack.c.b16 %v1151, %v1150
  %v1215 = vpack.c.b16 %v1153, %v1152
  %v1216 = vpack.c.b16 %v1155, %v1154
  %v1217 = vpack.c.b16 %v1157, %v1156
  %v1218 = vpack.c.b16 %v1159, %v1158
  %v1219 = vpack.c.b16 %v1161, %v1160
  %v1220 = vpack.c.b16 %v1163, %v1162
  %v1221 = vpack.c.b16 %v1165, %v1164
  %v1222 = vpack.c.b16 %v1167, %v1166
  %v1223 = vpack.c.b16 %v1169, %v1168
  %v1224 = vpack.c.b16 %v1171, %v1170
  %v1225 = vpack.c.b16 %v1173, %v1172
  %v1226 = vpack.c.b16 %v1175, %v1174
  %v1227 = vpack.c.b16 %v1177, %v1176
  %v1228 = vpack.c.b16 %v1179, %v1178
  %v1229 = vpack.c.b16 %v1181, %v1180
  %1278 = vmatprep.subr.bf16.mxu0 0
  %1279 = vmatpush1.bf16.msra.mxu0 %v1182
  %1280 = vmatprep.subr.bf16.mxu0 0
  %1281 = vmatpush1.bf16.msra.mxu0 %v1183
  %1282 = vmatprep.subr.bf16.mxu0 0
  %1283 = vmatpush1.bf16.msra.mxu0 %v1184
  %1284 = vmatprep.subr.bf16.mxu0 0
  %1285 = vmatpush1.bf16.msra.mxu0 %v1185
  %1286 = vmatprep.subr.bf16.mxu0 0
  %1287 = vmatpush1.bf16.msra.mxu0 %v1186
  %1288 = vmatprep.subr.bf16.mxu0 0
  %1289 = vmatpush1.bf16.msra.mxu0 %v1187
  %1290 = vmatprep.subr.bf16.mxu0 0
  %1291 = vmatpush1.bf16.msra.mxu0 %v1188
  %1292 = vmatprep.subr.bf16.mxu0 0
  %1293 = vmatpush1.bf16.msra.mxu0 %v1189
  %1294 = vmatprep.subr.bf16.mxu0 0
  %1295 = vmatpush1.bf16.msra.mxu0 %v1190
  %1296 = vmatprep.subr.bf16.mxu0 0
  %1297 = vmatpush1.bf16.msra.mxu0 %v1191
  %1298 = vmatprep.subr.bf16.mxu0 0
  %1299 = vmatpush1.bf16.msra.mxu0 %v1192
  %1300 = vmatprep.subr.bf16.mxu0 0
  %1301 = vmatpush1.bf16.msra.mxu0 %v1193
  %1302 = vmatprep.subr.bf16.mxu0 0
  %1303 = vmatpush1.bf16.msra.mxu0 %v1194
  %1304 = vmatprep.subr.bf16.mxu0 0
  %1305 = vmatpush1.bf16.msra.mxu0 %v1195
  %1306 = vmatprep.subr.bf16.mxu0 0
  %1307 = vmatpush1.bf16.msra.mxu0 %v1196
  %1308 = vmatprep.subr.bf16.mxu0 0
  %1309 = vmatpush1.bf16.msra.mxu0 %v1197
  %1310 = vmatprep.mubr.bf16.mxu0 %v979
  %1311 = vmatmul.mubr.bf16.gmra.mrb[0].mxu0 %v978
  %v1312 = vpop.f32.mrb[0].mxu0
  %v1313 = vadd.f32 0.0, %v1312
  %v1314 = vpop.f32.mrb[0].mxu0
  %v1315 = vpop.f32.mrb[0].mxu0
  %v1316 = vadd.f32 0.0, %v1315
  %v1317 = vpop.f32.mrb[0].mxu0
  %1318 = vmatprep.mubr.bf16.mxu0 %v985
  %1319 = vmatmul.mubr.bf16.gmra.mrb[0].mxu0 %v984
  %v1320 = vpop.f32.mrb[0].mxu0
  %v1321 = vadd.f32 0.0, %v1320
  %v1322 = vpop.f32.mrb[0].mxu0
  %v1323 = vpop.f32.mrb[0].mxu0
  %v1324 = vadd.f32 0.0, %v1323
  %v1325 = vpop.f32.mrb[0].mxu0
  %1326 = vdwg.mxu0
  %1327 = vmatprep.subr.bf16.mxu0 0
  %1328 = vmatpush1.bf16.msra.mxu0 %v1198
  %1329 = vmatprep.subr.bf16.mxu0 0
  %1330 = vmatpush1.bf16.msra.mxu0 %v1199
  %1331 = vmatprep.subr.bf16.mxu0 0
  %1332 = vmatpush1.bf16.msra.mxu0 %v1200
  %1333 = vmatprep.subr.bf16.mxu0 0
  %1334 = vmatpush1.bf16.msra.mxu0 %v1201
  %1335 = vmatprep.subr.bf16.mxu0 0
  %1336 = vmatpush1.bf16.msra.mxu0 %v1202
  %1337 = vmatprep.subr.bf16.mxu0 0
  %1338 = vmatpush1.bf16.msra.mxu0 %v1203
  %1339 = vmatprep.subr.bf16.mxu0 0
  %1340 = vmatpush1.bf16.msra.mxu0 %v1204
  %1341 = vmatprep.subr.bf16.mxu0 0
  %1342 = vmatpush1.bf16.msra.mxu0 %v1205
  %1343 = vmatprep.subr.bf16.mxu0 0
  %1344 = vmatpush1.bf16.msra.mxu0 %v1206
  %1345 = vmatprep.subr.bf16.mxu0 0
  %1346 = vmatpush1.bf16.msra.mxu0 %v1207
  %1347 = vmatprep.subr.bf16.mxu0 0
  %1348 = vmatpush1.bf16.msra.mxu0 %v1208
  %1349 = vmatprep.subr.bf16.mxu0 0
  %1350 = vmatpush1.bf16.msra.mxu0 %v1209
  %1351 = vmatprep.subr.bf16.mxu0 0
  %1352 = vmatpush1.bf16.msra.mxu0 %v1210
  %1353 = vmatprep.subr.bf16.mxu0 0
  %1354 = vmatpush1.bf16.msra.mxu0 %v1211
  %1355 = vmatprep.subr.bf16.mxu0 0
  %1356 = vmatpush1.bf16.msra.mxu0 %v1212
  %1357 = vmatprep.subr.bf16.mxu0 0
  %1358 = vmatpush1.bf16.msra.mxu0 %v1213
  %1359 = vmatprep.mubr.bf16.mxu0 %v981
  %1360 = vmatmul.mubr.bf16.gmra.mrb[0].mxu0 %v980
  %v1361 = vpop.f32.mrb[0].mxu0
  %v1362 = vadd.f32 %v1313, %v1361
  %v1363 = vpop.f32.mrb[0].mxu0
  %v1364 = vpop.f32.mrb[0].mxu0
  %v1365 = vadd.f32 %v1316, %v1364
  %v1366 = vpop.f32.mrb[0].mxu0
  %1367 = vmatprep.mubr.bf16.mxu0 %v987
  %1368 = vmatmul.mubr.bf16.gmra.mrb[0].mxu0 %v986
  %v1369 = vpop.f32.mrb[0].mxu0
  %v1370 = vadd.f32 %v1321, %v1369
  %v1371 = vpop.f32.mrb[0].mxu0
  %v1372 = vpop.f32.mrb[0].mxu0
  %v1373 = vadd.f32 %v1324, %v1372
  %v1374 = vpop.f32.mrb[0].mxu0
  %1375 = vdwg.mxu0
  %1376 = vmatprep.subr.bf16.mxu0 0
  %1377 = vmatpush1.bf16.msra.mxu0 %v1214
  %1378 = vmatprep.subr.bf16.mxu0 0
  %1379 = vmatpush1.bf16.msra.mxu0 %v1215
  %1380 = vmatprep.subr.bf16.mxu0 0
  %1381 = vmatpush1.bf16.msra.mxu0 %v1216
  %1382 = vmatprep.subr.bf16.mxu0 0
  %1383 = vmatpush1.bf16.msra.mxu0 %v1217
  %1384 = vmatprep.subr.bf16.mxu0 0
  %1385 = vmatpush1.bf16.msra.mxu0 %v1218
  %1386 = vmatprep.subr.bf16.mxu0 0
  %1387 = vmatpush1.bf16.msra.mxu0 %v1219
  %1388 = vmatprep.subr.bf16.mxu0 0
  %1389 = vmatpush1.bf16.msra.mxu0 %v1220
  %1390 = vmatprep.subr.bf16.mxu0 0
  %1391 = vmatpush1.bf16.msra.mxu0 %v1221
  %1392 = vmatprep.subr.bf16.mxu0 0
  %1393 = vmatpush1.bf16.msra.mxu0 %v1222
  %1394 = vmatprep.subr.bf16.mxu0 0
  %1395 = vmatpush1.bf16.msra.mxu0 %v1223
  %1396 = vmatprep.subr.bf16.mxu0 0
  %1397 = vmatpush1.bf16.msra.mxu0 %v1224
  %1398 = vmatprep.subr.bf16.mxu0 0
  %1399 = vmatpush1.bf16.msra.mxu0 %v1225
  %1400 = vmatprep.subr.bf16.mxu0 0
  %1401 = vmatpush1.bf16.msra.mxu0 %v1226
  %1402 = vmatprep.subr.bf16.mxu0 0
  %1403 = vmatpush1.bf16.msra.mxu0 %v1227
  %1404 = vmatprep.subr.bf16.mxu0 0
  %1405 = vmatpush1.bf16.msra.mxu0 %v1228
  %1406 = vmatprep.subr.bf16.mxu0 0
  %1407 = vmatpush1.bf16.msra.mxu0 %v1229
  %1408 = vmatprep.mubr.bf16.mxu0 %v983
  %1409 = vmatmul.mubr.bf16.gmra.mrb[0].mxu0 %v982
  %v1410 = vpop.f32.mrb[0].mxu0
  %v1411 = vadd.f32 %v1362, %v1410
  %v1412 = vpop.f32.mrb[0].mxu0
  %v1413 = vpop.f32.mrb[0].mxu0
  %v1414 = vadd.f32 %v1365, %v1413
  %v1415 = vpop.f32.mrb[0].mxu0
  %1416 = vmatprep.mubr.bf16.mxu0 %v989
  %1417 = vmatmul.mubr.bf16.gmra.mrb[0].mxu0 %v988
  %v1418 = vpop.f32.mrb[0].mxu0
  %v1419 = vadd.f32 %v1370, %v1418
  %v1420 = vpop.f32.mrb[0].mxu0
  %v1421 = vpop.f32.mrb[0].mxu0
  %v1422 = vadd.f32 %v1373, %v1421
  %v1423 = vpop.f32.mrb[0].mxu0
  %1424 = vdwg.mxu0
  %v1425 = vadd.f32 %v1411, %v1414
  %v1426 = vadd.f32 %v1425, %v1419
  %v1427 = vadd.f32 %v1426, %v1422
  %v1428 = vrot.slane %v1427, 4
  %v1429 = vadd.f32 %v1427, %v1428
  %v1430 = vrot.slane %v1429, 2
  %v1431 = vadd.f32 %v1429, %v1430
  %v1432 = vrot.slane %v1431, 1
  %v1433 = vadd.f32 %v1431, %v1432
  %v1434 = vmul.f32 %v1411, %v1411
  %v1435 = vmul.f32 %v1414, %v1414
  %v1436 = vmul.f32 %v1419, %v1419
  %v1437 = vmul.f32 %v1422, %v1422
  %v1438 = vadd.f32 %v1434, %v1435
  %v1439 = vadd.f32 %v1438, %v1436
  %v1440 = vadd.f32 %v1439, %v1437
  %v1441 = vrot.slane %v1440, 4
  %v1442 = vadd.f32 %v1440, %v1441
  %v1443 = vrot.slane %v1442, 2
  %v1444 = vadd.f32 %v1442, %v1443
  %v1445 = vrot.slane %v1444, 1
  %v1446 = vadd.f32 %v1444, %v1445
  %v1447 = vsel %vm100, %v1433, %v1446
  %v1448 = vld [vmem:[%s6] sm:$0xff]
  %v1449 = vld [vmem:[%s6 + $0x8] sm:$0xff]
  %v1450 = vld [vmem:[%s6 + $0x10] sm:$0xff]
  %v1451 = vld [vmem:[%s6 + $0x18] sm:$0xff]
  %v1452 = vld [vmem:[%s6 + $0x20] sm:$0xff]
  %v1453 = vld [vmem:[%s6 + $0x28] sm:$0xff]
  %v1454 = vld [vmem:[%s6 + $0x30] sm:$0xff]
  %v1455 = vld [vmem:[%s6 + $0x38] sm:$0xff]
  %v1456 = vld [vmem:[%s6 + $0x40] sm:$0xff]
  %v1457 = vld [vmem:[%s6 + $0x48] sm:$0xff]
  %v1458 = vld [vmem:[%s6 + $0x50] sm:$0xff]
  %v1459 = vld [vmem:[%s6 + $0x58] sm:$0xff]
  %v1460 = vld [vmem:[%s6 + $0x60] sm:$0xff]
  %v1461 = vld [vmem:[%s6 + $0x68] sm:$0xff]
  %v1462 = vld [vmem:[%s6 + $0x70] sm:$0xff]
  %v1463 = vld [vmem:[%s6 + $0x78] sm:$0xff]
  %1464 = vmatprep.subr.mxu0 0.0
  %1465 = vmatpush1.msra.mxu0 %v1448
  %1466 = vmatprep.subr.mxu0 0.0
  %1467 = vmatpush1.msra.mxu0 %v1449
  %1468 = vmatprep.subr.mxu0 0.0
  %1469 = vmatpush1.msra.mxu0 %v1450
  %1470 = vmatprep.subr.mxu0 0.0
  %1471 = vmatpush1.msra.mxu0 %v1451
  %1472 = vmatprep.subr.mxu0 0.0
  %1473 = vmatpush1.msra.mxu0 %v1452
  %1474 = vmatprep.subr.mxu0 0.0
  %1475 = vmatpush1.msra.mxu0 %v1453
  %1476 = vmatprep.subr.mxu0 0.0
  %1477 = vmatpush1.msra.mxu0 %v1454
  %1478 = vmatprep.subr.mxu0 0.0
  %1479 = vmatpush1.msra.mxu0 %v1455
  %1480 = vmatprep.subr.mxu0 0.0
  %1481 = vmatpush1.msra.mxu0 %v1456
  %1482 = vmatprep.subr.mxu0 0.0
  %1483 = vmatpush1.msra.mxu0 %v1457
  %1484 = vmatprep.subr.mxu0 0.0
  %1485 = vmatpush1.msra.mxu0 %v1458
  %1486 = vmatprep.subr.mxu0 0.0
  %1487 = vmatpush1.msra.mxu0 %v1459
  %1488 = vmatprep.subr.mxu0 0.0
  %1489 = vmatpush1.msra.mxu0 %v1460
  %1490 = vmatprep.subr.mxu0 0.0
  %1491 = vmatpush1.msra.mxu0 %v1461
  %1492 = vmatprep.subr.mxu0 0.0
  %1493 = vmatpush1.msra.mxu0 %v1462
  %1494 = vmatprep.subr.mxu0 0.0
  %1495 = vmatpush1.msra.mxu0 %v1463
  %1496 = vmatprep.subr.mxu0 0.0
  %1497 = vmatpush1.msra.mxu0 0.0
  %1498 = vmatprep.subr.mxu0 0.0
  %1499 = vmatpush1.msra.mxu0 0.0
  %1500 = vmatprep.subr.mxu0 0.0
  %1501 = vmatpush1.msra.mxu0 0.0
  %1502 = vmatprep.subr.mxu0 0.0
  %1503 = vmatpush1.msra.mxu0 0.0
  %1504 = vmatprep.subr.mxu0 0.0
  %1505 = vmatpush1.msra.mxu0 0.0
  %1506 = vmatprep.subr.mxu0 0.0
  %1507 = vmatpush1.msra.mxu0 0.0
  %1508 = vmatprep.subr.mxu0 0.0
  %1509 = vmatpush1.msra.mxu0 0.0
  %1510 = vmatprep.subr.mxu0 0.0
  %1511 = vmatpush1.msra.mxu0 0.0
  %1512 = vmatprep.subr.mxu0 0.0
  %1513 = vmatpush1.msra.mxu0 0.0
  %1514 = vmatprep.subr.mxu0 0.0
  %1515 = vmatpush1.msra.mxu0 0.0
  %1516 = vmatprep.subr.mxu0 0.0
  %1517 = vmatpush1.msra.mxu0 0.0
  %1518 = vmatprep.subr.mxu0 0.0
  %1519 = vmatpush1.msra.mxu0 0.0
  %1520 = vmatprep.subr.mxu0 0.0
  %1521 = vmatpush1.msra.mxu0 0.0
  %1522 = vmatprep.subr.mxu0 0.0
  %1523 = vmatpush1.msra.mxu0 0.0
  %1524 = vmatprep.subr.mxu0 0.0
  %1525 = vmatpush1.msra.mxu0 0.0
  %1526 = vmatprep.subr.mxu0 0.0
  %1527 = vmatpush1.msra.mxu0 0.0
  %1528 = vmatprep.mubr.f32.mxu0 0.0
  %1529 = vmatmul.mubr.f32.gmra.mrb[0].mxu0 %v1447
  %v1530 = vpop.f32.mrb[0].mxu0
  %v1531 = vadd.f32 0.0, %v1530
  %v1532 = vpop.f32.mrb[0].mxu0
  %1533 = vdwg.mxu0
  %v1534 = vmul.f32 %v1531, 0.001953125
  %v1535 = vmul.f32 %v1534, %v1534
  %v1537 = vrot.slane %v1535, 7
  %v1539 = vsub.f32 %v1534, %v1537
  %v1540 = vmax.f32 %v1539, 0.0
  %v1541 = vadd.f32 %v1540, 1e-05
  %v1542 = vrsqrt.pop %v1541
  %v1544 = vrot.slane %v1542, 1
  %v1546 = vmul.f32 %v775, %v1544
  %v1547 = vmul.f32 %v1534, %v1546
  %v1548 = vsub.f32 %v776, %v1547
  %v1550 = vrot.slane %v1548, 7
  %v1552 = vsel %vm100, %v1546, %v1550
  %v1553 = vld [vmem:[%s7] sm:$0xff]
  %v1555 = vsel %vm581, %v1552, 0
  %1557 = vmatprep.subr.mxu0 0.0
  %1558 = vmatpush1.msra.mxu0 %v1553
  %1559 = vmatprep.subr.mxu0 0.0
  %1560 = vmatpush1.msra.mxu0 0.0
  %1561 = vmatprep.subr.mxu0 0.0
  %1562 = vmatpush1.msra.mxu0 0.0
  %1563 = vmatprep.subr.mxu0 0.0
  %1564 = vmatpush1.msra.mxu0 0.0
  %1565 = vmatprep.subr.mxu0 0.0
  %1566 = vmatpush1.msra.mxu0 0.0
  %1567 = vmatprep.subr.mxu0 0.0
  %1568 = vmatpush1.msra.mxu0 0.0
  %1569 = vmatprep.subr.mxu0 0.0
  %1570 = vmatpush1.msra.mxu0 0.0
  %1571 = vmatprep.subr.mxu0 0.0
  %1572 = vmatpush1.msra.mxu0 0.0
  %1573 = vmatprep.subr.mxu0 0.0
  %1574 = vmatpush1.msra.mxu0 0.0
  %1575 = vmatprep.subr.mxu0 0.0
  %1576 = vmatpush1.msra.mxu0 0.0
  %1577 = vmatprep.subr.mxu0 0.0
  %1578 = vmatpush1.msra.mxu0 0.0
  %1579 = vmatprep.subr.mxu0 0.0
  %1580 = vmatpush1.msra.mxu0 0.0
  %1581 = vmatprep.subr.mxu0 0.0
  %1582 = vmatpush1.msra.mxu0 0.0
  %1583 = vmatprep.subr.mxu0 0.0
  %1584 = vmatpush1.msra.mxu0 0.0
  %1585 = vmatprep.subr.mxu0 0.0
  %1586 = vmatpush1.msra.mxu0 0.0
  %1587 = vmatprep.subr.mxu0 0.0
  %1588 = vmatpush1.msra.mxu0 0.0
  %1589 = vmatprep.subr.mxu0 0.0
  %1590 = vmatpush1.msra.mxu0 0.0
  %1591 = vmatprep.subr.mxu0 0.0
  %1592 = vmatpush1.msra.mxu0 0.0
  %1593 = vmatprep.subr.mxu0 0.0
  %1594 = vmatpush1.msra.mxu0 0.0
  %1595 = vmatprep.subr.mxu0 0.0
  %1596 = vmatpush1.msra.mxu0 0.0
  %1597 = vmatprep.subr.mxu0 0.0
  %1598 = vmatpush1.msra.mxu0 0.0
  %1599 = vmatprep.subr.mxu0 0.0
  %1600 = vmatpush1.msra.mxu0 0.0
  %1601 = vmatprep.subr.mxu0 0.0
  %1602 = vmatpush1.msra.mxu0 0.0
  %1603 = vmatprep.subr.mxu0 0.0
  %1604 = vmatpush1.msra.mxu0 0.0
  %1605 = vmatprep.subr.mxu0 0.0
  %1606 = vmatpush1.msra.mxu0 0.0
  %1607 = vmatprep.subr.mxu0 0.0
  %1608 = vmatpush1.msra.mxu0 0.0
  %1609 = vmatprep.subr.mxu0 0.0
  %1610 = vmatpush1.msra.mxu0 0.0
  %1611 = vmatprep.subr.mxu0 0.0
  %1612 = vmatpush1.msra.mxu0 0.0
  %1613 = vmatprep.subr.mxu0 0.0
  %1614 = vmatpush1.msra.mxu0 0.0
  %1615 = vmatprep.subr.mxu0 0.0
  %1616 = vmatpush1.msra.mxu0 0.0
  %1617 = vmatprep.subr.mxu0 0.0
  %1618 = vmatpush1.msra.mxu0 0.0
  %1619 = vmatprep.subr.mxu0 0.0
  %1620 = vmatpush1.msra.mxu0 0.0
  %1621 = vmatprep.mubr.f32.mxu0 0.0
  %1622 = vmatmul.mubr.f32.gmra.mrb[0].mxu0 %v1555
  %v1623 = vpop.f32.mrb[0].mxu0
  %v1624 = vadd.f32 0.0, %v1623
  %v1625 = vpop.f32.mrb[0].mxu0
  %1626 = vdwg.mxu0
  %v1627 = vlaneseq
  %v1628 = vshrl.u32 %v1627, 7
  %v1629 = vsub.s32 0, %v1628
  %v1630 = vrot.slane %v1624, %v1629
  %v1631 = vmul.f32 %v1411, %v1630
  %v1632 = vmul.f32 %v1414, %v1630
  %v1633 = vmul.f32 %v1419, %v1630
  %v1634 = vmul.f32 %v1422, %v1630
  %v1635 = vlaneseq
  %v1636 = vshrl.u32 %v1635, 7
  %v1637 = vsub.s32 1, %v1636
  %v1638 = vrot.slane %v1624, %v1637
  %v1639 = vadd.f32 %v1631, %v1638
  %v1640 = vadd.f32 %v1632, %v1638
  %v1641 = vadd.f32 %v1633, %v1638
  %v1642 = vadd.f32 %v1634, %v1638
  %v1643 = vadd.f32 %v1639, %v777
  %v1644 = vadd.f32 %v1640, %v778
  %v1645 = vadd.f32 %v1641, %v779
  %v1646 = vadd.f32 %v1642, %v780
  %v1647 = vmax.f32 %v1643, 0.0
  %v1648 = vmax.f32 %v1644, 0.0
  %v1649 = vmax.f32 %v1645, 0.0
  %v1650 = vmax.f32 %v1646, 0.0
  %1651 = vst [vmem:[#allocation5] sm:$0xff] %v1647
  %1652 = vst [vmem:[#allocation5 + $0x8] sm:$0xff] %v1648
  %1653 = vst [vmem:[#allocation5 + $0x10] sm:$0xff] %v1649
  %1654 = vst [vmem:[#allocation5 + $0x18] sm:$0xff] %v1650
  %s1655 = scalar_lea.vmem %s3, 384
  %v1656 = vld [vmem:[%s1655] sm:$0xf]
  %v1657 = vld [vmem:[%s1655 + $0x4] sm:$0xf]
  %v1658 = vld [vmem:[%s1655 + $0x8] sm:$0xf]
  %v1659 = vld [vmem:[%s1655 + $0xc] sm:$0xf]
  %v1660 = vld [vmem:[%s1655 + $0x10] sm:$0xf]
  %v1661 = vld [vmem:[%s1655 + $0x14] sm:$0xf]
  %v1662 = vld [vmem:[%s1655 + $0x18] sm:$0xf]
  %v1663 = vld [vmem:[%s1655 + $0x1c] sm:$0xf]
  %v1664 = vld [vmem:[%s1655 + $0x20] sm:$0xf]
  %v1665 = vld [vmem:[%s1655 + $0x24] sm:$0xf]
  %v1666 = vld [vmem:[%s1655 + $0x28] sm:$0xf]
  %v1667 = vld [vmem:[%s1655 + $0x2c] sm:$0xf]
  %v1668 = vld [vmem:[%s1655 + $0x30] sm:$0xf]
  %v1669 = vld [vmem:[%s1655 + $0x34] sm:$0xf]
  %v1670 = vld [vmem:[%s1655 + $0x38] sm:$0xf]
  %v1671 = vld [vmem:[%s1655 + $0x3c] sm:$0xf]
  %v1672 = vld [vmem:[%s1655 + $0x40] sm:$0xf]
  %v1673 = vld [vmem:[%s1655 + $0x44] sm:$0xf]
  %v1674 = vld [vmem:[%s1655 + $0x48] sm:$0xf]
  %v1675 = vld [vmem:[%s1655 + $0x4c] sm:$0xf]
  %v1676 = vld [vmem:[%s1655 + $0x50] sm:$0xf]
  %v1677 = vld [vmem:[%s1655 + $0x54] sm:$0xf]
  %v1678 = vld [vmem:[%s1655 + $0x58] sm:$0xf]
  %v1679 = vld [vmem:[%s1655 + $0x5c] sm:$0xf]
  %v1680 = vld [vmem:[%s1655 + $0x60] sm:$0xf]
  %v1681 = vld [vmem:[%s1655 + $0x64] sm:$0xf]
  %v1682 = vld [vmem:[%s1655 + $0x68] sm:$0xf]
  %v1683 = vld [vmem:[%s1655 + $0x6c] sm:$0xf]
  %v1684 = vld [vmem:[%s1655 + $0x70] sm:$0xf]
  %v1685 = vld [vmem:[%s1655 + $0x74] sm:$0xf]
  %v1686 = vld [vmem:[%s1655 + $0x78] sm:$0xf]
  %v1687 = vld [vmem:[%s1655 + $0x7c] sm:$0xf]
  %v1688 = vld [vmem:[%s1655 + $0x80] sm:$0xf]
  %v1689 = vld [vmem:[%s1655 + $0x84] sm:$0xf]
  %v1690 = vld [vmem:[%s1655 + $0x88] sm:$0xf]
  %v1691 = vld [vmem:[%s1655 + $0x8c] sm:$0xf]
  %v1692 = vld [vmem:[%s1655 + $0x90] sm:$0xf]
  %v1693 = vld [vmem:[%s1655 + $0x94] sm:$0xf]
  %v1694 = vld [vmem:[%s1655 + $0x98] sm:$0xf]
  %v1695 = vld [vmem:[%s1655 + $0x9c] sm:$0xf]
  %v1696 = vld [vmem:[%s1655 + $0xa0] sm:$0xf]
  %v1697 = vld [vmem:[%s1655 + $0xa4] sm:$0xf]
  %v1698 = vld [vmem:[%s1655 + $0xa8] sm:$0xf]
  %v1699 = vld [vmem:[%s1655 + $0xac] sm:$0xf]
  %v1700 = vld [vmem:[%s1655 + $0xb0] sm:$0xf]
  %v1701 = vld [vmem:[%s1655 + $0xb4] sm:$0xf]
  %v1702 = vld [vmem:[%s1655 + $0xb8] sm:$0xf]
  %v1703 = vld [vmem:[%s1655 + $0xbc] sm:$0xf]
  %v1704 = vld [vmem:[%s1655 + $0xc0] sm:$0xf]
  %v1705 = vld [vmem:[%s1655 + $0xc4] sm:$0xf]
  %v1706 = vld [vmem:[%s1655 + $0xc8] sm:$0xf]
  %v1707 = vld [vmem:[%s1655 + $0xcc] sm:$0xf]
  %v1708 = vld [vmem:[%s1655 + $0xd0] sm:$0xf]
  %v1709 = vld [vmem:[%s1655 + $0xd4] sm:$0xf]
  %v1710 = vld [vmem:[%s1655 + $0xd8] sm:$0xf]
  %v1711 = vld [vmem:[%s1655 + $0xdc] sm:$0xf]
  %v1712 = vld [vmem:[%s1655 + $0xe0] sm:$0xf]
  %v1713 = vld [vmem:[%s1655 + $0xe4] sm:$0xf]
  %v1714 = vld [vmem:[%s1655 + $0xe8] sm:$0xf]
  %v1715 = vld [vmem:[%s1655 + $0xec] sm:$0xf]
  %v1716 = vld [vmem:[%s1655 + $0xf0] sm:$0xf]
  %v1717 = vld [vmem:[%s1655 + $0xf4] sm:$0xf]
  %v1718 = vld [vmem:[%s1655 + $0xf8] sm:$0xf]
  %v1719 = vld [vmem:[%s1655 + $0xfc] sm:$0xf]
  %v1720 = vld [vmem:[%s1655 + $0x100] sm:$0xf]
  %v1721 = vld [vmem:[%s1655 + $0x104] sm:$0xf]
  %v1722 = vld [vmem:[%s1655 + $0x108] sm:$0xf]
  %v1723 = vld [vmem:[%s1655 + $0x10c] sm:$0xf]
  %v1724 = vld [vmem:[%s1655 + $0x110] sm:$0xf]
  %v1725 = vld [vmem:[%s1655 + $0x114] sm:$0xf]
  %v1726 = vld [vmem:[%s1655 + $0x118] sm:$0xf]
  %v1727 = vld [vmem:[%s1655 + $0x11c] sm:$0xf]
  %v1728 = vld [vmem:[%s1655 + $0x120] sm:$0xf]
  %v1729 = vld [vmem:[%s1655 + $0x124] sm:$0xf]
  %v1730 = vld [vmem:[%s1655 + $0x128] sm:$0xf]
  %v1731 = vld [vmem:[%s1655 + $0x12c] sm:$0xf]
  %v1732 = vld [vmem:[%s1655 + $0x130] sm:$0xf]
  %v1733 = vld [vmem:[%s1655 + $0x134] sm:$0xf]
  %v1734 = vld [vmem:[%s1655 + $0x138] sm:$0xf]
  %v1735 = vld [vmem:[%s1655 + $0x13c] sm:$0xf]
  %v1736 = vld [vmem:[%s1655 + $0x140] sm:$0xf]
  %v1737 = vld [vmem:[%s1655 + $0x144] sm:$0xf]
  %v1738 = vld [vmem:[%s1655 + $0x148] sm:$0xf]
  %v1739 = vld [vmem:[%s1655 + $0x14c] sm:$0xf]
  %v1740 = vld [vmem:[%s1655 + $0x150] sm:$0xf]
  %v1741 = vld [vmem:[%s1655 + $0x154] sm:$0xf]
  %v1742 = vld [vmem:[%s1655 + $0x158] sm:$0xf]
  %v1743 = vld [vmem:[%s1655 + $0x15c] sm:$0xf]
  %v1744 = vld [vmem:[%s1655 + $0x160] sm:$0xf]
  %v1745 = vld [vmem:[%s1655 + $0x164] sm:$0xf]
  %v1746 = vld [vmem:[%s1655 + $0x168] sm:$0xf]
  %v1747 = vld [vmem:[%s1655 + $0x16c] sm:$0xf]
  %v1748 = vld [vmem:[%s1655 + $0x170] sm:$0xf]
  %v1749 = vld [vmem:[%s1655 + $0x174] sm:$0xf]
  %v1750 = vld [vmem:[%s1655 + $0x178] sm:$0xf]
  %v1751 = vld [vmem:[%s1655 + $0x17c] sm:$0xf]
  %v1752 = vld [vmem:[%s4 + $0x2] sm:$0x1]
  %v1753 = vld [vmem:[%s5 + $0x2] sm:$0x1]
  %v1754 = vld [vmem:[#allocation5] sm:$0xff]
  %v1755 = vld [vmem:[#allocation5 + $0x8] sm:$0xff]
  %v1756 = vld [vmem:[#allocation5 + $0x10] sm:$0xff]
  %v1757 = vld [vmem:[#allocation5 + $0x18] sm:$0xff]
  %v1762 = vrot.slane %v1754, 7
  %v1763 = vrot.slane %v1755, 7
  %v1764 = vsel %vm100, %v1762, %v1763
  %v1765 = vrot.slane %v1756, 7
  %v1766 = vrot.slane %v1757, 7
  %v1767 = vsel %vm100, %v1765, %v1766
  %1768 = vrot.lane.b32.xlu0 %v1762, 8
  %v1769 = vpop.permute.xlu0 %1768
  %1770 = vrot.lane.b32.xlu0 %v1764, 8
  %v1771 = vpop.permute.xlu0 %1770
  %1772 = vrot.lane.b32.xlu0 %v1763, 8
  %v1773 = vpop.permute.xlu0 %1772
  %1774 = vrot.lane.b32.xlu0 %v1765, 8
  %v1775 = vpop.permute.xlu0 %1774
  %1776 = vrot.lane.b32.xlu0 %v1767, 8
  %v1777 = vpop.permute.xlu0 %1776
  %1778 = vrot.lane.b32.xlu0 %v1766, 8
  %v1779 = vpop.permute.xlu0 %1778
  %1786 = vst.msk [vmem:[#allocation2] sm:$0xfe] %vm825, %v1769
  %1787 = vst.msk [vmem:[#allocation2 + $0x8] sm:$0xfe] %vm827, %v1769
  %1788 = vst.msk [vmem:[#allocation2 + $0x10] sm:$0xff] %vm829, %v1771
  %1789 = vst.msk [vmem:[#allocation2 + $0x18] sm:$0xff] %vm581, %v1771
  %1790 = vst.msk [vmem:[#allocation2 + $0x20] sm:$0x1] %vm832, %v1773
  %1791 = vst.msk [vmem:[#allocation2 + $0x28] sm:$0x1] %vm834, %v1773
  %1792 = vst.msk [vmem:[#allocation2 + $0x30] sm:$0xfe] %vm825, %v1775
  %1793 = vst.msk [vmem:[#allocation2 + $0x38] sm:$0xfe] %vm827, %v1775
  %1794 = vst.msk [vmem:[#allocation2 + $0x40] sm:$0xff] %vm829, %v1777
  %1795 = vst.msk [vmem:[#allocation2 + $0x48] sm:$0xff] %vm581, %v1777
  %1796 = vst.msk [vmem:[#allocation2 + $0x50] sm:$0x1] %vm832, %v1779
  %1797 = vst.msk [vmem:[#allocation2 + $0x58] sm:$0x1] %vm834, %v1779
  %v1798 = vld [vmem:[#allocation2] sm:$0xff]
  %v1799 = vld [vmem:[#allocation2 + $0x8] sm:$0xff]
  %v1800 = vld [vmem:[#allocation2 + $0x10] sm:$0xff]
  %v1801 = vld [vmem:[#allocation2 + $0x18] sm:$0xff]
  %v1802 = vld [vmem:[#allocation2 + $0x30] sm:$0xff]
  %v1803 = vld [vmem:[#allocation2 + $0x38] sm:$0xff]
  %v1804 = vld [vmem:[#allocation2 + $0x40] sm:$0xff]
  %v1805 = vld [vmem:[#allocation2 + $0x48] sm:$0xff]
  %v1806 = vpack.c.bf16 %v1800, %v1798
  %v1807 = vpack.c.bf16 %v1801, %v1799
  %v1808 = vpack.c.bf16 %v1804, %v1802
  %v1809 = vpack.c.bf16 %v1805, %v1803
  %1810 = vst [vmem:[#allocation3] sm:$0xff] %v1806
  %1811 = vst [vmem:[#allocation3 + $0x8] sm:$0xff] %v1807
  %1812 = vst [vmem:[#allocation3 + $0x30] sm:$0xff] %v1808
  %1813 = vst [vmem:[#allocation3 + $0x38] sm:$0xff] %v1809
  %v1814 = vld [vmem:[#allocation2] sm:$0xfe]
  %v1815 = vld [vmem:[#allocation2 + $0x8] sm:$0xfe]
  %v1816 = vld [vmem:[#allocation2 + $0x10] sm:$0xff]
  %v1817 = vld [vmem:[#allocation2 + $0x18] sm:$0xff]
  %v1818 = vld [vmem:[#allocation2 + $0x20] sm:$0x1]
  %v1819 = vld [vmem:[#allocation2 + $0x28] sm:$0x1]
  %v1820 = vld [vmem:[#allocation2 + $0x30] sm:$0xfe]
  %v1821 = vld [vmem:[#allocation2 + $0x38] sm:$0xfe]
  %v1822 = vld [vmem:[#allocation2 + $0x40] sm:$0xff]
  %v1823 = vld [vmem:[#allocation2 + $0x48] sm:$0xff]
  %v1824 = vld [vmem:[#allocation2 + $0x50] sm:$0x1]
  %v1825 = vld [vmem:[#allocation2 + $0x58] sm:$0x1]
  %v1838 = vrot.slane %v1814, 1
  %v1839 = vrot.slane %v1816, 1
  %v1840 = vsel %vm154, %v1838, %v1839
  %v1841 = vrot.slane %v1815, 1
  %v1842 = vrot.slane %v1817, 1
  %v1843 = vsel %vm154, %v1841, %v1842
  %v1844 = vrot.slane %v1818, 1
  %v1845 = vsel %vm154, %v1839, %v1844
  %v1846 = vrot.slane %v1819, 1
  %v1847 = vsel %vm154, %v1842, %v1846
  %v1848 = vrot.slane %v1820, 1
  %v1849 = vrot.slane %v1822, 1
  %v1850 = vsel %vm154, %v1848, %v1849
  %v1851 = vrot.slane %v1821, 1
  %v1852 = vrot.slane %v1823, 1
  %v1853 = vsel %vm154, %v1851, %v1852
  %v1854 = vrot.slane %v1824, 1
  %v1855 = vsel %vm154, %v1849, %v1854
  %v1856 = vrot.slane %v1825, 1
  %v1857 = vsel %vm154, %v1852, %v1856
  %v1866 = vpack.c.bf16 %v1845, %v1840
  %v1867 = vpack.c.bf16 %v1847, %v1843
  %v1868 = vpack.c.bf16 %v1855, %v1850
  %v1869 = vpack.c.bf16 %v1857, %v1853
  %1870 = vst [vmem:[#allocation3 + $0x10] sm:$0xff] %v1866
  %1871 = vst [vmem:[#allocation3 + $0x18] sm:$0xff] %v1867
  %1872 = vst [vmem:[#allocation3 + $0x40] sm:$0xff] %v1868
  %1873 = vst [vmem:[#allocation3 + $0x48] sm:$0xff] %v1869
  %v1874 = vld [vmem:[#allocation2] sm:$0xfc]
  %v1875 = vld [vmem:[#allocation2 + $0x8] sm:$0xfc]
  %v1876 = vld [vmem:[#allocation2 + $0x10] sm:$0xff]
  %v1877 = vld [vmem:[#allocation2 + $0x18] sm:$0xff]
  %v1878 = vld [vmem:[#allocation2 + $0x20] sm:$0x3]
  %v1879 = vld [vmem:[#allocation2 + $0x28] sm:$0x3]
  %v1880 = vld [vmem:[#allocation2 + $0x30] sm:$0xfc]
  %v1881 = vld [vmem:[#allocation2 + $0x38] sm:$0xfc]
  %v1882 = vld [vmem:[#allocation2 + $0x40] sm:$0xff]
  %v1883 = vld [vmem:[#allocation2 + $0x48] sm:$0xff]
  %v1884 = vld [vmem:[#allocation2 + $0x50] sm:$0x3]
  %v1885 = vld [vmem:[#allocation2 + $0x58] sm:$0x3]
  %v1898 = vrot.slane %v1874, 2
  %v1899 = vrot.slane %v1876, 2
  %v1900 = vsel %vm185, %v1898, %v1899
  %v1901 = vrot.slane %v1875, 2
  %v1902 = vrot.slane %v1877, 2
  %v1903 = vsel %vm185, %v1901, %v1902
  %v1904 = vrot.slane %v1878, 2
  %v1905 = vsel %vm185, %v1899, %v1904
  %v1906 = vrot.slane %v1879, 2
  %v1907 = vsel %vm185, %v1902, %v1906
  %v1908 = vrot.slane %v1880, 2
  %v1909 = vrot.slane %v1882, 2
  %v1910 = vsel %vm185, %v1908, %v1909
  %v1911 = vrot.slane %v1881, 2
  %v1912 = vrot.slane %v1883, 2
  %v1913 = vsel %vm185, %v1911, %v1912
  %v1914 = vrot.slane %v1884, 2
  %v1915 = vsel %vm185, %v1909, %v1914
  %v1916 = vrot.slane %v1885, 2
  %v1917 = vsel %vm185, %v1912, %v1916
  %v1926 = vpack.c.bf16 %v1905, %v1900
  %v1927 = vpack.c.bf16 %v1907, %v1903
  %v1928 = vpack.c.bf16 %v1915, %v1910
  %v1929 = vpack.c.bf16 %v1917, %v1913
  %1930 = vst [vmem:[#allocation3 + $0x20] sm:$0xff] %v1926
  %1931 = vst [vmem:[#allocation3 + $0x28] sm:$0xff] %v1927
  %1932 = vst [vmem:[#allocation3 + $0x50] sm:$0xff] %v1928
  %1933 = vst [vmem:[#allocation3 + $0x58] sm:$0xff] %v1929
  %v1934 = vld [vmem:[#allocation3] sm:$0xff]
  %v1935 = vld [vmem:[#allocation3 + $0x8] sm:$0xff]
  %v1936 = vld [vmem:[#allocation3 + $0x10] sm:$0xff]
  %v1937 = vld [vmem:[#allocation3 + $0x18] sm:$0xff]
  %v1938 = vld [vmem:[#allocation3 + $0x20] sm:$0xff]
  %v1939 = vld [vmem:[#allocation3 + $0x28] sm:$0xff]
  %v1940 = vld [vmem:[#allocation3 + $0x30] sm:$0xff]
  %v1941 = vld [vmem:[#allocation3 + $0x38] sm:$0xff]
  %v1942 = vld [vmem:[#allocation3 + $0x40] sm:$0xff]
  %v1943 = vld [vmem:[#allocation3 + $0x48] sm:$0xff]
  %v1944 = vld [vmem:[#allocation3 + $0x50] sm:$0xff]
  %v1945 = vld [vmem:[#allocation3 + $0x58] sm:$0xff]
  %v2042 = vunpack.c.l.b16 %v1656
  %v2043 = vunpack.c.l.b16 %v1657
  %v2044 = vunpack.c.l.b16 %v1658
  %v2045 = vunpack.c.l.b16 %v1659
  %v2046 = vunpack.c.l.b16 %v1660
  %v2047 = vunpack.c.l.b16 %v1661
  %v2048 = vunpack.c.l.b16 %v1662
  %v2049 = vunpack.c.l.b16 %v1663
  %v2050 = vunpack.c.l.b16 %v1664
  %v2051 = vunpack.c.l.b16 %v1665
  %v2052 = vunpack.c.l.b16 %v1666
  %v2053 = vunpack.c.l.b16 %v1667
  %v2054 = vunpack.c.l.b16 %v1668
  %v2055 = vunpack.c.l.b16 %v1669
  %v2056 = vunpack.c.l.b16 %v1670
  %v2057 = vunpack.c.l.b16 %v1671
  %v2058 = vunpack.c.l.b16 %v1672
  %v2059 = vunpack.c.l.b16 %v1673
  %v2060 = vunpack.c.l.b16 %v1674
  %v2061 = vunpack.c.l.b16 %v1675
  %v2062 = vunpack.c.l.b16 %v1676
  %v2063 = vunpack.c.l.b16 %v1677
  %v2064 = vunpack.c.l.b16 %v1678
  %v2065 = vunpack.c.l.b16 %v1679
  %v2066 = vunpack.c.l.b16 %v1680
  %v2067 = vunpack.c.l.b16 %v1681
  %v2068 = vunpack.c.l.b16 %v1682
  %v2069 = vunpack.c.l.b16 %v1683
  %v2070 = vunpack.c.l.b16 %v1684
  %v2071 = vunpack.c.l.b16 %v1685
  %v2072 = vunpack.c.l.b16 %v1686
  %v2073 = vunpack.c.l.b16 %v1687
  %v2074 = vunpack.c.l.b16 %v1688
  %v2075 = vunpack.c.l.b16 %v1689
  %v2076 = vunpack.c.l.b16 %v1690
  %v2077 = vunpack.c.l.b16 %v1691
  %v2078 = vunpack.c.l.b16 %v1692
  %v2079 = vunpack.c.l.b16 %v1693
  %v2080 = vunpack.c.l.b16 %v1694
  %v2081 = vunpack.c.l.b16 %v1695
  %v2082 = vunpack.c.l.b16 %v1696
  %v2083 = vunpack.c.l.b16 %v1697
  %v2084 = vunpack.c.l.b16 %v1698
  %v2085 = vunpack.c.l.b16 %v1699
  %v2086 = vunpack.c.l.b16 %v1700
  %v2087 = vunpack.c.l.b16 %v1701
  %v2088 = vunpack.c.l.b16 %v1702
  %v2089 = vunpack.c.l.b16 %v1703
  %v2090 = vunpack.c.l.b16 %v1704
  %v2091 = vunpack.c.l.b16 %v1705
  %v2092 = vunpack.c.l.b16 %v1706
  %v2093 = vunpack.c.l.b16 %v1707
  %v2094 = vunpack.c.l.b16 %v1708
  %v2095 = vunpack.c.l.b16 %v1709
  %v2096 = vunpack.c.l.b16 %v1710
  %v2097 = vunpack.c.l.b16 %v1711
  %v2098 = vunpack.c.l.b16 %v1712
  %v2099 = vunpack.c.l.b16 %v1713
  %v2100 = vunpack.c.l.b16 %v1714
  %v2101 = vunpack.c.l.b16 %v1715
  %v2102 = vunpack.c.l.b16 %v1716
  %v2103 = vunpack.c.l.b16 %v1717
  %v2104 = vunpack.c.l.b16 %v1718
  %v2105 = vunpack.c.l.b16 %v1719
  %v2106 = vunpack.c.l.b16 %v1720
  %v2107 = vunpack.c.l.b16 %v1721
  %v2108 = vunpack.c.l.b16 %v1722
  %v2109 = vunpack.c.l.b16 %v1723
  %v2110 = vunpack.c.l.b16 %v1724
  %v2111 = vunpack.c.l.b16 %v1725
  %v2112 = vunpack.c.l.b16 %v1726
  %v2113 = vunpack.c.l.b16 %v1727
  %v2114 = vunpack.c.l.b16 %v1728
  %v2115 = vunpack.c.l.b16 %v1729
  %v2116 = vunpack.c.l.b16 %v1730
  %v2117 = vunpack.c.l.b16 %v1731
  %v2118 = vunpack.c.l.b16 %v1732
  %v2119 = vunpack.c.l.b16 %v1733
  %v2120 = vunpack.c.l.b16 %v1734
  %v2121 = vunpack.c.l.b16 %v1735
  %v2122 = vunpack.c.l.b16 %v1736
  %v2123 = vunpack.c.l.b16 %v1737
  %v2124 = vunpack.c.l.b16 %v1738
  %v2125 = vunpack.c.l.b16 %v1739
  %v2126 = vunpack.c.l.b16 %v1740
  %v2127 = vunpack.c.l.b16 %v1741
  %v2128 = vunpack.c.l.b16 %v1742
  %v2129 = vunpack.c.l.b16 %v1743
  %v2130 = vunpack.c.l.b16 %v1744
  %v2131 = vunpack.c.l.b16 %v1745
  %v2132 = vunpack.c.l.b16 %v1746
  %v2133 = vunpack.c.l.b16 %v1747
  %v2134 = vunpack.c.l.b16 %v1748
  %v2135 = vunpack.c.l.b16 %v1749
  %v2136 = vunpack.c.l.b16 %v1750
  %v2137 = vunpack.c.l.b16 %v1751
  %v2138 = vpack.c.b16 %v2043, %v2042
  %v2139 = vpack.c.b16 %v2045, %v2044
  %v2140 = vpack.c.b16 %v2047, %v2046
  %v2141 = vpack.c.b16 %v2049, %v2048
  %v2142 = vpack.c.b16 %v2051, %v2050
  %v2143 = vpack.c.b16 %v2053, %v2052
  %v2144 = vpack.c.b16 %v2055, %v2054
  %v2145 = vpack.c.b16 %v2057, %v2056
  %v2146 = vpack.c.b16 %v2059, %v2058
  %v2147 = vpack.c.b16 %v2061, %v2060
  %v2148 = vpack.c.b16 %v2063, %v2062
  %v2149 = vpack.c.b16 %v2065, %v2064
  %v2150 = vpack.c.b16 %v2067, %v2066
  %v2151 = vpack.c.b16 %v2069, %v2068
  %v2152 = vpack.c.b16 %v2071, %v2070
  %v2153 = vpack.c.b16 %v2073, %v2072
  %v2154 = vpack.c.b16 %v2075, %v2074
  %v2155 = vpack.c.b16 %v2077, %v2076
  %v2156 = vpack.c.b16 %v2079, %v2078
  %v2157 = vpack.c.b16 %v2081, %v2080
  %v2158 = vpack.c.b16 %v2083, %v2082
  %v2159 = vpack.c.b16 %v2085, %v2084
  %v2160 = vpack.c.b16 %v2087, %v2086
  %v2161 = vpack.c.b16 %v2089, %v2088
  %v2162 = vpack.c.b16 %v2091, %v2090
  %v2163 = vpack.c.b16 %v2093, %v2092
  %v2164 = vpack.c.b16 %v2095, %v2094
  %v2165 = vpack.c.b16 %v2097, %v2096
  %v2166 = vpack.c.b16 %v2099, %v2098
  %v2167 = vpack.c.b16 %v2101, %v2100
  %v2168 = vpack.c.b16 %v2103, %v2102
  %v2169 = vpack.c.b16 %v2105, %v2104
  %v2170 = vpack.c.b16 %v2107, %v2106
  %v2171 = vpack.c.b16 %v2109, %v2108
  %v2172 = vpack.c.b16 %v2111, %v2110
  %v2173 = vpack.c.b16 %v2113, %v2112
  %v2174 = vpack.c.b16 %v2115, %v2114
  %v2175 = vpack.c.b16 %v2117, %v2116
  %v2176 = vpack.c.b16 %v2119, %v2118
  %v2177 = vpack.c.b16 %v2121, %v2120
  %v2178 = vpack.c.b16 %v2123, %v2122
  %v2179 = vpack.c.b16 %v2125, %v2124
  %v2180 = vpack.c.b16 %v2127, %v2126
  %v2181 = vpack.c.b16 %v2129, %v2128
  %v2182 = vpack.c.b16 %v2131, %v2130
  %v2183 = vpack.c.b16 %v2133, %v2132
  %v2184 = vpack.c.b16 %v2135, %v2134
  %v2185 = vpack.c.b16 %v2137, %v2136
  %2234 = vmatprep.subr.bf16.mxu0 0
  %2235 = vmatpush1.bf16.msra.mxu0 %v2138
  %2236 = vmatprep.subr.bf16.mxu0 0
  %2237 = vmatpush1.bf16.msra.mxu0 %v2139
  %2238 = vmatprep.subr.bf16.mxu0 0
  %2239 = vmatpush1.bf16.msra.mxu0 %v2140
  %2240 = vmatprep.subr.bf16.mxu0 0
  %2241 = vmatpush1.bf16.msra.mxu0 %v2141
  %2242 = vmatprep.subr.bf16.mxu0 0
  %2243 = vmatpush1.bf16.msra.mxu0 %v2142
  %2244 = vmatprep.subr.bf16.mxu0 0
  %2245 = vmatpush1.bf16.msra.mxu0 %v2143
  %2246 = vmatprep.subr.bf16.mxu0 0
  %2247 = vmatpush1.bf16.msra.mxu0 %v2144
  %2248 = vmatprep.subr.bf16.mxu0 0
  %2249 = vmatpush1.bf16.msra.mxu0 %v2145
  %2250 = vmatprep.subr.bf16.mxu0 0
  %2251 = vmatpush1.bf16.msra.mxu0 %v2146
  %2252 = vmatprep.subr.bf16.mxu0 0
  %2253 = vmatpush1.bf16.msra.mxu0 %v2147
  %2254 = vmatprep.subr.bf16.mxu0 0
  %2255 = vmatpush1.bf16.msra.mxu0 %v2148
  %2256 = vmatprep.subr.bf16.mxu0 0
  %2257 = vmatpush1.bf16.msra.mxu0 %v2149
  %2258 = vmatprep.subr.bf16.mxu0 0
  %2259 = vmatpush1.bf16.msra.mxu0 %v2150
  %2260 = vmatprep.subr.bf16.mxu0 0
  %2261 = vmatpush1.bf16.msra.mxu0 %v2151
  %2262 = vmatprep.subr.bf16.mxu0 0
  %2263 = vmatpush1.bf16.msra.mxu0 %v2152
  %2264 = vmatprep.subr.bf16.mxu0 0
  %2265 = vmatpush1.bf16.msra.mxu0 %v2153
  %2266 = vmatprep.mubr.bf16.mxu0 %v1935
  %2267 = vmatmul.mubr.bf16.gmra.mrb[0].mxu0 %v1934
  %v2268 = vpop.f32.mrb[0].mxu0
  %v2269 = vadd.f32 0.0, %v2268
  %v2270 = vpop.f32.mrb[0].mxu0
  %v2271 = vpop.f32.mrb[0].mxu0
  %v2272 = vadd.f32 0.0, %v2271
  %v2273 = vpop.f32.mrb[0].mxu0
  %2274 = vmatprep.mubr.bf16.mxu0 %v1941
  %2275 = vmatmul.mubr.bf16.gmra.mrb[0].mxu0 %v1940
  %v2276 = vpop.f32.mrb[0].mxu0
  %v2277 = vadd.f32 0.0, %v2276
  %v2278 = vpop.f32.mrb[0].mxu0
  %v2279 = vpop.f32.mrb[0].mxu0
  %v2280 = vadd.f32 0.0, %v2279
  %v2281 = vpop.f32.mrb[0].mxu0
  %2282 = vdwg.mxu0
  %2283 = vmatprep.subr.bf16.mxu0 0
  %2284 = vmatpush1.bf16.msra.mxu0 %v2154
  %2285 = vmatprep.subr.bf16.mxu0 0
  %2286 = vmatpush1.bf16.msra.mxu0 %v2155
  %2287 = vmatprep.subr.bf16.mxu0 0
  %2288 = vmatpush1.bf16.msra.mxu0 %v2156
  %2289 = vmatprep.subr.bf16.mxu0 0
  %2290 = vmatpush1.bf16.msra.mxu0 %v2157
  %2291 = vmatprep.subr.bf16.mxu0 0
  %2292 = vmatpush1.bf16.msra.mxu0 %v2158
  %2293 = vmatprep.subr.bf16.mxu0 0
  %2294 = vmatpush1.bf16.msra.mxu0 %v2159
  %2295 = vmatprep.subr.bf16.mxu0 0
  %2296 = vmatpush1.bf16.msra.mxu0 %v2160
  %2297 = vmatprep.subr.bf16.mxu0 0
  %2298 = vmatpush1.bf16.msra.mxu0 %v2161
  %2299 = vmatprep.subr.bf16.mxu0 0
  %2300 = vmatpush1.bf16.msra.mxu0 %v2162
  %2301 = vmatprep.subr.bf16.mxu0 0
  %2302 = vmatpush1.bf16.msra.mxu0 %v2163
  %2303 = vmatprep.subr.bf16.mxu0 0
  %2304 = vmatpush1.bf16.msra.mxu0 %v2164
  %2305 = vmatprep.subr.bf16.mxu0 0
  %2306 = vmatpush1.bf16.msra.mxu0 %v2165
  %2307 = vmatprep.subr.bf16.mxu0 0
  %2308 = vmatpush1.bf16.msra.mxu0 %v2166
  %2309 = vmatprep.subr.bf16.mxu0 0
  %2310 = vmatpush1.bf16.msra.mxu0 %v2167
  %2311 = vmatprep.subr.bf16.mxu0 0
  %2312 = vmatpush1.bf16.msra.mxu0 %v2168
  %2313 = vmatprep.subr.bf16.mxu0 0
  %2314 = vmatpush1.bf16.msra.mxu0 %v2169
  %2315 = vmatprep.mubr.bf16.mxu0 %v1937
  %2316 = vmatmul.mubr.bf16.gmra.mrb[0].mxu0 %v1936
  %v2317 = vpop.f32.mrb[0].mxu0
  %v2318 = vadd.f32 %v2269, %v2317
  %v2319 = vpop.f32.mrb[0].mxu0
  %v2320 = vpop.f32.mrb[0].mxu0
  %v2321 = vadd.f32 %v2272, %v2320
  %v2322 = vpop.f32.mrb[0].mxu0
  %2323 = vmatprep.mubr.bf16.mxu0 %v1943
  %2324 = vmatmul.mubr.bf16.gmra.mrb[0].mxu0 %v1942
  %v2325 = vpop.f32.mrb[0].mxu0
  %v2326 = vadd.f32 %v2277, %v2325
  %v2327 = vpop.f32.mrb[0].mxu0
  %v2328 = vpop.f32.mrb[0].mxu0
  %v2329 = vadd.f32 %v2280, %v2328
  %v2330 = vpop.f32.mrb[0].mxu0
  %2331 = vdwg.mxu0
  %2332 = vmatprep.subr.bf16.mxu0 0
  %2333 = vmatpush1.bf16.msra.mxu0 %v2170
  %2334 = vmatprep.subr.bf16.mxu0 0
  %2335 = vmatpush1.bf16.msra.mxu0 %v2171
  %2336 = vmatprep.subr.bf16.mxu0 0
  %2337 = vmatpush1.bf16.msra.mxu0 %v2172
  %2338 = vmatprep.subr.bf16.mxu0 0
  %2339 = vmatpush1.bf16.msra.mxu0 %v2173
  %2340 = vmatprep.subr.bf16.mxu0 0
  %2341 = vmatpush1.bf16.msra.mxu0 %v2174
  %2342 = vmatprep.subr.bf16.mxu0 0
  %2343 = vmatpush1.bf16.msra.mxu0 %v2175
  %2344 = vmatprep.subr.bf16.mxu0 0
  %2345 = vmatpush1.bf16.msra.mxu0 %v2176
  %2346 = vmatprep.subr.bf16.mxu0 0
  %2347 = vmatpush1.bf16.msra.mxu0 %v2177
  %2348 = vmatprep.subr.bf16.mxu0 0
  %2349 = vmatpush1.bf16.msra.mxu0 %v2178
  %2350 = vmatprep.subr.bf16.mxu0 0
  %2351 = vmatpush1.bf16.msra.mxu0 %v2179
  %2352 = vmatprep.subr.bf16.mxu0 0
  %2353 = vmatpush1.bf16.msra.mxu0 %v2180
  %2354 = vmatprep.subr.bf16.mxu0 0
  %2355 = vmatpush1.bf16.msra.mxu0 %v2181
  %2356 = vmatprep.subr.bf16.mxu0 0
  %2357 = vmatpush1.bf16.msra.mxu0 %v2182
  %2358 = vmatprep.subr.bf16.mxu0 0
  %2359 = vmatpush1.bf16.msra.mxu0 %v2183
  %2360 = vmatprep.subr.bf16.mxu0 0
  %2361 = vmatpush1.bf16.msra.mxu0 %v2184
  %2362 = vmatprep.subr.bf16.mxu0 0
  %2363 = vmatpush1.bf16.msra.mxu0 %v2185
  %2364 = vmatprep.mubr.bf16.mxu0 %v1939
  %2365 = vmatmul.mubr.bf16.gmra.mrb[0].mxu0 %v1938
  %v2366 = vpop.f32.mrb[0].mxu0
  %v2367 = vadd.f32 %v2318, %v2366
  %v2368 = vpop.f32.mrb[0].mxu0
  %v2369 = vpop.f32.mrb[0].mxu0
  %v2370 = vadd.f32 %v2321, %v2369
  %v2371 = vpop.f32.mrb[0].mxu0
  %2372 = vmatprep.mubr.bf16.mxu0 %v1945
  %2373 = vmatmul.mubr.bf16.gmra.mrb[0].mxu0 %v1944
  %v2374 = vpop.f32.mrb[0].mxu0
  %v2375 = vadd.f32 %v2326, %v2374
  %v2376 = vpop.f32.mrb[0].mxu0
  %v2377 = vpop.f32.mrb[0].mxu0
  %v2378 = vadd.f32 %v2329, %v2377
  %v2379 = vpop.f32.mrb[0].mxu0
  %2380 = vdwg.mxu0
  %v2381 = vadd.f32 %v2367, %v2370
  %v2382 = vadd.f32 %v2381, %v2375
  %v2383 = vadd.f32 %v2382, %v2378
  %v2384 = vrot.slane %v2383, 4
  %v2385 = vadd.f32 %v2383, %v2384
  %v2386 = vrot.slane %v2385, 2
  %v2387 = vadd.f32 %v2385, %v2386
  %v2388 = vrot.slane %v2387, 1
  %v2389 = vadd.f32 %v2387, %v2388
  %v2390 = vmul.f32 %v2367, %v2367
  %v2391 = vmul.f32 %v2370, %v2370
  %v2392 = vmul.f32 %v2375, %v2375
  %v2393 = vmul.f32 %v2378, %v2378
  %v2394 = vadd.f32 %v2390, %v2391
  %v2395 = vadd.f32 %v2394, %v2392
  %v2396 = vadd.f32 %v2395, %v2393
  %v2397 = vrot.slane %v2396, 4
  %v2398 = vadd.f32 %v2396, %v2397
  %v2399 = vrot.slane %v2398, 2
  %v2400 = vadd.f32 %v2398, %v2399
  %v2401 = vrot.slane %v2400, 1
  %v2402 = vadd.f32 %v2400, %v2401
  %v2403 = vsel %vm100, %v2389, %v2402
  %v2404 = vld [vmem:[%s6] sm:$0xff]
  %v2405 = vld [vmem:[%s6 + $0x8] sm:$0xff]
  %v2406 = vld [vmem:[%s6 + $0x10] sm:$0xff]
  %v2407 = vld [vmem:[%s6 + $0x18] sm:$0xff]
  %v2408 = vld [vmem:[%s6 + $0x20] sm:$0xff]
  %v2409 = vld [vmem:[%s6 + $0x28] sm:$0xff]
  %v2410 = vld [vmem:[%s6 + $0x30] sm:$0xff]
  %v2411 = vld [vmem:[%s6 + $0x38] sm:$0xff]
  %v2412 = vld [vmem:[%s6 + $0x40] sm:$0xff]
  %v2413 = vld [vmem:[%s6 + $0x48] sm:$0xff]
  %v2414 = vld [vmem:[%s6 + $0x50] sm:$0xff]
  %v2415 = vld [vmem:[%s6 + $0x58] sm:$0xff]
  %v2416 = vld [vmem:[%s6 + $0x60] sm:$0xff]
  %v2417 = vld [vmem:[%s6 + $0x68] sm:$0xff]
  %v2418 = vld [vmem:[%s6 + $0x70] sm:$0xff]
  %v2419 = vld [vmem:[%s6 + $0x78] sm:$0xff]
  %2420 = vmatprep.subr.mxu0 0.0
  %2421 = vmatpush1.msra.mxu0 %v2404
  %2422 = vmatprep.subr.mxu0 0.0
  %2423 = vmatpush1.msra.mxu0 %v2405
  %2424 = vmatprep.subr.mxu0 0.0
  %2425 = vmatpush1.msra.mxu0 %v2406
  %2426 = vmatprep.subr.mxu0 0.0
  %2427 = vmatpush1.msra.mxu0 %v2407
  %2428 = vmatprep.subr.mxu0 0.0
  %2429 = vmatpush1.msra.mxu0 %v2408
  %2430 = vmatprep.subr.mxu0 0.0
  %2431 = vmatpush1.msra.mxu0 %v2409
  %2432 = vmatprep.subr.mxu0 0.0
  %2433 = vmatpush1.msra.mxu0 %v2410
  %2434 = vmatprep.subr.mxu0 0.0
  %2435 = vmatpush1.msra.mxu0 %v2411
  %2436 = vmatprep.subr.mxu0 0.0
  %2437 = vmatpush1.msra.mxu0 %v2412
  %2438 = vmatprep.subr.mxu0 0.0
  %2439 = vmatpush1.msra.mxu0 %v2413
  %2440 = vmatprep.subr.mxu0 0.0
  %2441 = vmatpush1.msra.mxu0 %v2414
  %2442 = vmatprep.subr.mxu0 0.0
  %2443 = vmatpush1.msra.mxu0 %v2415
  %2444 = vmatprep.subr.mxu0 0.0
  %2445 = vmatpush1.msra.mxu0 %v2416
  %2446 = vmatprep.subr.mxu0 0.0
  %2447 = vmatpush1.msra.mxu0 %v2417
  %2448 = vmatprep.subr.mxu0 0.0
  %2449 = vmatpush1.msra.mxu0 %v2418
  %2450 = vmatprep.subr.mxu0 0.0
  %2451 = vmatpush1.msra.mxu0 %v2419
  %2452 = vmatprep.subr.mxu0 0.0
  %2453 = vmatpush1.msra.mxu0 0.0
  %2454 = vmatprep.subr.mxu0 0.0
  %2455 = vmatpush1.msra.mxu0 0.0
  %2456 = vmatprep.subr.mxu0 0.0
  %2457 = vmatpush1.msra.mxu0 0.0
  %2458 = vmatprep.subr.mxu0 0.0
  %2459 = vmatpush1.msra.mxu0 0.0
  %2460 = vmatprep.subr.mxu0 0.0
  %2461 = vmatpush1.msra.mxu0 0.0
  %2462 = vmatprep.subr.mxu0 0.0
  %2463 = vmatpush1.msra.mxu0 0.0
  %2464 = vmatprep.subr.mxu0 0.0
  %2465 = vmatpush1.msra.mxu0 0.0
  %2466 = vmatprep.subr.mxu0 0.0
  %2467 = vmatpush1.msra.mxu0 0.0
  %2468 = vmatprep.subr.mxu0 0.0
  %2469 = vmatpush1.msra.mxu0 0.0
  %2470 = vmatprep.subr.mxu0 0.0
  %2471 = vmatpush1.msra.mxu0 0.0
  %2472 = vmatprep.subr.mxu0 0.0
  %2473 = vmatpush1.msra.mxu0 0.0
  %2474 = vmatprep.subr.mxu0 0.0
  %2475 = vmatpush1.msra.mxu0 0.0
  %2476 = vmatprep.subr.mxu0 0.0
  %2477 = vmatpush1.msra.mxu0 0.0
  %2478 = vmatprep.subr.mxu0 0.0
  %2479 = vmatpush1.msra.mxu0 0.0
  %2480 = vmatprep.subr.mxu0 0.0
  %2481 = vmatpush1.msra.mxu0 0.0
  %2482 = vmatprep.subr.mxu0 0.0
  %2483 = vmatpush1.msra.mxu0 0.0
  %2484 = vmatprep.mubr.f32.mxu0 0.0
  %2485 = vmatmul.mubr.f32.gmra.mrb[0].mxu0 %v2403
  %v2486 = vpop.f32.mrb[0].mxu0
  %v2487 = vadd.f32 0.0, %v2486
  %v2488 = vpop.f32.mrb[0].mxu0
  %2489 = vdwg.mxu0
  %v2490 = vmul.f32 %v2487, 0.001953125
  %v2491 = vmul.f32 %v2490, %v2490
  %v2493 = vrot.slane %v2491, 7
  %v2495 = vsub.f32 %v2490, %v2493
  %v2496 = vmax.f32 %v2495, 0.0
  %v2497 = vadd.f32 %v2496, 1e-05
  %v2498 = vrsqrt.pop %v2497
  %v2500 = vrot.slane %v2498, 1
  %v2502 = vmul.f32 %v1752, %v2500
  %v2503 = vmul.f32 %v2490, %v2502
  %v2504 = vsub.f32 %v1753, %v2503
  %v2506 = vrot.slane %v2504, 7
  %v2508 = vsel %vm100, %v2502, %v2506
  %v2509 = vld [vmem:[%s7] sm:$0xff]
  %v2511 = vsel %vm581, %v2508, 0
  %2513 = vmatprep.subr.mxu0 0.0
  %2514 = vmatpush1.msra.mxu0 %v2509
  %2515 = vmatprep.subr.mxu0 0.0
  %2516 = vmatpush1.msra.mxu0 0.0
  %2517 = vmatprep.subr.mxu0 0.0
  %2518 = vmatpush1.msra.mxu0 0.0
  %2519 = vmatprep.subr.mxu0 0.0
  %2520 = vmatpush1.msra.mxu0 0.0
  %2521 = vmatprep.subr.mxu0 0.0
  %2522 = vmatpush1.msra.mxu0 0.0
  %2523 = vmatprep.subr.mxu0 0.0
  %2524 = vmatpush1.msra.mxu0 0.0
  %2525 = vmatprep.subr.mxu0 0.0
  %2526 = vmatpush1.msra.mxu0 0.0
  %2527 = vmatprep.subr.mxu0 0.0
  %2528 = vmatpush1.msra.mxu0 0.0
  %2529 = vmatprep.subr.mxu0 0.0
  %2530 = vmatpush1.msra.mxu0 0.0
  %2531 = vmatprep.subr.mxu0 0.0
  %2532 = vmatpush1.msra.mxu0 0.0
  %2533 = vmatprep.subr.mxu0 0.0
  %2534 = vmatpush1.msra.mxu0 0.0
  %2535 = vmatprep.subr.mxu0 0.0
  %2536 = vmatpush1.msra.mxu0 0.0
  %2537 = vmatprep.subr.mxu0 0.0
  %2538 = vmatpush1.msra.mxu0 0.0
  %2539 = vmatprep.subr.mxu0 0.0
  %2540 = vmatpush1.msra.mxu0 0.0
  %2541 = vmatprep.subr.mxu0 0.0
  %2542 = vmatpush1.msra.mxu0 0.0
  %2543 = vmatprep.subr.mxu0 0.0
  %2544 = vmatpush1.msra.mxu0 0.0
  %2545 = vmatprep.subr.mxu0 0.0
  %2546 = vmatpush1.msra.mxu0 0.0
  %2547 = vmatprep.subr.mxu0 0.0
  %2548 = vmatpush1.msra.mxu0 0.0
  %2549 = vmatprep.subr.mxu0 0.0
  %2550 = vmatpush1.msra.mxu0 0.0
  %2551 = vmatprep.subr.mxu0 0.0
  %2552 = vmatpush1.msra.mxu0 0.0
  %2553 = vmatprep.subr.mxu0 0.0
  %2554 = vmatpush1.msra.mxu0 0.0
  %2555 = vmatprep.subr.mxu0 0.0
  %2556 = vmatpush1.msra.mxu0 0.0
  %2557 = vmatprep.subr.mxu0 0.0
  %2558 = vmatpush1.msra.mxu0 0.0
  %2559 = vmatprep.subr.mxu0 0.0
  %2560 = vmatpush1.msra.mxu0 0.0
  %2561 = vmatprep.subr.mxu0 0.0
  %2562 = vmatpush1.msra.mxu0 0.0
  %2563 = vmatprep.subr.mxu0 0.0
  %2564 = vmatpush1.msra.mxu0 0.0
  %2565 = vmatprep.subr.mxu0 0.0
  %2566 = vmatpush1.msra.mxu0 0.0
  %2567 = vmatprep.subr.mxu0 0.0
  %2568 = vmatpush1.msra.mxu0 0.0
  %2569 = vmatprep.subr.mxu0 0.0
  %2570 = vmatpush1.msra.mxu0 0.0
  %2571 = vmatprep.subr.mxu0 0.0
  %2572 = vmatpush1.msra.mxu0 0.0
  %2573 = vmatprep.subr.mxu0 0.0
  %2574 = vmatpush1.msra.mxu0 0.0
  %2575 = vmatprep.subr.mxu0 0.0
  %2576 = vmatpush1.msra.mxu0 0.0
  %2577 = vmatprep.mubr.f32.mxu0 0.0
  %2578 = vmatmul.mubr.f32.gmra.mrb[0].mxu0 %v2511
  %v2579 = vpop.f32.mrb[0].mxu0
  %v2580 = vadd.f32 0.0, %v2579
  %v2581 = vpop.f32.mrb[0].mxu0
  %2582 = vdwg.mxu0
  %v2583 = vlaneseq
  %v2584 = vshrl.u32 %v2583, 7
  %v2585 = vsub.s32 0, %v2584
  %v2586 = vrot.slane %v2580, %v2585
  %v2587 = vmul.f32 %v2367, %v2586
  %v2588 = vmul.f32 %v2370, %v2586
  %v2589 = vmul.f32 %v2375, %v2586
  %v2590 = vmul.f32 %v2378, %v2586
  %v2591 = vlaneseq
  %v2592 = vshrl.u32 %v2591, 7
  %v2593 = vsub.s32 1, %v2592
  %v2594 = vrot.slane %v2580, %v2593
  %v2595 = vadd.f32 %v2587, %v2594
  %v2596 = vadd.f32 %v2588, %v2594
  %v2597 = vadd.f32 %v2589, %v2594
  %v2598 = vadd.f32 %v2590, %v2594
  %v2599 = vmax.f32 %v2595, 0.0
  %v2600 = vmax.f32 %v2596, 0.0
  %v2601 = vmax.f32 %v2597, 0.0
  %v2602 = vmax.f32 %v2598, 0.0
  %2603 = vst [vmem:[#allocation4] sm:$0xff] %v2599
  %2604 = vst [vmem:[#allocation4 + $0x8] sm:$0xff] %v2600
  %2605 = vst [vmem:[#allocation4 + $0x10] sm:$0xff] %v2601
  %2606 = vst [vmem:[#allocation4 + $0x18] sm:$0xff] %v2602
  %s2607 = scalar_lea.vmem %s3, 768
  %v2608 = vld [vmem:[%s2607] sm:$0xf]
  %v2609 = vld [vmem:[%s2607 + $0x4] sm:$0xf]
  %v2610 = vld [vmem:[%s2607 + $0x8] sm:$0xf]
  %v2611 = vld [vmem:[%s2607 + $0xc] sm:$0xf]
  %v2612 = vld [vmem:[%s2607 + $0x10] sm:$0xf]
  %v2613 = vld [vmem:[%s2607 + $0x14] sm:$0xf]
  %v2614 = vld [vmem:[%s2607 + $0x18] sm:$0xf]
  %v2615 = vld [vmem:[%s2607 + $0x1c] sm:$0xf]
  %v2616 = vld [vmem:[%s2607 + $0x20] sm:$0xf]
  %v2617 = vld [vmem:[%s2607 + $0x24] sm:$0xf]
  %v2618 = vld [vmem:[%s2607 + $0x28] sm:$0xf]
  %v2619 = vld [vmem:[%s2607 + $0x2c] sm:$0xf]
  %v2620 = vld [vmem:[%s2607 + $0x30] sm:$0xf]
  %v2621 = vld [vmem:[%s2607 + $0x34] sm:$0xf]
  %v2622 = vld [vmem:[%s2607 + $0x38] sm:$0xf]
  %v2623 = vld [vmem:[%s2607 + $0x3c] sm:$0xf]
  %v2624 = vld [vmem:[%s2607 + $0x40] sm:$0xf]
  %v2625 = vld [vmem:[%s2607 + $0x44] sm:$0xf]
  %v2626 = vld [vmem:[%s2607 + $0x48] sm:$0xf]
  %v2627 = vld [vmem:[%s2607 + $0x4c] sm:$0xf]
  %v2628 = vld [vmem:[%s2607 + $0x50] sm:$0xf]
  %v2629 = vld [vmem:[%s2607 + $0x54] sm:$0xf]
  %v2630 = vld [vmem:[%s2607 + $0x58] sm:$0xf]
  %v2631 = vld [vmem:[%s2607 + $0x5c] sm:$0xf]
  %v2632 = vld [vmem:[%s2607 + $0x60] sm:$0xf]
  %v2633 = vld [vmem:[%s2607 + $0x64] sm:$0xf]
  %v2634 = vld [vmem:[%s2607 + $0x68] sm:$0xf]
  %v2635 = vld [vmem:[%s2607 + $0x6c] sm:$0xf]
  %v2636 = vld [vmem:[%s2607 + $0x70] sm:$0xf]
  %v2637 = vld [vmem:[%s2607 + $0x74] sm:$0xf]
  %v2638 = vld [vmem:[%s2607 + $0x78] sm:$0xf]
  %v2639 = vld [vmem:[%s2607 + $0x7c] sm:$0xf]
  %v2640 = vld [vmem:[%s2607 + $0x80] sm:$0xf]
  %v2641 = vld [vmem:[%s2607 + $0x84] sm:$0xf]
  %v2642 = vld [vmem:[%s2607 + $0x88] sm:$0xf]
  %v2643 = vld [vmem:[%s2607 + $0x8c] sm:$0xf]
  %v2644 = vld [vmem:[%s2607 + $0x90] sm:$0xf]
  %v2645 = vld [vmem:[%s2607 + $0x94] sm:$0xf]
  %v2646 = vld [vmem:[%s2607 + $0x98] sm:$0xf]
  %v2647 = vld [vmem:[%s2607 + $0x9c] sm:$0xf]
  %v2648 = vld [vmem:[%s2607 + $0xa0] sm:$0xf]
  %v2649 = vld [vmem:[%s2607 + $0xa4] sm:$0xf]
  %v2650 = vld [vmem:[%s2607 + $0xa8] sm:$0xf]
  %v2651 = vld [vmem:[%s2607 + $0xac] sm:$0xf]
  %v2652 = vld [vmem:[%s2607 + $0xb0] sm:$0xf]
  %v2653 = vld [vmem:[%s2607 + $0xb4] sm:$0xf]
  %v2654 = vld [vmem:[%s2607 + $0xb8] sm:$0xf]
  %v2655 = vld [vmem:[%s2607 + $0xbc] sm:$0xf]
  %v2656 = vld [vmem:[%s2607 + $0xc0] sm:$0xf]
  %v2657 = vld [vmem:[%s2607 + $0xc4] sm:$0xf]
  %v2658 = vld [vmem:[%s2607 + $0xc8] sm:$0xf]
  %v2659 = vld [vmem:[%s2607 + $0xcc] sm:$0xf]
  %v2660 = vld [vmem:[%s2607 + $0xd0] sm:$0xf]
  %v2661 = vld [vmem:[%s2607 + $0xd4] sm:$0xf]
  %v2662 = vld [vmem:[%s2607 + $0xd8] sm:$0xf]
  %v2663 = vld [vmem:[%s2607 + $0xdc] sm:$0xf]
  %v2664 = vld [vmem:[%s2607 + $0xe0] sm:$0xf]
  %v2665 = vld [vmem:[%s2607 + $0xe4] sm:$0xf]
  %v2666 = vld [vmem:[%s2607 + $0xe8] sm:$0xf]
  %v2667 = vld [vmem:[%s2607 + $0xec] sm:$0xf]
  %v2668 = vld [vmem:[%s2607 + $0xf0] sm:$0xf]
  %v2669 = vld [vmem:[%s2607 + $0xf4] sm:$0xf]
  %v2670 = vld [vmem:[%s2607 + $0xf8] sm:$0xf]
  %v2671 = vld [vmem:[%s2607 + $0xfc] sm:$0xf]
  %v2672 = vld [vmem:[%s2607 + $0x100] sm:$0xf]
  %v2673 = vld [vmem:[%s2607 + $0x104] sm:$0xf]
  %v2674 = vld [vmem:[%s2607 + $0x108] sm:$0xf]
  %v2675 = vld [vmem:[%s2607 + $0x10c] sm:$0xf]
  %v2676 = vld [vmem:[%s2607 + $0x110] sm:$0xf]
  %v2677 = vld [vmem:[%s2607 + $0x114] sm:$0xf]
  %v2678 = vld [vmem:[%s2607 + $0x118] sm:$0xf]
  %v2679 = vld [vmem:[%s2607 + $0x11c] sm:$0xf]
  %v2680 = vld [vmem:[%s2607 + $0x120] sm:$0xf]
  %v2681 = vld [vmem:[%s2607 + $0x124] sm:$0xf]
  %v2682 = vld [vmem:[%s2607 + $0x128] sm:$0xf]
  %v2683 = vld [vmem:[%s2607 + $0x12c] sm:$0xf]
  %v2684 = vld [vmem:[%s2607 + $0x130] sm:$0xf]
  %v2685 = vld [vmem:[%s2607 + $0x134] sm:$0xf]
  %v2686 = vld [vmem:[%s2607 + $0x138] sm:$0xf]
  %v2687 = vld [vmem:[%s2607 + $0x13c] sm:$0xf]
  %v2688 = vld [vmem:[%s2607 + $0x140] sm:$0xf]
  %v2689 = vld [vmem:[%s2607 + $0x144] sm:$0xf]
  %v2690 = vld [vmem:[%s2607 + $0x148] sm:$0xf]
  %v2691 = vld [vmem:[%s2607 + $0x14c] sm:$0xf]
  %v2692 = vld [vmem:[%s2607 + $0x150] sm:$0xf]
  %v2693 = vld [vmem:[%s2607 + $0x154] sm:$0xf]
  %v2694 = vld [vmem:[%s2607 + $0x158] sm:$0xf]
  %v2695 = vld [vmem:[%s2607 + $0x15c] sm:$0xf]
  %v2696 = vld [vmem:[%s2607 + $0x160] sm:$0xf]
  %v2697 = vld [vmem:[%s2607 + $0x164] sm:$0xf]
  %v2698 = vld [vmem:[%s2607 + $0x168] sm:$0xf]
  %v2699 = vld [vmem:[%s2607 + $0x16c] sm:$0xf]
  %v2700 = vld [vmem:[%s2607 + $0x170] sm:$0xf]
  %v2701 = vld [vmem:[%s2607 + $0x174] sm:$0xf]
  %v2702 = vld [vmem:[%s2607 + $0x178] sm:$0xf]
  %v2703 = vld [vmem:[%s2607 + $0x17c] sm:$0xf]
  %v2704 = vld [vmem:[%s4 + $0x3] sm:$0x1]
  %v2705 = vld [vmem:[%s5 + $0x3] sm:$0x1]
  %v2706 = vld [vmem:[#allocation5] sm:$0xff]
  %v2707 = vld [vmem:[#allocation5 + $0x8] sm:$0xff]
  %v2708 = vld [vmem:[#allocation5 + $0x10] sm:$0xff]
  %v2709 = vld [vmem:[#allocation5 + $0x18] sm:$0xff]
  %v2710 = vld [vmem:[#allocation4] sm:$0xff]
  %v2711 = vld [vmem:[#allocation4 + $0x8] sm:$0xff]
  %v2712 = vld [vmem:[#allocation4 + $0x10] sm:$0xff]
  %v2713 = vld [vmem:[#allocation4 + $0x18] sm:$0xff]
  %v2718 = vrot.slane %v2710, 7
  %v2719 = vrot.slane %v2711, 7
  %v2720 = vsel %vm100, %v2718, %v2719
  %v2721 = vrot.slane %v2712, 7
  %v2722 = vrot.slane %v2713, 7
  %v2723 = vsel %vm100, %v2721, %v2722
  %2724 = vrot.lane.b32.xlu0 %v2718, 8
  %v2725 = vpop.permute.xlu0 %2724
  %2726 = vrot.lane.b32.xlu0 %v2720, 8
  %v2727 = vpop.permute.xlu0 %2726
  %2728 = vrot.lane.b32.xlu0 %v2719, 8
  %v2729 = vpop.permute.xlu0 %2728
  %2730 = vrot.lane.b32.xlu0 %v2721, 8
  %v2731 = vpop.permute.xlu0 %2730
  %2732 = vrot.lane.b32.xlu0 %v2723, 8
  %v2733 = vpop.permute.xlu0 %2732
  %2734 = vrot.lane.b32.xlu0 %v2722, 8
  %v2735 = vpop.permute.xlu0 %2734
  %2742 = vst.msk [vmem:[#allocation2] sm:$0xfe] %vm825, %v2725
  %2743 = vst.msk [vmem:[#allocation2 + $0x8] sm:$0xfe] %vm827, %v2725
  %2744 = vst.msk [vmem:[#allocation2 + $0x10] sm:$0xff] %vm829, %v2727
  %2745 = vst.msk [vmem:[#allocation2 + $0x18] sm:$0xff] %vm581, %v2727
  %2746 = vst.msk [vmem:[#allocation2 + $0x20] sm:$0x1] %vm832, %v2729
  %2747 = vst.msk [vmem:[#allocation2 + $0x28] sm:$0x1] %vm834, %v2729
  %2748 = vst.msk [vmem:[#allocation2 + $0x30] sm:$0xfe] %vm825, %v2731
  %2749 = vst.msk [vmem:[#allocation2 + $0x38] sm:$0xfe] %vm827, %v2731
  %2750 = vst.msk [vmem:[#allocation2 + $0x40] sm:$0xff] %vm829, %v2733
  %2751 = vst.msk [vmem:[#allocation2 + $0x48] sm:$0xff] %vm581, %v2733
  %2752 = vst.msk [vmem:[#allocation2 + $0x50] sm:$0x1] %vm832, %v2735
  %2753 = vst.msk [vmem:[#allocation2 + $0x58] sm:$0x1] %vm834, %v2735
  %v2754 = vld [vmem:[#allocation2] sm:$0xff]
  %v2755 = vld [vmem:[#allocation2 + $0x8] sm:$0xff]
  %v2756 = vld [vmem:[#allocation2 + $0x10] sm:$0xff]
  %v2757 = vld [vmem:[#allocation2 + $0x18] sm:$0xff]
  %v2758 = vld [vmem:[#allocation2 + $0x30] sm:$0xff]
  %v2759 = vld [vmem:[#allocation2 + $0x38] sm:$0xff]
  %v2760 = vld [vmem:[#allocation2 + $0x40] sm:$0xff]
  %v2761 = vld [vmem:[#allocation2 + $0x48] sm:$0xff]
  %v2762 = vpack.c.bf16 %v2756, %v2754
  %v2763 = vpack.c.bf16 %v2757, %v2755
  %v2764 = vpack.c.bf16 %v2760, %v2758
  %v2765 = vpack.c.bf16 %v2761, %v2759
  %2766 = vst [vmem:[#allocation3] sm:$0xff] %v2762
  %2767 = vst [vmem:[#allocation3 + $0x8] sm:$0xff] %v2763
  %2768 = vst [vmem:[#allocation3 + $0x30] sm:$0xff] %v2764
  %2769 = vst [vmem:[#allocation3 + $0x38] sm:$0xff] %v2765
  %v2770 = vld [vmem:[#allocation2] sm:$0xfe]
  %v2771 = vld [vmem:[#allocation2 + $0x8] sm:$0xfe]
  %v2772 = vld [vmem:[#allocation2 + $0x10] sm:$0xff]
  %v2773 = vld [vmem:[#allocation2 + $0x18] sm:$0xff]
  %v2774 = vld [vmem:[#allocation2 + $0x20] sm:$0x1]
  %v2775 = vld [vmem:[#allocation2 + $0x28] sm:$0x1]
  %v2776 = vld [vmem:[#allocation2 + $0x30] sm:$0xfe]
  %v2777 = vld [vmem:[#allocation2 + $0x38] sm:$0xfe]
  %v2778 = vld [vmem:[#allocation2 + $0x40] sm:$0xff]
  %v2779 = vld [vmem:[#allocation2 + $0x48] sm:$0xff]
  %v2780 = vld [vmem:[#allocation2 + $0x50] sm:$0x1]
  %v2781 = vld [vmem:[#allocation2 + $0x58] sm:$0x1]
  %v2794 = vrot.slane %v2770, 1
  %v2795 = vrot.slane %v2772, 1
  %v2796 = vsel %vm154, %v2794, %v2795
  %v2797 = vrot.slane %v2771, 1
  %v2798 = vrot.slane %v2773, 1
  %v2799 = vsel %vm154, %v2797, %v2798
  %v2800 = vrot.slane %v2774, 1
  %v2801 = vsel %vm154, %v2795, %v2800
  %v2802 = vrot.slane %v2775, 1
  %v2803 = vsel %vm154, %v2798, %v2802
  %v2804 = vrot.slane %v2776, 1
  %v2805 = vrot.slane %v2778, 1
  %v2806 = vsel %vm154, %v2804, %v2805
  %v2807 = vrot.slane %v2777, 1
  %v2808 = vrot.slane %v2779, 1
  %v2809 = vsel %vm154, %v2807, %v2808
  %v2810 = vrot.slane %v2780, 1
  %v2811 = vsel %vm154, %v2805, %v2810
  %v2812 = vrot.slane %v2781, 1
  %v2813 = vsel %vm154, %v2808, %v2812
  %v2822 = vpack.c.bf16 %v2801, %v2796
  %v2823 = vpack.c.bf16 %v2803, %v2799
  %v2824 = vpack.c.bf16 %v2811, %v2806
  %v2825 = vpack.c.bf16 %v2813, %v2809
  %2826 = vst [vmem:[#allocation3 + $0x10] sm:$0xff] %v2822
  %2827 = vst [vmem:[#allocation3 + $0x18] sm:$0xff] %v2823
  %2828 = vst [vmem:[#allocation3 + $0x40] sm:$0xff] %v2824
  %2829 = vst [vmem:[#allocation3 + $0x48] sm:$0xff] %v2825
  %v2830 = vld [vmem:[#allocation2] sm:$0xfc]
  %v2831 = vld [vmem:[#allocation2 + $0x8] sm:$0xfc]
  %v2832 = vld [vmem:[#allocation2 + $0x10] sm:$0xff]
  %v2833 = vld [vmem:[#allocation2 + $0x18] sm:$0xff]
  %v2834 = vld [vmem:[#allocation2 + $0x20] sm:$0x3]
  %v2835 = vld [vmem:[#allocation2 + $0x28] sm:$0x3]
  %v2836 = vld [vmem:[#allocation2 + $0x30] sm:$0xfc]
  %v2837 = vld [vmem:[#allocation2 + $0x38] sm:$0xfc]
  %v2838 = vld [vmem:[#allocation2 + $0x40] sm:$0xff]
  %v2839 = vld [vmem:[#allocation2 + $0x48] sm:$0xff]
  %v2840 = vld [vmem:[#allocation2 + $0x50] sm:$0x3]
  %v2841 = vld [vmem:[#allocation2 + $0x58] sm:$0x3]
  %v2854 = vrot.slane %v2830, 2
  %v2855 = vrot.slane %v2832, 2
  %v2856 = vsel %vm185, %v2854, %v2855
  %v2857 = vrot.slane %v2831, 2
  %v2858 = vrot.slane %v2833, 2
  %v2859 = vsel %vm185, %v2857, %v2858
  %v2860 = vrot.slane %v2834, 2
  %v2861 = vsel %vm185, %v2855, %v2860
  %v2862 = vrot.slane %v2835, 2
  %v2863 = vsel %vm185, %v2858, %v2862
  %v2864 = vrot.slane %v2836, 2
  %v2865 = vrot.slane %v2838, 2
  %v2866 = vsel %vm185, %v2864, %v2865
  %v2867 = vrot.slane %v2837, 2
  %v2868 = vrot.slane %v2839, 2
  %v2869 = vsel %vm185, %v2867, %v2868
  %v2870 = vrot.slane %v2840, 2
  %v2871 = vsel %vm185, %v2865, %v2870
  %v2872 = vrot.slane %v2841, 2
  %v2873 = vsel %vm185, %v2868, %v2872
  %v2882 = vpack.c.bf16 %v2861, %v2856
  %v2883 = vpack.c.bf16 %v2863, %v2859
  %v2884 = vpack.c.bf16 %v2871, %v2866
  %v2885 = vpack.c.bf16 %v2873, %v2869
  %2886 = vst [vmem:[#allocation3 + $0x20] sm:$0xff] %v2882
  %2887 = vst [vmem:[#allocation3 + $0x28] sm:$0xff] %v2883
  %2888 = vst [vmem:[#allocation3 + $0x50] sm:$0xff] %v2884
  %2889 = vst [vmem:[#allocation3 + $0x58] sm:$0xff] %v2885
  %v2890 = vld [vmem:[#allocation3] sm:$0xff]
  %v2891 = vld [vmem:[#allocation3 + $0x8] sm:$0xff]
  %v2892 = vld [vmem:[#allocation3 + $0x10] sm:$0xff]
  %v2893 = vld [vmem:[#allocation3 + $0x18] sm:$0xff]
  %v2894 = vld [vmem:[#allocation3 + $0x20] sm:$0xff]
  %v2895 = vld [vmem:[#allocation3 + $0x28] sm:$0xff]
  %v2896 = vld [vmem:[#allocation3 + $0x30] sm:$0xff]
  %v2897 = vld [vmem:[#allocation3 + $0x38] sm:$0xff]
  %v2898 = vld [vmem:[#allocation3 + $0x40] sm:$0xff]
  %v2899 = vld [vmem:[#allocation3 + $0x48] sm:$0xff]
  %v2900 = vld [vmem:[#allocation3 + $0x50] sm:$0xff]
  %v2901 = vld [vmem:[#allocation3 + $0x58] sm:$0xff]
  %v2998 = vunpack.c.l.b16 %v2608
  %v2999 = vunpack.c.l.b16 %v2609
  %v3000 = vunpack.c.l.b16 %v2610
  %v3001 = vunpack.c.l.b16 %v2611
  %v3002 = vunpack.c.l.b16 %v2612
  %v3003 = vunpack.c.l.b16 %v2613
  %v3004 = vunpack.c.l.b16 %v2614
  %v3005 = vunpack.c.l.b16 %v2615
  %v3006 = vunpack.c.l.b16 %v2616
  %v3007 = vunpack.c.l.b16 %v2617
  %v3008 = vunpack.c.l.b16 %v2618
  %v3009 = vunpack.c.l.b16 %v2619
  %v3010 = vunpack.c.l.b16 %v2620
  %v3011 = vunpack.c.l.b16 %v2621
  %v3012 = vunpack.c.l.b16 %v2622
  %v3013 = vunpack.c.l.b16 %v2623
  %v3014 = vunpack.c.l.b16 %v2624
  %v3015 = vunpack.c.l.b16 %v2625
  %v3016 = vunpack.c.l.b16 %v2626
  %v3017 = vunpack.c.l.b16 %v2627
  %v3018 = vunpack.c.l.b16 %v2628
  %v3019 = vunpack.c.l.b16 %v2629
  %v3020 = vunpack.c.l.b16 %v2630
  %v3021 = vunpack.c.l.b16 %v2631
  %v3022 = vunpack.c.l.b16 %v2632
  %v3023 = vunpack.c.l.b16 %v2633
  %v3024 = vunpack.c.l.b16 %v2634
  %v3025 = vunpack.c.l.b16 %v2635
  %v3026 = vunpack.c.l.b16 %v2636
  %v3027 = vunpack.c.l.b16 %v2637
  %v3028 = vunpack.c.l.b16 %v2638
  %v3029 = vunpack.c.l.b16 %v2639
  %v3030 = vunpack.c.l.b16 %v2640
  %v3031 = vunpack.c.l.b16 %v2641
  %v3032 = vunpack.c.l.b16 %v2642
  %v3033 = vunpack.c.l.b16 %v2643
  %v3034 = vunpack.c.l.b16 %v2644
  %v3035 = vunpack.c.l.b16 %v2645
  %v3036 = vunpack.c.l.b16 %v2646
  %v3037 = vunpack.c.l.b16 %v2647
  %v3038 = vunpack.c.l.b16 %v2648
  %v3039 = vunpack.c.l.b16 %v2649
  %v3040 = vunpack.c.l.b16 %v2650
  %v3041 = vunpack.c.l.b16 %v2651
  %v3042 = vunpack.c.l.b16 %v2652
  %v3043 = vunpack.c.l.b16 %v2653
  %v3044 = vunpack.c.l.b16 %v2654
  %v3045 = vunpack.c.l.b16 %v2655
  %v3046 = vunpack.c.l.b16 %v2656
  %v3047 = vunpack.c.l.b16 %v2657
  %v3048 = vunpack.c.l.b16 %v2658
  %v3049 = vunpack.c.l.b16 %v2659
  %v3050 = vunpack.c.l.b16 %v2660
  %v3051 = vunpack.c.l.b16 %v2661
  %v3052 = vunpack.c.l.b16 %v2662
  %v3053 = vunpack.c.l.b16 %v2663
  %v3054 = vunpack.c.l.b16 %v2664
  %v3055 = vunpack.c.l.b16 %v2665
  %v3056 = vunpack.c.l.b16 %v2666
  %v3057 = vunpack.c.l.b16 %v2667
  %v3058 = vunpack.c.l.b16 %v2668
  %v3059 = vunpack.c.l.b16 %v2669
  %v3060 = vunpack.c.l.b16 %v2670
  %v3061 = vunpack.c.l.b16 %v2671
  %v3062 = vunpack.c.l.b16 %v2672
  %v3063 = vunpack.c.l.b16 %v2673
  %v3064 = vunpack.c.l.b16 %v2674
  %v3065 = vunpack.c.l.b16 %v2675
  %v3066 = vunpack.c.l.b16 %v2676
  %v3067 = vunpack.c.l.b16 %v2677
  %v3068 = vunpack.c.l.b16 %v2678
  %v3069 = vunpack.c.l.b16 %v2679
  %v3070 = vunpack.c.l.b16 %v2680
  %v3071 = vunpack.c.l.b16 %v2681
  %v3072 = vunpack.c.l.b16 %v2682
  %v3073 = vunpack.c.l.b16 %v2683
  %v3074 = vunpack.c.l.b16 %v2684
  %v3075 = vunpack.c.l.b16 %v2685
  %v3076 = vunpack.c.l.b16 %v2686
  %v3077 = vunpack.c.l.b16 %v2687
  %v3078 = vunpack.c.l.b16 %v2688
  %v3079 = vunpack.c.l.b16 %v2689
  %v3080 = vunpack.c.l.b16 %v2690
  %v3081 = vunpack.c.l.b16 %v2691
  %v3082 = vunpack.c.l.b16 %v2692
  %v3083 = vunpack.c.l.b16 %v2693
  %v3084 = vunpack.c.l.b16 %v2694
  %v3085 = vunpack.c.l.b16 %v2695
  %v3086 = vunpack.c.l.b16 %v2696
  %v3087 = vunpack.c.l.b16 %v2697
  %v3088 = vunpack.c.l.b16 %v2698
  %v3089 = vunpack.c.l.b16 %v2699
  %v3090 = vunpack.c.l.b16 %v2700
  %v3091 = vunpack.c.l.b16 %v2701
  %v3092 = vunpack.c.l.b16 %v2702
  %v3093 = vunpack.c.l.b16 %v2703
  %v3094 = vpack.c.b16 %v2999, %v2998
  %v3095 = vpack.c.b16 %v3001, %v3000
  %v3096 = vpack.c.b16 %v3003, %v3002
  %v3097 = vpack.c.b16 %v3005, %v3004
  %v3098 = vpack.c.b16 %v3007, %v3006
  %v3099 = vpack.c.b16 %v3009, %v3008
  %v3100 = vpack.c.b16 %v3011, %v3010
  %v3101 = vpack.c.b16 %v3013, %v3012
  %v3102 = vpack.c.b16 %v3015, %v3014
  %v3103 = vpack.c.b16 %v3017, %v3016
  %v3104 = vpack.c.b16 %v3019, %v3018
  %v3105 = vpack.c.b16 %v3021, %v3020
  %v3106 = vpack.c.b16 %v3023, %v3022
  %v3107 = vpack.c.b16 %v3025, %v3024
  %v3108 = vpack.c.b16 %v3027, %v3026
  %v3109 = vpack.c.b16 %v3029, %v3028
  %v3110 = vpack.c.b16 %v3031, %v3030
  %v3111 = vpack.c.b16 %v3033, %v3032
  %v3112 = vpack.c.b16 %v3035, %v3034
  %v3113 = vpack.c.b16 %v3037, %v3036
  %v3114 = vpack.c.b16 %v3039, %v3038
  %v3115 = vpack.c.b16 %v3041, %v3040
  %v3116 = vpack.c.b16 %v3043, %v3042
  %v3117 = vpack.c.b16 %v3045, %v3044
  %v3118 = vpack.c.b16 %v3047, %v3046
  %v3119 = vpack.c.b16 %v3049, %v3048
  %v3120 = vpack.c.b16 %v3051, %v3050
  %v3121 = vpack.c.b16 %v3053, %v3052
  %v3122 = vpack.c.b16 %v3055, %v3054
  %v3123 = vpack.c.b16 %v3057, %v3056
  %v3124 = vpack.c.b16 %v3059, %v3058
  %v3125 = vpack.c.b16 %v3061, %v3060
  %v3126 = vpack.c.b16 %v3063, %v3062
  %v3127 = vpack.c.b16 %v3065, %v3064
  %v3128 = vpack.c.b16 %v3067, %v3066
  %v3129 = vpack.c.b16 %v3069, %v3068
  %v3130 = vpack.c.b16 %v3071, %v3070
  %v3131 = vpack.c.b16 %v3073, %v3072
  %v3132 = vpack.c.b16 %v3075, %v3074
  %v3133 = vpack.c.b16 %v3077, %v3076
  %v3134 = vpack.c.b16 %v3079, %v3078
  %v3135 = vpack.c.b16 %v3081, %v3080
  %v3136 = vpack.c.b16 %v3083, %v3082
  %v3137 = vpack.c.b16 %v3085, %v3084
  %v3138 = vpack.c.b16 %v3087, %v3086
  %v3139 = vpack.c.b16 %v3089, %v3088
  %v3140 = vpack.c.b16 %v3091, %v3090
  %v3141 = vpack.c.b16 %v3093, %v3092
  %3190 = vmatprep.subr.bf16.mxu0 0
  %3191 = vmatpush1.bf16.msra.mxu0 %v3094
  %3192 = vmatprep.subr.bf16.mxu0 0
  %3193 = vmatpush1.bf16.msra.mxu0 %v3095
  %3194 = vmatprep.subr.bf16.mxu0 0
  %3195 = vmatpush1.bf16.msra.mxu0 %v3096
  %3196 = vmatprep.subr.bf16.mxu0 0
  %3197 = vmatpush1.bf16.msra.mxu0 %v3097
  %3198 = vmatprep.subr.bf16.mxu0 0
  %3199 = vmatpush1.bf16.msra.mxu0 %v3098
  %3200 = vmatprep.subr.bf16.mxu0 0
  %3201 = vmatpush1.bf16.msra.mxu0 %v3099
  %3202 = vmatprep.subr.bf16.mxu0 0
  %3203 = vmatpush1.bf16.msra.mxu0 %v3100
  %3204 = vmatprep.subr.bf16.mxu0 0
  %3205 = vmatpush1.bf16.msra.mxu0 %v3101
  %3206 = vmatprep.subr.bf16.mxu0 0
  %3207 = vmatpush1.bf16.msra.mxu0 %v3102
  %3208 = vmatprep.subr.bf16.mxu0 0
  %3209 = vmatpush1.bf16.msra.mxu0 %v3103
  %3210 = vmatprep.subr.bf16.mxu0 0
  %3211 = vmatpush1.bf16.msra.mxu0 %v3104
  %3212 = vmatprep.subr.bf16.mxu0 0
  %3213 = vmatpush1.bf16.msra.mxu0 %v3105
  %3214 = vmatprep.subr.bf16.mxu0 0
  %3215 = vmatpush1.bf16.msra.mxu0 %v3106
  %3216 = vmatprep.subr.bf16.mxu0 0
  %3217 = vmatpush1.bf16.msra.mxu0 %v3107
  %3218 = vmatprep.subr.bf16.mxu0 0
  %3219 = vmatpush1.bf16.msra.mxu0 %v3108
  %3220 = vmatprep.subr.bf16.mxu0 0
  %3221 = vmatpush1.bf16.msra.mxu0 %v3109
  %3222 = vmatprep.mubr.bf16.mxu0 %v2891
  %3223 = vmatmul.mubr.bf16.gmra.mrb[0].mxu0 %v2890
  %v3224 = vpop.f32.mrb[0].mxu0
  %v3225 = vadd.f32 0.0, %v3224
  %v3226 = vpop.f32.mrb[0].mxu0
  %v3227 = vpop.f32.mrb[0].mxu0
  %v3228 = vadd.f32 0.0, %v3227
  %v3229 = vpop.f32.mrb[0].mxu0
  %3230 = vmatprep.mubr.bf16.mxu0 %v2897
  %3231 = vmatmul.mubr.bf16.gmra.mrb[0].mxu0 %v2896
  %v3232 = vpop.f32.mrb[0].mxu0
  %v3233 = vadd.f32 0.0, %v3232
  %v3234 = vpop.f32.mrb[0].mxu0
  %v3235 = vpop.f32.mrb[0].mxu0
  %v3236 = vadd.f32 0.0, %v3235
  %v3237 = vpop.f32.mrb[0].mxu0
  %3238 = vdwg.mxu0
  %3239 = vmatprep.subr.bf16.mxu0 0
  %3240 = vmatpush1.bf16.msra.mxu0 %v3110
  %3241 = vmatprep.subr.bf16.mxu0 0
  %3242 = vmatpush1.bf16.msra.mxu0 %v3111
  %3243 = vmatprep.subr.bf16.mxu0 0
  %3244 = vmatpush1.bf16.msra.mxu0 %v3112
  %3245 = vmatprep.subr.bf16.mxu0 0
  %3246 = vmatpush1.bf16.msra.mxu0 %v3113
  %3247 = vmatprep.subr.bf16.mxu0 0
  %3248 = vmatpush1.bf16.msra.mxu0 %v3114
  %3249 = vmatprep.subr.bf16.mxu0 0
  %3250 = vmatpush1.bf16.msra.mxu0 %v3115
  %3251 = vmatprep.subr.bf16.mxu0 0
  %3252 = vmatpush1.bf16.msra.mxu0 %v3116
  %3253 = vmatprep.subr.bf16.mxu0 0
  %3254 = vmatpush1.bf16.msra.mxu0 %v3117
  %3255 = vmatprep.subr.bf16.mxu0 0
  %3256 = vmatpush1.bf16.msra.mxu0 %v3118
  %3257 = vmatprep.subr.bf16.mxu0 0
  %3258 = vmatpush1.bf16.msra.mxu0 %v3119
  %3259 = vmatprep.subr.bf16.mxu0 0
  %3260 = vmatpush1.bf16.msra.mxu0 %v3120
  %3261 = vmatprep.subr.bf16.mxu0 0
  %3262 = vmatpush1.bf16.msra.mxu0 %v3121
  %3263 = vmatprep.subr.bf16.mxu0 0
  %3264 = vmatpush1.bf16.msra.mxu0 %v3122
  %3265 = vmatprep.subr.bf16.mxu0 0
  %3266 = vmatpush1.bf16.msra.mxu0 %v3123
  %3267 = vmatprep.subr.bf16.mxu0 0
  %3268 = vmatpush1.bf16.msra.mxu0 %v3124
  %3269 = vmatprep.subr.bf16.mxu0 0
  %3270 = vmatpush1.bf16.msra.mxu0 %v3125
  %3271 = vmatprep.mubr.bf16.mxu0 %v2893
  %3272 = vmatmul.mubr.bf16.gmra.mrb[0].mxu0 %v2892
  %v3273 = vpop.f32.mrb[0].mxu0
  %v3274 = vadd.f32 %v3225, %v3273
  %v3275 = vpop.f32.mrb[0].mxu0
  %v3276 = vpop.f32.mrb[0].mxu0
  %v3277 = vadd.f32 %v3228, %v3276
  %v3278 = vpop.f32.mrb[0].mxu0
  %3279 = vmatprep.mubr.bf16.mxu0 %v2899
  %3280 = vmatmul.mubr.bf16.gmra.mrb[0].mxu0 %v2898
  %v3281 = vpop.f32.mrb[0].mxu0
  %v3282 = vadd.f32 %v3233, %v3281
  %v3283 = vpop.f32.mrb[0].mxu0
  %v3284 = vpop.f32.mrb[0].mxu0
  %v3285 = vadd.f32 %v3236, %v3284
  %v3286 = vpop.f32.mrb[0].mxu0
  %3287 = vdwg.mxu0
  %3288 = vmatprep.subr.bf16.mxu0 0
  %3289 = vmatpush1.bf16.msra.mxu0 %v3126
  %3290 = vmatprep.subr.bf16.mxu0 0
  %3291 = vmatpush1.bf16.msra.mxu0 %v3127
  %3292 = vmatprep.subr.bf16.mxu0 0
  %3293 = vmatpush1.bf16.msra.mxu0 %v3128
  %3294 = vmatprep.subr.bf16.mxu0 0
  %3295 = vmatpush1.bf16.msra.mxu0 %v3129
  %3296 = vmatprep.subr.bf16.mxu0 0
  %3297 = vmatpush1.bf16.msra.mxu0 %v3130
  %3298 = vmatprep.subr.bf16.mxu0 0
  %3299 = vmatpush1.bf16.msra.mxu0 %v3131
  %3300 = vmatprep.subr.bf16.mxu0 0
  %3301 = vmatpush1.bf16.msra.mxu0 %v3132
  %3302 = vmatprep.subr.bf16.mxu0 0
  %3303 = vmatpush1.bf16.msra.mxu0 %v3133
  %3304 = vmatprep.subr.bf16.mxu0 0
  %3305 = vmatpush1.bf16.msra.mxu0 %v3134
  %3306 = vmatprep.subr.bf16.mxu0 0
  %3307 = vmatpush1.bf16.msra.mxu0 %v3135
  %3308 = vmatprep.subr.bf16.mxu0 0
  %3309 = vmatpush1.bf16.msra.mxu0 %v3136
  %3310 = vmatprep.subr.bf16.mxu0 0
  %3311 = vmatpush1.bf16.msra.mxu0 %v3137
  %3312 = vmatprep.subr.bf16.mxu0 0
  %3313 = vmatpush1.bf16.msra.mxu0 %v3138
  %3314 = vmatprep.subr.bf16.mxu0 0
  %3315 = vmatpush1.bf16.msra.mxu0 %v3139
  %3316 = vmatprep.subr.bf16.mxu0 0
  %3317 = vmatpush1.bf16.msra.mxu0 %v3140
  %3318 = vmatprep.subr.bf16.mxu0 0
  %3319 = vmatpush1.bf16.msra.mxu0 %v3141
  %3320 = vmatprep.mubr.bf16.mxu0 %v2895
  %3321 = vmatmul.mubr.bf16.gmra.mrb[0].mxu0 %v2894
  %v3322 = vpop.f32.mrb[0].mxu0
  %v3323 = vadd.f32 %v3274, %v3322
  %v3324 = vpop.f32.mrb[0].mxu0
  %v3325 = vpop.f32.mrb[0].mxu0
  %v3326 = vadd.f32 %v3277, %v3325
  %v3327 = vpop.f32.mrb[0].mxu0
  %3328 = vmatprep.mubr.bf16.mxu0 %v2901
  %3329 = vmatmul.mubr.bf16.gmra.mrb[0].mxu0 %v2900
  %v3330 = vpop.f32.mrb[0].mxu0
  %v3331 = vadd.f32 %v3282, %v3330
  %v3332 = vpop.f32.mrb[0].mxu0
  %v3333 = vpop.f32.mrb[0].mxu0
  %v3334 = vadd.f32 %v3285, %v3333
  %v3335 = vpop.f32.mrb[0].mxu0
  %3336 = vdwg.mxu0
  %v3337 = vadd.f32 %v3323, %v3326
  %v3338 = vadd.f32 %v3337, %v3331
  %v3339 = vadd.f32 %v3338, %v3334
  %v3340 = vrot.slane %v3339, 4
  %v3341 = vadd.f32 %v3339, %v3340
  %v3342 = vrot.slane %v3341, 2
  %v3343 = vadd.f32 %v3341, %v3342
  %v3344 = vrot.slane %v3343, 1
  %v3345 = vadd.f32 %v3343, %v3344
  %v3346 = vmul.f32 %v3323, %v3323
  %v3347 = vmul.f32 %v3326, %v3326
  %v3348 = vmul.f32 %v3331, %v3331
  %v3349 = vmul.f32 %v3334, %v3334
  %v3350 = vadd.f32 %v3346, %v3347
  %v3351 = vadd.f32 %v3350, %v3348
  %v3352 = vadd.f32 %v3351, %v3349
  %v3353 = vrot.slane %v3352, 4
  %v3354 = vadd.f32 %v3352, %v3353
  %v3355 = vrot.slane %v3354, 2
  %v3356 = vadd.f32 %v3354, %v3355
  %v3357 = vrot.slane %v3356, 1
  %v3358 = vadd.f32 %v3356, %v3357
  %v3359 = vsel %vm100, %v3345, %v3358
  %v3360 = vld [vmem:[%s6] sm:$0xff]
  %v3361 = vld [vmem:[%s6 + $0x8] sm:$0xff]
  %v3362 = vld [vmem:[%s6 + $0x10] sm:$0xff]
  %v3363 = vld [vmem:[%s6 + $0x18] sm:$0xff]
  %v3364 = vld [vmem:[%s6 + $0x20] sm:$0xff]
  %v3365 = vld [vmem:[%s6 + $0x28] sm:$0xff]
  %v3366 = vld [vmem:[%s6 + $0x30] sm:$0xff]
  %v3367 = vld [vmem:[%s6 + $0x38] sm:$0xff]
  %v3368 = vld [vmem:[%s6 + $0x40] sm:$0xff]
  %v3369 = vld [vmem:[%s6 + $0x48] sm:$0xff]
  %v3370 = vld [vmem:[%s6 + $0x50] sm:$0xff]
  %v3371 = vld [vmem:[%s6 + $0x58] sm:$0xff]
  %v3372 = vld [vmem:[%s6 + $0x60] sm:$0xff]
  %v3373 = vld [vmem:[%s6 + $0x68] sm:$0xff]
  %v3374 = vld [vmem:[%s6 + $0x70] sm:$0xff]
  %v3375 = vld [vmem:[%s6 + $0x78] sm:$0xff]
  %3376 = vmatprep.subr.mxu0 0.0
  %3377 = vmatpush1.msra.mxu0 %v3360
  %3378 = vmatprep.subr.mxu0 0.0
  %3379 = vmatpush1.msra.mxu0 %v3361
  %3380 = vmatprep.subr.mxu0 0.0
  %3381 = vmatpush1.msra.mxu0 %v3362
  %3382 = vmatprep.subr.mxu0 0.0
  %3383 = vmatpush1.msra.mxu0 %v3363
  %3384 = vmatprep.subr.mxu0 0.0
  %3385 = vmatpush1.msra.mxu0 %v3364
  %3386 = vmatprep.subr.mxu0 0.0
  %3387 = vmatpush1.msra.mxu0 %v3365
  %3388 = vmatprep.subr.mxu0 0.0
  %3389 = vmatpush1.msra.mxu0 %v3366
  %3390 = vmatprep.subr.mxu0 0.0
  %3391 = vmatpush1.msra.mxu0 %v3367
  %3392 = vmatprep.subr.mxu0 0.0
  %3393 = vmatpush1.msra.mxu0 %v3368
  %3394 = vmatprep.subr.mxu0 0.0
  %3395 = vmatpush1.msra.mxu0 %v3369
  %3396 = vmatprep.subr.mxu0 0.0
  %3397 = vmatpush1.msra.mxu0 %v3370
  %3398 = vmatprep.subr.mxu0 0.0
  %3399 = vmatpush1.msra.mxu0 %v3371
  %3400 = vmatprep.subr.mxu0 0.0
  %3401 = vmatpush1.msra.mxu0 %v3372
  %3402 = vmatprep.subr.mxu0 0.0
  %3403 = vmatpush1.msra.mxu0 %v3373
  %3404 = vmatprep.subr.mxu0 0.0
  %3405 = vmatpush1.msra.mxu0 %v3374
  %3406 = vmatprep.subr.mxu0 0.0
  %3407 = vmatpush1.msra.mxu0 %v3375
  %3408 = vmatprep.subr.mxu0 0.0
  %3409 = vmatpush1.msra.mxu0 0.0
  %3410 = vmatprep.subr.mxu0 0.0
  %3411 = vmatpush1.msra.mxu0 0.0
  %3412 = vmatprep.subr.mxu0 0.0
  %3413 = vmatpush1.msra.mxu0 0.0
  %3414 = vmatprep.subr.mxu0 0.0
  %3415 = vmatpush1.msra.mxu0 0.0
  %3416 = vmatprep.subr.mxu0 0.0
  %3417 = vmatpush1.msra.mxu0 0.0
  %3418 = vmatprep.subr.mxu0 0.0
  %3419 = vmatpush1.msra.mxu0 0.0
  %3420 = vmatprep.subr.mxu0 0.0
  %3421 = vmatpush1.msra.mxu0 0.0
  %3422 = vmatprep.subr.mxu0 0.0
  %3423 = vmatpush1.msra.mxu0 0.0
  %3424 = vmatprep.subr.mxu0 0.0
  %3425 = vmatpush1.msra.mxu0 0.0
  %3426 = vmatprep.subr.mxu0 0.0
  %3427 = vmatpush1.msra.mxu0 0.0
  %3428 = vmatprep.subr.mxu0 0.0
  %3429 = vmatpush1.msra.mxu0 0.0
  %3430 = vmatprep.subr.mxu0 0.0
  %3431 = vmatpush1.msra.mxu0 0.0
  %3432 = vmatprep.subr.mxu0 0.0
  %3433 = vmatpush1.msra.mxu0 0.0
  %3434 = vmatprep.subr.mxu0 0.0
  %3435 = vmatpush1.msra.mxu0 0.0
  %3436 = vmatprep.subr.mxu0 0.0
  %3437 = vmatpush1.msra.mxu0 0.0
  %3438 = vmatprep.subr.mxu0 0.0
  %3439 = vmatpush1.msra.mxu0 0.0
  %3440 = vmatprep.mubr.f32.mxu0 0.0
  %3441 = vmatmul.mubr.f32.gmra.mrb[0].mxu0 %v3359
  %v3442 = vpop.f32.mrb[0].mxu0
  %v3443 = vadd.f32 0.0, %v3442
  %v3444 = vpop.f32.mrb[0].mxu0
  %3445 = vdwg.mxu0
  %v3446 = vmul.f32 %v3443, 0.001953125
  %v3447 = vmul.f32 %v3446, %v3446
  %v3449 = vrot.slane %v3447, 7
  %v3451 = vsub.f32 %v3446, %v3449
  %v3452 = vmax.f32 %v3451, 0.0
  %v3453 = vadd.f32 %v3452, 1e-05
  %v3454 = vrsqrt.pop %v3453
  %v3456 = vrot.slane %v3454, 1
  %v3458 = vmul.f32 %v2704, %v3456
  %v3459 = vmul.f32 %v3446, %v3458
  %v3460 = vsub.f32 %v2705, %v3459
  %v3462 = vrot.slane %v3460, 7
  %v3464 = vsel %vm100, %v3458, %v3462
  %v3465 = vld [vmem:[%s7] sm:$0xff]
  %v3467 = vsel %vm581, %v3464, 0
  %3469 = vmatprep.subr.mxu0 0.0
  %3470 = vmatpush1.msra.mxu0 %v3465
  %3471 = vmatprep.subr.mxu0 0.0
  %3472 = vmatpush1.msra.mxu0 0.0
  %3473 = vmatprep.subr.mxu0 0.0
  %3474 = vmatpush1.msra.mxu0 0.0
  %3475 = vmatprep.subr.mxu0 0.0
  %3476 = vmatpush1.msra.mxu0 0.0
  %3477 = vmatprep.subr.mxu0 0.0
  %3478 = vmatpush1.msra.mxu0 0.0
  %3479 = vmatprep.subr.mxu0 0.0
  %3480 = vmatpush1.msra.mxu0 0.0
  %3481 = vmatprep.subr.mxu0 0.0
  %3482 = vmatpush1.msra.mxu0 0.0
  %3483 = vmatprep.subr.mxu0 0.0
  %3484 = vmatpush1.msra.mxu0 0.0
  %3485 = vmatprep.subr.mxu0 0.0
  %3486 = vmatpush1.msra.mxu0 0.0
  %3487 = vmatprep.subr.mxu0 0.0
  %3488 = vmatpush1.msra.mxu0 0.0
  %3489 = vmatprep.subr.mxu0 0.0
  %3490 = vmatpush1.msra.mxu0 0.0
  %3491 = vmatprep.subr.mxu0 0.0
  %3492 = vmatpush1.msra.mxu0 0.0
  %3493 = vmatprep.subr.mxu0 0.0
  %3494 = vmatpush1.msra.mxu0 0.0
  %3495 = vmatprep.subr.mxu0 0.0
  %3496 = vmatpush1.msra.mxu0 0.0
  %3497 = vmatprep.subr.mxu0 0.0
  %3498 = vmatpush1.msra.mxu0 0.0
  %3499 = vmatprep.subr.mxu0 0.0
  %3500 = vmatpush1.msra.mxu0 0.0
  %3501 = vmatprep.subr.mxu0 0.0
  %3502 = vmatpush1.msra.mxu0 0.0
  %3503 = vmatprep.subr.mxu0 0.0
  %3504 = vmatpush1.msra.mxu0 0.0
  %3505 = vmatprep.subr.mxu0 0.0
  %3506 = vmatpush1.msra.mxu0 0.0
  %3507 = vmatprep.subr.mxu0 0.0
  %3508 = vmatpush1.msra.mxu0 0.0
  %3509 = vmatprep.subr.mxu0 0.0
  %3510 = vmatpush1.msra.mxu0 0.0
  %3511 = vmatprep.subr.mxu0 0.0
  %3512 = vmatpush1.msra.mxu0 0.0
  %3513 = vmatprep.subr.mxu0 0.0
  %3514 = vmatpush1.msra.mxu0 0.0
  %3515 = vmatprep.subr.mxu0 0.0
  %3516 = vmatpush1.msra.mxu0 0.0
  %3517 = vmatprep.subr.mxu0 0.0
  %3518 = vmatpush1.msra.mxu0 0.0
  %3519 = vmatprep.subr.mxu0 0.0
  %3520 = vmatpush1.msra.mxu0 0.0
  %3521 = vmatprep.subr.mxu0 0.0
  %3522 = vmatpush1.msra.mxu0 0.0
  %3523 = vmatprep.subr.mxu0 0.0
  %3524 = vmatpush1.msra.mxu0 0.0
  %3525 = vmatprep.subr.mxu0 0.0
  %3526 = vmatpush1.msra.mxu0 0.0
  %3527 = vmatprep.subr.mxu0 0.0
  %3528 = vmatpush1.msra.mxu0 0.0
  %3529 = vmatprep.subr.mxu0 0.0
  %3530 = vmatpush1.msra.mxu0 0.0
  %3531 = vmatprep.subr.mxu0 0.0
  %3532 = vmatpush1.msra.mxu0 0.0
  %3533 = vmatprep.mubr.f32.mxu0 0.0
  %3534 = vmatmul.mubr.f32.gmra.mrb[0].mxu0 %v3467
  %v3535 = vpop.f32.mrb[0].mxu0
  %v3536 = vadd.f32 0.0, %v3535
  %v3537 = vpop.f32.mrb[0].mxu0
  %3538 = vdwg.mxu0
  %v3539 = vlaneseq
  %v3540 = vshrl.u32 %v3539, 7
  %v3541 = vsub.s32 0, %v3540
  %v3542 = vrot.slane %v3536, %v3541
  %v3543 = vmul.f32 %v3323, %v3542
  %v3544 = vmul.f32 %v3326, %v3542
  %v3545 = vmul.f32 %v3331, %v3542
  %v3546 = vmul.f32 %v3334, %v3542
  %v3547 = vlaneseq
  %v3548 = vshrl.u32 %v3547, 7
  %v3549 = vsub.s32 1, %v3548
  %v3550 = vrot.slane %v3536, %v3549
  %v3551 = vadd.f32 %v3543, %v3550
  %v3552 = vadd.f32 %v3544, %v3550
  %v3553 = vadd.f32 %v3545, %v3550
  %v3554 = vadd.f32 %v3546, %v3550
  %v3555 = vadd.f32 %v3551, %v2706
  %v3556 = vadd.f32 %v3552, %v2707
  %v3557 = vadd.f32 %v3553, %v2708
  %v3558 = vadd.f32 %v3554, %v2709
  %v3559 = vmax.f32 %v3555, 0.0
  %v3560 = vmax.f32 %v3556, 0.0
  %v3561 = vmax.f32 %v3557, 0.0
  %v3562 = vmax.f32 %v3558, 0.0
  %3563 = vst [vmem:[%s8] sm:$0xff] %v3559
  %3564 = vst [vmem:[%s8 + $0x8] sm:$0xff] %v3560
  %3565 = vst [vmem:[%s8 + $0x10] sm:$0xff] %v3561
  %3566 = vst [vmem:[%s8 + $0x18] sm:$0xff] %v3562
  // Predicated region
  $region34: #{conv_block_forward.1} parent=0 // pred_check
    _
  $region35: #{conv_block_forward.1} parent=0 // pred_check_branch
    %3568 = sbr.rel (0) target = $region37
  $region36: #{conv_block_forward.1} parent=0 // pred_region
    _
  $region37: #{conv_block_forward.1} parent=0 // pred_fallthru
    _
  // Predicated region
  $region38: #{conv_block_forward.1} parent=0 // pred_check
    _
  $region39: #{conv_block_forward.1} parent=0 // pred_check_branch
    %3570 = sbr.rel (0) target = $region41
  $region40: #{conv_block_forward.1} parent=0 // pred_region
    _
  $region41: #{conv_block_forward.1} parent=0 // pred_fallthru
    _

</llo_original>
